<compile_context>
chip_gen: v6e
topology: v6e:2x2x1
jax: 0.10.0
libtpu: 0.0.40
codegen_flags: <defaults>
</compile_context>

<pallas_src>
import jax
import jax.numpy as jnp
from jax.experimental import pallas as pl
from jax.experimental.pallas import tpu as pltpu

# ----- small, module-consistent hyper-parameters -----
IN_DIM = 5
N_CLS = 3                 # len(CLASSES)
INP_W = IN_DIM + N_CLS    # 8 input lanes: [stroke features | one-hot class]
HID = 32                  # "hid" (512 in module defaults; kept small here)
EMB = 16                  # "emb"
LAYERS = 2
B = 2                     # real batch
BP = 8                    # padded batch (fills the 8-sublane vreg dimension)
T = 8
EPS = 1e-5                # PyTorch LayerNorm default
H2 = HID // 2
G4 = 4 * HID              # 128 lanes: LSTM gate width / padded head width

# ----- row offsets inside the packed 128-lane weight slab (all multiples of 8) -----
R_WGIN = 0      # [8,128]  rows IN_DIM:INP_W hold (embw @ wih0e); stroke rows are zero
R_WIH0X = 8     # [32,128] layer-0 W_ih (stroke part)
R_WHH0 = 40     # [32,128] layer-0 W_hh
R_WIH1 = 72     # [32,128] layer-1 W_ih
R_WHH1 = 104    # [32,128] layer-1 W_hh
R_WH2 = 136     # [32,128] fused xy/pen second layer, lane-padded to 128
W128_ROWS = 168

# ----- row offsets inside the packed 32-lane weight slab -----
R_W1 = 0        # [8,32]  input_fc Linear (rows IN_DIM:INP_W are zero)
R_WH1 = 8       # [32,32] fused xy/pen first layer
W32_ROWS = 40

# ----- rows of the bias/LN slab [16,128] (values left-justified, zero-padded) -----
B_B1, B_G1, B_BE1, B_BL0, B_BL1, B_LNG, B_LNB, B_BH1, B_BH2 = range(9)
B_ROWS = 16


def _layernorm(x, gamma, beta):
    mu = jnp.mean(x, axis=-1, keepdims=True)
    var = jnp.mean((x - mu) ** 2, axis=-1, keepdims=True)
    return (x - mu) * jax.lax.rsqrt(var + EPS) * gamma + beta


def sketchgen_kernel(
    inp_ref,      # [T*BP, INP_W]  time-major [strokes | one-hot]
    w128_ref,     # [W128_ROWS, 128] packed 128-lane weights
    w32_ref,      # [W32_ROWS, 32]   packed 32-lane weights
    b_ref,        # [B_ROWS, 128]    packed biases / LN params
    out_ref,      # [T*BP, 128]  lane-dense head output (xy | pen | zero pad)
    state_ref,    # [BP, 128]    lane-dense final state (h0 | h1 | c0 | c1)
):
    f32 = jnp.float32
    inp = inp_ref[...]                                            # [T*BP, INP_W]

    # biases / LN params (static slices of one slab; zero-cost views before the load)
    b1 = b_ref[B_B1:B_B1 + 1, 0:HID]
    g1 = b_ref[B_G1:B_G1 + 1, 0:HID]
    be1 = b_ref[B_BE1:B_BE1 + 1, 0:HID]
    bl0 = b_ref[B_BL0:B_BL0 + 1, :]
    bl1 = b_ref[B_BL1:B_BL1 + 1, :]
    lng = b_ref[B_LNG:B_LNG + 1, 0:HID]
    lnb = b_ref[B_LNB:B_LNB + 1, 0:HID]
    bh1 = b_ref[B_BH1:B_BH1 + 1, 0:HID]
    bh2 = b_ref[B_BH2:B_BH2 + 1, :]

    # ---------------- input_fc: Linear + LayerNorm + ReLU (+ Dropout = id) ---------------
    # (one-hot lanes hit zero weight rows, so no lane slicing of the input is needed)
    x = jnp.dot(inp, w32_ref[R_W1:R_W1 + INP_W, :], preferred_element_type=f32) + b1
    x = _layernorm(x, g1, be1)
    x = jnp.maximum(x, 0.0)                                       # [T*BP, HID]

    # -------- hoisted, time-invariant layer-0 gate pre-activation (off the recurrence) ---
    # class embedding contribution: one-hot lanes @ (embw @ wih0e), packed at param time
    e_gate = jnp.dot(inp, w128_ref[R_WGIN:R_WGIN + INP_W, :],
                     preferred_element_type=f32)                  # [T*BP, 4H]
    x0_gates = (jnp.dot(x, w128_ref[R_WIH0X:R_WIH0X + HID, :],
                        preferred_element_type=f32)
                + e_gate + bl0)                                   # [T*BP, 4H]

    whh0 = w128_ref[R_WHH0:R_WHH0 + HID, :]
    wih1 = w128_ref[R_WIH1:R_WIH1 + HID, :]
    whh1 = w128_ref[R_WHH1:R_WHH1 + HID, :]

    def cell(gates, c_prev):
        # full-vreg ([BP, 4H] = 128 lanes) EUP passes, then static 32-lane slices.
        # PyTorch gate ordering: i, f, g, o
        sig = jax.nn.sigmoid(gates)
        th = jnp.tanh(gates)
        i = sig[:, 0 * HID:1 * HID]
        f = sig[:, 1 * HID:2 * HID]
        g = th[:, 2 * HID:3 * HID]
        o = sig[:, 3 * HID:4 * HID]
        c_new = f * c_prev + i * g
        return o * jnp.tanh(c_new), c_new

    # ---------------- sequential 2-layer LSTM, fully unrolled, vreg-resident state -------
    zeros = jnp.zeros((BP, HID), f32)
    h0, c0, h1, c1 = zeros, zeros, zeros, zeros
    outs = []
    for t in range(T):                                            # static -> fully unrolled
        g0 = x0_gates[t * BP:(t + 1) * BP, :] + jnp.dot(
            h0, whh0, preferred_element_type=f32)                 # [BP, 4H]
        h0, c0 = cell(g0, c0)

        # inter-layer dropout is identity in eval mode; two matmuls avoid a per-step
        # lane concat on the serial path
        gates1 = (jnp.dot(h0, wih1, preferred_element_type=f32)
                  + jnp.dot(h1, whh1, preferred_element_type=f32) + bl1)
        h1, c1 = cell(gates1, c1)
        outs.append(h1)

    # ----------------------- post-LSTM LayerNorm + fused output heads --------------------
    out = jnp.concatenate(outs, axis=0)                           # [T*BP, HID]
    out = _layernorm(out, lng, lnb)                               # self.ln ; self.drop = id

    h = jnp.maximum(
        jnp.dot(out, w32_ref[R_WH1:R_WH1 + HID, :], preferred_element_type=f32) + bh1,
        0.0)
    y = jnp.dot(h, w128_ref[R_WH2:R_WH2 + HID, :],
                preferred_element_type=f32) + bh2                 # [T*BP, 128] lane-dense

    out_ref[...] = y
    # single unmasked [8,128] state store: h0 | h1 | c0 | c1 along lanes
    state_ref[...] = jnp.concatenate([h0, h1, c0, c1], axis=1)


# ------------------------------- parameters & packing ----------------------------------
def init_params(key):
    def xavier(k, shape):
        fan_in, fan_out = shape[0], shape[1]
        lim = (6.0 / (fan_in + fan_out)) ** 0.5
        return jax.random.uniform(k, shape, jnp.float32, -lim, lim)

    ks = jax.random.split(key, 16)
    f32 = jnp.float32
    return {
        # input_fc
        "w1": xavier(ks[0], (IN_DIM, HID)),
        "b1": jnp.zeros((1, HID), f32),
        "g1": jnp.ones((1, HID), f32),
        "be1": jnp.zeros((1, HID), f32),
        # embedding
        "embw": xavier(ks[1], (N_CLS, EMB)),
        # LSTM layer 0 (W_ih split into strokes / embedding parts; b = b_ih + b_hh folded)
        "wih0x": xavier(ks[2], (HID, 4 * HID)),
        "wih0e": xavier(ks[3], (EMB, 4 * HID)),
        "whh0": xavier(ks[4], (HID, 4 * HID)),
        "bl0": jnp.zeros((1, 4 * HID), f32),
        # LSTM layer 1
        "wih1": xavier(ks[5], (HID, 4 * HID)),
        "whh1": xavier(ks[6], (HID, 4 * HID)),
        "bl1": jnp.zeros((1, 4 * HID), f32),
        # post-LSTM LayerNorm
        "lng": jnp.ones((1, HID), f32),
        "lnb": jnp.zeros((1, HID), f32),
        # fc_xy
        "wxy1": xavier(ks[7], (HID, H2)),
        "bxy1": jnp.zeros((1, H2), f32),
        "wxy2": xavier(ks[8], (H2, 2)),
        "bxy2": jnp.zeros((1, 2), f32),
        # fc_pen
        "wpen1": xavier(ks[9], (HID, H2)),
        "bpen1": jnp.zeros((1, H2), f32),
        "wpen2": xavier(ks[10], (H2, 3)),
        "bpen2": jnp.zeros((1, 3), f32),
    }


def pack_params(P):
    """One-time packing of all weights/biases into 3 lane-dense slabs (amortized)."""
    f32 = jnp.float32

    # 128-lane weight slab [W128_ROWS, 128]
    wgate_in = jnp.zeros((INP_W, G4), f32).at[IN_DIM:INP_W, :].set(P["embw"] @ P["wih0e"])
    wh2 = jnp.zeros((HID, G4), f32)
    wh2 = wh2.at[:H2, 0:2].set(P["wxy2"]).at[H2:, 2:5].set(P["wpen2"])
    w128 = jnp.concatenate(
        [wgate_in, P["wih0x"], P["whh0"], P["wih1"], P["whh1"], wh2], axis=0)
    assert w128.shape == (W128_ROWS, G4)

    # 32-lane weight slab [W32_ROWS, 32]
    w1p = jnp.zeros((INP_W, HID), f32).at[:IN_DIM, :].set(P["w1"])
    wh1 = jnp.concatenate([P["wxy1"], P["wpen1"]], axis=1)        # [HID, HID]
    w32 = jnp.concatenate([w1p, wh1], axis=0)
    assert w32.shape == (W32_ROWS, HID)

    # bias / LN slab [B_ROWS, 128]
    def row128(v):
        v = v.reshape(1, -1)
        return jnp.pad(v, ((0, 0), (0, G4 - v.shape[1])))

    bh1 = jnp.concatenate([P["bxy1"], P["bpen1"]], axis=1)        # [1, HID]
    bh2 = jnp.zeros((1, G4), f32).at[:, 0:2].set(P["bxy2"]).at[:, 2:5].set(P["bpen2"])
    b = jnp.concatenate(
        [row128(P["b1"]), row128(P["g1"]), row128(P["be1"]),
         row128(P["bl0"]), row128(P["bl1"]),
         row128(P["lng"]), row128(P["lnb"]),
         row128(bh1), bh2,
         jnp.zeros((B_ROWS - 9, G4), f32)], axis=0)
    assert b.shape == (B_ROWS, G4)

    return {"w128": w128, "w32": w32, "b": b}


# ------------------------------------ forward ------------------------------------------
@jax.jit
def sketchgen_forward(strokes, cls_ids, packed):
    """strokes: [B, T, IN_DIM] f32, cls_ids: [B] int32, packed: pack_params() output."""
    # per-call glue (fused under jit): pad batch to BP sublanes, batch-first -> time-major,
    # append one-hot class lanes so the kernel sees a single input slab.
    strokes_p = jnp.pad(strokes, ((0, BP - B), (0, 0), (0, 0)))
    strokes_tm = jnp.transpose(strokes_p, (1, 0, 2))              # [T, BP, IN_DIM]
    onehot = jax.nn.one_hot(cls_ids, N_CLS, dtype=jnp.float32)
    onehot = jnp.pad(onehot, ((0, BP - B), (0, 0)))               # [BP, N_CLS]
    onehot_tm = jnp.broadcast_to(onehot[None], (T, BP, N_CLS))
    inp = jnp.concatenate([strokes_tm, onehot_tm], axis=-1).reshape(T * BP, INP_W)

    out_shapes = (
        jax.ShapeDtypeStruct((T * BP, G4), jnp.float32),          # lane-dense head slab
        jax.ShapeDtypeStruct((BP, G4), jnp.float32),              # h0|h1|c0|c1
    )
    vmem = lambda: pl.BlockSpec(memory_space=pltpu.MemorySpace.VMEM)

    y, state = pl.pallas_call(
        sketchgen_kernel,
        out_shape=out_shapes,
        in_specs=[vmem(), vmem(), vmem(), vmem()],
        out_specs=tuple(vmem() for _ in out_shapes),
    )(inp, packed["w128"], packed["w32"], packed["b"])

    # glue: split fused head output, drop batch padding, back to batch-first.
    # NOTE: padded batch rows BP-1..B carry bias-driven garbage and MUST stay sliced off.
    y = y.reshape(T, BP, G4)[:, :B, :]
    xy = jnp.transpose(y[..., 0:2], (1, 0, 2))                    # [B, T, 2]
    pen = jnp.transpose(y[..., 2:5], (1, 0, 2))                   # [B, T, 3]
    hn = jnp.stack([state[:B, 0:HID], state[:B, HID:2 * HID]], axis=0)
    cn = jnp.stack([state[:B, 2 * HID:3 * HID], state[:B, 3 * HID:4 * HID]], axis=0)
    return xy, pen, (hn, cn)


# ------------------------------- pure-JAX reference ------------------------------------
def reference_forward(strokes, cls_ids, P):
    x = strokes @ P["w1"] + P["b1"]                               # [B, T, HID]
    x = _layernorm(x, P["g1"], P["be1"])
    x = jnp.maximum(x, 0.0)
    e = P["embw"][cls_ids]                                        # [B, EMB]
    e_gate = e @ P["wih0e"] + P["bl0"]

    h0 = jnp.zeros((B, HID)); c0 = jnp.zeros((B, HID))
    h1 = jnp.zeros((B, HID)); c1 = jnp.zeros((B, HID))

    def cell(gates, c_prev):
        i = jax.nn.sigmoid(gates[:, 0 * HID:1 * HID])
        f = jax.nn.sigmoid(gates[:, 1 * HID:2 * HID])
        g = jnp.tanh(gates[:, 2 * HID:3 * HID])
        o = jax.nn.sigmoid(gates[:, 3 * HID:4 * HID])
        c_new = f * c_prev + i * g
        return o * jnp.tanh(c_new), c_new

    outs = []
    for t in range(T):
        g0 = x[:, t, :] @ P["wih0x"] + h0 @ P["whh0"] + e_gate
        h0, c0 = cell(g0, c0)
        g1 = h0 @ P["wih1"] + h1 @ P["whh1"] + P["bl1"]
        h1, c1 = cell(g1, c1)
        outs.append(h1)
    out = jnp.stack(outs, axis=1)                                 # [B, T, HID]
    out = _layernorm(out, P["lng"], P["lnb"])
    xy = jnp.maximum(out @ P["wxy1"] + P["bxy1"], 0.0) @ P["wxy2"] + P["bxy2"]
    pen = jnp.maximum(out @ P["wpen1"] + P["bpen1"], 0.0) @ P["wpen2"] + P["bpen2"]
    hn = jnp.stack([h0, h1], axis=0)
    cn = jnp.stack([c0, c1], axis=0)
    return xy, pen, (hn, cn)


if __name__ == "__main__":
    key = jax.random.PRNGKey(0)
    k_str, k_cls, k_par = jax.random.split(key, 3)

    strokes = jax.random.normal(k_str, (B, T, IN_DIM), jnp.float32)
    cls_ids = jax.random.randint(k_cls, (B,), 0, N_CLS, jnp.int32)
    params = init_params(k_par)
    packed = pack_params(params)          # one-time packing, amortized over forward calls

    xy, pen, (hn, cn) = sketchgen_forward(strokes, cls_ids, packed)
    jax.block_until_ready((xy, pen, hn, cn))

    assert xy.shape == (B, T, 2) and pen.shape == (B, T, 3)
    assert hn.shape == (LAYERS, B, HID) and cn.shape == (LAYERS, B, HID)

    rxy, rpen, (rhn, rcn) = reference_forward(strokes, cls_ids, params)
    for a, r in ((xy, rxy), (pen, rpen), (hn, rhn), (cn, rcn)):
        assert jnp.all(jnp.isfinite(a))
        assert jnp.allclose(a, r, rtol=2e-2, atol=2e-2), float(jnp.max(jnp.abs(a - r)))

    print("KERNEL_OK")
</pallas_src>

<mosaic_0001>
module attributes {stable_mosaic.version = 11 : i64} {
  func.func @sketchgen_kernel(%arg0: memref<64x8xf32, #tpu.memory_space<vmem>>, %arg1: memref<168x128xf32, #tpu.memory_space<vmem>>, %arg2: memref<40x32xf32, #tpu.memory_space<vmem>>, %arg3: memref<16x128xf32, #tpu.memory_space<vmem>>, %arg4: memref<64x128xf32, #tpu.memory_space<vmem>>, %arg5: memref<8x128xf32, #tpu.memory_space<vmem>>) attributes {dimension_semantics = [], scalar_prefetch = 0 : i64, scratch_operands = 0 : i64, tpu.core_type = #tpu.core_type<tc>} {
    %c0 = arith.constant 0 : index
    %c0_0 = arith.constant 0 : index
    %0 = vector.load %arg0[%c0, %c0_0] : memref<64x8xf32, #tpu.memory_space<vmem>>, vector<64x8xf32>
    %c0_1 = arith.constant 0 : index
    %c0_2 = arith.constant 0 : index
    %1 = vector.load %arg3[%c0_1, %c0_2] : memref<16x128xf32, #tpu.memory_space<vmem>>, vector<1x32xf32>
    %c1 = arith.constant 1 : index
    %c0_3 = arith.constant 0 : index
    %2 = vector.load %arg3[%c1, %c0_3] : memref<16x128xf32, #tpu.memory_space<vmem>>, vector<1x32xf32>
    %c2 = arith.constant 2 : index
    %c0_4 = arith.constant 0 : index
    %3 = vector.load %arg3[%c2, %c0_4] : memref<16x128xf32, #tpu.memory_space<vmem>>, vector<1x32xf32>
    %c3 = arith.constant 3 : index
    %c0_5 = arith.constant 0 : index
    %4 = vector.load %arg3[%c3, %c0_5] : memref<16x128xf32, #tpu.memory_space<vmem>>, vector<1x128xf32>
    %c4 = arith.constant 4 : index
    %c0_6 = arith.constant 0 : index
    %5 = vector.load %arg3[%c4, %c0_6] : memref<16x128xf32, #tpu.memory_space<vmem>>, vector<1x128xf32>
    %c5 = arith.constant 5 : index
    %c0_7 = arith.constant 0 : index
    %6 = vector.load %arg3[%c5, %c0_7] : memref<16x128xf32, #tpu.memory_space<vmem>>, vector<1x32xf32>
    %c6 = arith.constant 6 : index
    %c0_8 = arith.constant 0 : index
    %7 = vector.load %arg3[%c6, %c0_8] : memref<16x128xf32, #tpu.memory_space<vmem>>, vector<1x32xf32>
    %c7 = arith.constant 7 : index
    %c0_9 = arith.constant 0 : index
    %8 = vector.load %arg3[%c7, %c0_9] : memref<16x128xf32, #tpu.memory_space<vmem>>, vector<1x32xf32>
    %c8 = arith.constant 8 : index
    %c0_10 = arith.constant 0 : index
    %9 = vector.load %arg3[%c8, %c0_10] : memref<16x128xf32, #tpu.memory_space<vmem>>, vector<1x128xf32>
    %c0_11 = arith.constant 0 : index
    %c0_12 = arith.constant 0 : index
    %10 = vector.load %arg2[%c0_11, %c0_12] : memref<40x32xf32, #tpu.memory_space<vmem>>, vector<8x32xf32>
    %cst = arith.constant dense<0.000000e+00> : vector<64x32xf32>
    %11 = tpu.matmul %0, %10, %cst {dimension_numbers = #tpu.dot_dimension_numbers<[1], [0], [0], [1], [0, 0, 1, 1], [], []>} : vector<64x8xf32>, vector<8x32xf32>, vector<64x32xf32> -> vector<64x32xf32>
    %12 = vector.broadcast %1 : vector<1x32xf32> to vector<64x32xf32>
    %13 = arith.addf %11, %12 : vector<64x32xf32>
    %cst_13 = arith.constant dense<0.000000e+00> : vector<64xf32>
    %14 = vector.multi_reduction <add>, %13, %cst_13 [1] : vector<64x32xf32> to vector<64xf32>
    %15 = vector.shape_cast %14 : vector<64xf32> to vector<64x1xf32>
    %cst_14 = arith.constant 3.200000e+01 : f32
    %16 = vector.broadcast %cst_14 : f32 to vector<64x1xf32>
    %17 = arith.divf %15, %16 : vector<64x1xf32>
    %18 = vector.broadcast %17 : vector<64x1xf32> to vector<64x32xf32>
    %19 = arith.subf %13, %18 : vector<64x32xf32>
    %20 = arith.mulf %19, %19 : vector<64x32xf32>
    %cst_15 = arith.constant dense<0.000000e+00> : vector<64xf32>
    %21 = vector.multi_reduction <add>, %20, %cst_15 [1] : vector<64x32xf32> to vector<64xf32>
    %22 = vector.shape_cast %21 : vector<64xf32> to vector<64x1xf32>
    %cst_16 = arith.constant 3.200000e+01 : f32
    %23 = vector.broadcast %cst_16 : f32 to vector<64x1xf32>
    %24 = arith.divf %22, %23 : vector<64x1xf32>
    %25 = vector.broadcast %17 : vector<64x1xf32> to vector<64x32xf32>
    %26 = arith.subf %13, %25 : vector<64x32xf32>
    %cst_17 = arith.constant 9.99999974E-6 : f32
    %27 = vector.broadcast %cst_17 : f32 to vector<64x1xf32>
    %28 = arith.addf %24, %27 : vector<64x1xf32>
    %29 = math.rsqrt %28 : vector<64x1xf32>
    %30 = vector.broadcast %29 : vector<64x1xf32> to vector<64x32xf32>
    %31 = arith.mulf %26, %30 : vector<64x32xf32>
    %32 = vector.broadcast %2 : vector<1x32xf32> to vector<64x32xf32>
    %33 = arith.mulf %31, %32 : vector<64x32xf32>
    %34 = vector.broadcast %3 : vector<1x32xf32> to vector<64x32xf32>
    %35 = arith.addf %33, %34 : vector<64x32xf32>
    %cst_18 = arith.constant 0.000000e+00 : f32
    %36 = vector.broadcast %cst_18 : f32 to vector<64x32xf32>
    %37 = arith.maximumf %35, %36 : vector<64x32xf32>
    %c0_19 = arith.constant 0 : index
    %c0_20 = arith.constant 0 : index
    %38 = vector.load %arg1[%c0_19, %c0_20] : memref<168x128xf32, #tpu.memory_space<vmem>>, vector<8x128xf32>
    %cst_21 = arith.constant dense<0.000000e+00> : vector<64x128xf32>
    %39 = tpu.matmul %0, %38, %cst_21 {dimension_numbers = #tpu.dot_dimension_numbers<[1], [0], [0], [1], [0, 0, 1, 1], [], []>} : vector<64x8xf32>, vector<8x128xf32>, vector<64x128xf32> -> vector<64x128xf32>
    %c8_22 = arith.constant 8 : index
    %c0_23 = arith.constant 0 : index
    %40 = vector.load %arg1[%c8_22, %c0_23] : memref<168x128xf32, #tpu.memory_space<vmem>>, vector<32x128xf32>
    %cst_24 = arith.constant dense<0.000000e+00> : vector<64x128xf32>
    %41 = tpu.matmul %37, %40, %cst_24 {dimension_numbers = #tpu.dot_dimension_numbers<[1], [0], [0], [1], [0, 0, 1, 1], [], []>} : vector<64x32xf32>, vector<32x128xf32>, vector<64x128xf32> -> vector<64x128xf32>
    %42 = arith.addf %41, %39 : vector<64x128xf32>
    %43 = vector.broadcast %4 : vector<1x128xf32> to vector<64x128xf32>
    %44 = arith.addf %42, %43 : vector<64x128xf32>
    %c40 = arith.constant 40 : index
    %c0_25 = arith.constant 0 : index
    %45 = vector.load %arg1[%c40, %c0_25] : memref<168x128xf32, #tpu.memory_space<vmem>>, vector<32x128xf32>
    %c72 = arith.constant 72 : index
    %c0_26 = arith.constant 0 : index
    %46 = vector.load %arg1[%c72, %c0_26] : memref<168x128xf32, #tpu.memory_space<vmem>>, vector<32x128xf32>
    %c104 = arith.constant 104 : index
    %c0_27 = arith.constant 0 : index
    %47 = vector.load %arg1[%c104, %c0_27] : memref<168x128xf32, #tpu.memory_space<vmem>>, vector<32x128xf32>
    %cst_28 = arith.constant 0.000000e+00 : f32
    %48 = vector.broadcast %cst_28 : f32 to vector<8x32xf32>
    %49 = vector.extract_strided_slice %44 {offsets = [0, 0], sizes = [8, 128], strides = [1, 1]} : vector<64x128xf32> to vector<8x128xf32>
    %cst_29 = arith.constant dense<0.000000e+00> : vector<8x128xf32>
    %50 = tpu.matmul %48, %45, %cst_29 {dimension_numbers = #tpu.dot_dimension_numbers<[1], [0], [0], [1], [0, 0, 1, 1], [], []>} : vector<8x32xf32>, vector<32x128xf32>, vector<8x128xf32> -> vector<8x128xf32>
    %51 = arith.addf %49, %50 : vector<8x128xf32>
    %52 = arith.negf %51 : vector<8x128xf32>
    %53 = math.exp %52 : vector<8x128xf32>
    %cst_30 = arith.constant 1.000000e+00 : f32
    %54 = vector.broadcast %cst_30 : f32 to vector<8x128xf32>
    %55 = arith.addf %54, %53 : vector<8x128xf32>
    %56 = arith.divf %54, %55 : vector<8x128xf32>
    %57 = math.tanh %51 : vector<8x128xf32>
    %58 = vector.extract_strided_slice %56 {offsets = [0, 0], sizes = [8, 32], strides = [1, 1]} : vector<8x128xf32> to vector<8x32xf32>
    %59 = vector.extract_strided_slice %56 {offsets = [0, 32], sizes = [8, 32], strides = [1, 1]} : vector<8x128xf32> to vector<8x32xf32>
    %60 = vector.extract_strided_slice %57 {offsets = [0, 64], sizes = [8, 32], strides = [1, 1]} : vector<8x128xf32> to vector<8x32xf32>
    %61 = vector.extract_strided_slice %56 {offsets = [0, 96], sizes = [8, 32], strides = [1, 1]} : vector<8x128xf32> to vector<8x32xf32>
    %62 = arith.mulf %59, %48 : vector<8x32xf32>
    %63 = arith.mulf %58, %60 : vector<8x32xf32>
    %64 = arith.addf %62, %63 : vector<8x32xf32>
    %65 = math.tanh %64 : vector<8x32xf32>
    %66 = arith.mulf %61, %65 : vector<8x32xf32>
    %cst_31 = arith.constant dense<0.000000e+00> : vector<8x128xf32>
    %67 = tpu.matmul %66, %46, %cst_31 {dimension_numbers = #tpu.dot_dimension_numbers<[1], [0], [0], [1], [0, 0, 1, 1], [], []>} : vector<8x32xf32>, vector<32x128xf32>, vector<8x128xf32> -> vector<8x128xf32>
    %cst_32 = arith.constant dense<0.000000e+00> : vector<8x128xf32>
    %68 = tpu.matmul %48, %47, %cst_32 {dimension_numbers = #tpu.dot_dimension_numbers<[1], [0], [0], [1], [0, 0, 1, 1], [], []>} : vector<8x32xf32>, vector<32x128xf32>, vector<8x128xf32> -> vector<8x128xf32>
    %69 = arith.addf %67, %68 : vector<8x128xf32>
    %70 = vector.broadcast %5 : vector<1x128xf32> to vector<8x128xf32>
    %71 = arith.addf %69, %70 : vector<8x128xf32>
    %72 = arith.negf %71 : vector<8x128xf32>
    %73 = math.exp %72 : vector<8x128xf32>
    %cst_33 = arith.constant 1.000000e+00 : f32
    %74 = vector.broadcast %cst_33 : f32 to vector<8x128xf32>
    %75 = arith.addf %74, %73 : vector<8x128xf32>
    %76 = arith.divf %74, %75 : vector<8x128xf32>
    %77 = math.tanh %71 : vector<8x128xf32>
    %78 = vector.extract_strided_slice %76 {offsets = [0, 0], sizes = [8, 32], strides = [1, 1]} : vector<8x128xf32> to vector<8x32xf32>
    %79 = vector.extract_strided_slice %76 {offsets = [0, 32], sizes = [8, 32], strides = [1, 1]} : vector<8x128xf32> to vector<8x32xf32>
    %80 = vector.extract_strided_slice %77 {offsets = [0, 64], sizes = [8, 32], strides = [1, 1]} : vector<8x128xf32> to vector<8x32xf32>
    %81 = vector.extract_strided_slice %76 {offsets = [0, 96], sizes = [8, 32], strides = [1, 1]} : vector<8x128xf32> to vector<8x32xf32>
    %82 = arith.mulf %79, %48 : vector<8x32xf32>
    %83 = arith.mulf %78, %80 : vector<8x32xf32>
    %84 = arith.addf %82, %83 : vector<8x32xf32>
    %85 = math.tanh %84 : vector<8x32xf32>
    %86 = arith.mulf %81, %85 : vector<8x32xf32>
    %87 = vector.extract_strided_slice %44 {offsets = [8, 0], sizes = [8, 128], strides = [1, 1]} : vector<64x128xf32> to vector<8x128xf32>
    %cst_34 = arith.constant dense<0.000000e+00> : vector<8x128xf32>
    %88 = tpu.matmul %66, %45, %cst_34 {dimension_numbers = #tpu.dot_dimension_numbers<[1], [0], [0], [1], [0, 0, 1, 1], [], []>} : vector<8x32xf32>, vector<32x128xf32>, vector<8x128xf32> -> vector<8x128xf32>
    %89 = arith.addf %87, %88 : vector<8x128xf32>
    %90 = arith.negf %89 : vector<8x128xf32>
    %91 = math.exp %90 : vector<8x128xf32>
    %cst_35 = arith.constant 1.000000e+00 : f32
    %92 = vector.broadcast %cst_35 : f32 to vector<8x128xf32>
    %93 = arith.addf %92, %91 : vector<8x128xf32>
    %94 = arith.divf %92, %93 : vector<8x128xf32>
    %95 = math.tanh %89 : vector<8x128xf32>
    %96 = vector.extract_strided_slice %94 {offsets = [0, 0], sizes = [8, 32], strides = [1, 1]} : vector<8x128xf32> to vector<8x32xf32>
    %97 = vector.extract_strided_slice %94 {offsets = [0, 32], sizes = [8, 32], strides = [1, 1]} : vector<8x128xf32> to vector<8x32xf32>
    %98 = vector.extract_strided_slice %95 {offsets = [0, 64], sizes = [8, 32], strides = [1, 1]} : vector<8x128xf32> to vector<8x32xf32>
    %99 = vector.extract_strided_slice %94 {offsets = [0, 96], sizes = [8, 32], strides = [1, 1]} : vector<8x128xf32> to vector<8x32xf32>
    %100 = arith.mulf %97, %64 : vector<8x32xf32>
    %101 = arith.mulf %96, %98 : vector<8x32xf32>
    %102 = arith.addf %100, %101 : vector<8x32xf32>
    %103 = math.tanh %102 : vector<8x32xf32>
    %104 = arith.mulf %99, %103 : vector<8x32xf32>
    %cst_36 = arith.constant dense<0.000000e+00> : vector<8x128xf32>
    %105 = tpu.matmul %104, %46, %cst_36 {dimension_numbers = #tpu.dot_dimension_numbers<[1], [0], [0], [1], [0, 0, 1, 1], [], []>} : vector<8x32xf32>, vector<32x128xf32>, vector<8x128xf32> -> vector<8x128xf32>
    %cst_37 = arith.constant dense<0.000000e+00> : vector<8x128xf32>
    %106 = tpu.matmul %86, %47, %cst_37 {dimension_numbers = #tpu.dot_dimension_numbers<[1], [0], [0], [1], [0, 0, 1, 1], [], []>} : vector<8x32xf32>, vector<32x128xf32>, vector<8x128xf32> -> vector<8x128xf32>
    %107 = arith.addf %105, %106 : vector<8x128xf32>
    %108 = vector.broadcast %5 : vector<1x128xf32> to vector<8x128xf32>
    %109 = arith.addf %107, %108 : vector<8x128xf32>
    %110 = arith.negf %109 : vector<8x128xf32>
    %111 = math.exp %110 : vector<8x128xf32>
    %cst_38 = arith.constant 1.000000e+00 : f32
    %112 = vector.broadcast %cst_38 : f32 to vector<8x128xf32>
    %113 = arith.addf %112, %111 : vector<8x128xf32>
    %114 = arith.divf %112, %113 : vector<8x128xf32>
    %115 = math.tanh %109 : vector<8x128xf32>
    %116 = vector.extract_strided_slice %114 {offsets = [0, 0], sizes = [8, 32], strides = [1, 1]} : vector<8x128xf32> to vector<8x32xf32>
    %117 = vector.extract_strided_slice %114 {offsets = [0, 32], sizes = [8, 32], strides = [1, 1]} : vector<8x128xf32> to vector<8x32xf32>
    %118 = vector.extract_strided_slice %115 {offsets = [0, 64], sizes = [8, 32], strides = [1, 1]} : vector<8x128xf32> to vector<8x32xf32>
    %119 = vector.extract_strided_slice %114 {offsets = [0, 96], sizes = [8, 32], strides = [1, 1]} : vector<8x128xf32> to vector<8x32xf32>
    %120 = arith.mulf %117, %84 : vector<8x32xf32>
    %121 = arith.mulf %116, %118 : vector<8x32xf32>
    %122 = arith.addf %120, %121 : vector<8x32xf32>
    %123 = math.tanh %122 : vector<8x32xf32>
    %124 = arith.mulf %119, %123 : vector<8x32xf32>
    %125 = vector.extract_strided_slice %44 {offsets = [16, 0], sizes = [8, 128], strides = [1, 1]} : vector<64x128xf32> to vector<8x128xf32>
    %cst_39 = arith.constant dense<0.000000e+00> : vector<8x128xf32>
    %126 = tpu.matmul %104, %45, %cst_39 {dimension_numbers = #tpu.dot_dimension_numbers<[1], [0], [0], [1], [0, 0, 1, 1], [], []>} : vector<8x32xf32>, vector<32x128xf32>, vector<8x128xf32> -> vector<8x128xf32>
    %127 = arith.addf %125, %126 : vector<8x128xf32>
    %128 = arith.negf %127 : vector<8x128xf32>
    %129 = math.exp %128 : vector<8x128xf32>
    %cst_40 = arith.constant 1.000000e+00 : f32
    %130 = vector.broadcast %cst_40 : f32 to vector<8x128xf32>
    %131 = arith.addf %130, %129 : vector<8x128xf32>
    %132 = arith.divf %130, %131 : vector<8x128xf32>
    %133 = math.tanh %127 : vector<8x128xf32>
    %134 = vector.extract_strided_slice %132 {offsets = [0, 0], sizes = [8, 32], strides = [1, 1]} : vector<8x128xf32> to vector<8x32xf32>
    %135 = vector.extract_strided_slice %132 {offsets = [0, 32], sizes = [8, 32], strides = [1, 1]} : vector<8x128xf32> to vector<8x32xf32>
    %136 = vector.extract_strided_slice %133 {offsets = [0, 64], sizes = [8, 32], strides = [1, 1]} : vector<8x128xf32> to vector<8x32xf32>
    %137 = vector.extract_strided_slice %132 {offsets = [0, 96], sizes = [8, 32], strides = [1, 1]} : vector<8x128xf32> to vector<8x32xf32>
    %138 = arith.mulf %135, %102 : vector<8x32xf32>
    %139 = arith.mulf %134, %136 : vector<8x32xf32>
    %140 = arith.addf %138, %139 : vector<8x32xf32>
    %141 = math.tanh %140 : vector<8x32xf32>
    %142 = arith.mulf %137, %141 : vector<8x32xf32>
    %cst_41 = arith.constant dense<0.000000e+00> : vector<8x128xf32>
    %143 = tpu.matmul %142, %46, %cst_41 {dimension_numbers = #tpu.dot_dimension_numbers<[1], [0], [0], [1], [0, 0, 1, 1], [], []>} : vector<8x32xf32>, vector<32x128xf32>, vector<8x128xf32> -> vector<8x128xf32>
    %cst_42 = arith.constant dense<0.000000e+00> : vector<8x128xf32>
    %144 = tpu.matmul %124, %47, %cst_42 {dimension_numbers = #tpu.dot_dimension_numbers<[1], [0], [0], [1], [0, 0, 1, 1], [], []>} : vector<8x32xf32>, vector<32x128xf32>, vector<8x128xf32> -> vector<8x128xf32>
    %145 = arith.addf %143, %144 : vector<8x128xf32>
    %146 = vector.broadcast %5 : vector<1x128xf32> to vector<8x128xf32>
    %147 = arith.addf %145, %146 : vector<8x128xf32>
    %148 = arith.negf %147 : vector<8x128xf32>
    %149 = math.exp %148 : vector<8x128xf32>
    %cst_43 = arith.constant 1.000000e+00 : f32
    %150 = vector.broadcast %cst_43 : f32 to vector<8x128xf32>
    %151 = arith.addf %150, %149 : vector<8x128xf32>
    %152 = arith.divf %150, %151 : vector<8x128xf32>
    %153 = math.tanh %147 : vector<8x128xf32>
    %154 = vector.extract_strided_slice %152 {offsets = [0, 0], sizes = [8, 32], strides = [1, 1]} : vector<8x128xf32> to vector<8x32xf32>
    %155 = vector.extract_strided_slice %152 {offsets = [0, 32], sizes = [8, 32], strides = [1, 1]} : vector<8x128xf32> to vector<8x32xf32>
    %156 = vector.extract_strided_slice %153 {offsets = [0, 64], sizes = [8, 32], strides = [1, 1]} : vector<8x128xf32> to vector<8x32xf32>
    %157 = vector.extract_strided_slice %152 {offsets = [0, 96], sizes = [8, 32], strides = [1, 1]} : vector<8x128xf32> to vector<8x32xf32>
    %158 = arith.mulf %155, %122 : vector<8x32xf32>
    %159 = arith.mulf %154, %156 : vector<8x32xf32>
    %160 = arith.addf %158, %159 : vector<8x32xf32>
    %161 = math.tanh %160 : vector<8x32xf32>
    %162 = arith.mulf %157, %161 : vector<8x32xf32>
    %163 = vector.extract_strided_slice %44 {offsets = [24, 0], sizes = [8, 128], strides = [1, 1]} : vector<64x128xf32> to vector<8x128xf32>
    %cst_44 = arith.constant dense<0.000000e+00> : vector<8x128xf32>
    %164 = tpu.matmul %142, %45, %cst_44 {dimension_numbers = #tpu.dot_dimension_numbers<[1], [0], [0], [1], [0, 0, 1, 1], [], []>} : vector<8x32xf32>, vector<32x128xf32>, vector<8x128xf32> -> vector<8x128xf32>
    %165 = arith.addf %163, %164 : vector<8x128xf32>
    %166 = arith.negf %165 : vector<8x128xf32>
    %167 = math.exp %166 : vector<8x128xf32>
    %cst_45 = arith.constant 1.000000e+00 : f32
    %168 = vector.broadcast %cst_45 : f32 to vector<8x128xf32>
    %169 = arith.addf %168, %167 : vector<8x128xf32>
    %170 = arith.divf %168, %169 : vector<8x128xf32>
    %171 = math.tanh %165 : vector<8x128xf32>
    %172 = vector.extract_strided_slice %170 {offsets = [0, 0], sizes = [8, 32], strides = [1, 1]} : vector<8x128xf32> to vector<8x32xf32>
    %173 = vector.extract_strided_slice %170 {offsets = [0, 32], sizes = [8, 32], strides = [1, 1]} : vector<8x128xf32> to vector<8x32xf32>
    %174 = vector.extract_strided_slice %171 {offsets = [0, 64], sizes = [8, 32], strides = [1, 1]} : vector<8x128xf32> to vector<8x32xf32>
    %175 = vector.extract_strided_slice %170 {offsets = [0, 96], sizes = [8, 32], strides = [1, 1]} : vector<8x128xf32> to vector<8x32xf32>
    %176 = arith.mulf %173, %140 : vector<8x32xf32>
    %177 = arith.mulf %172, %174 : vector<8x32xf32>
    %178 = arith.addf %176, %177 : vector<8x32xf32>
    %179 = math.tanh %178 : vector<8x32xf32>
    %180 = arith.mulf %175, %179 : vector<8x32xf32>
    %cst_46 = arith.constant dense<0.000000e+00> : vector<8x128xf32>
    %181 = tpu.matmul %180, %46, %cst_46 {dimension_numbers = #tpu.dot_dimension_numbers<[1], [0], [0], [1], [0, 0, 1, 1], [], []>} : vector<8x32xf32>, vector<32x128xf32>, vector<8x128xf32> -> vector<8x128xf32>
    %cst_47 = arith.constant dense<0.000000e+00> : vector<8x128xf32>
    %182 = tpu.matmul %162, %47, %cst_47 {dimension_numbers = #tpu.dot_dimension_numbers<[1], [0], [0], [1], [0, 0, 1, 1], [], []>} : vector<8x32xf32>, vector<32x128xf32>, vector<8x128xf32> -> vector<8x128xf32>
    %183 = arith.addf %181, %182 : vector<8x128xf32>
    %184 = vector.broadcast %5 : vector<1x128xf32> to vector<8x128xf32>
    %185 = arith.addf %183, %184 : vector<8x128xf32>
    %186 = arith.negf %185 : vector<8x128xf32>
    %187 = math.exp %186 : vector<8x128xf32>
    %cst_48 = arith.constant 1.000000e+00 : f32
    %188 = vector.broadcast %cst_48 : f32 to vector<8x128xf32>
    %189 = arith.addf %188, %187 : vector<8x128xf32>
    %190 = arith.divf %188, %189 : vector<8x128xf32>
    %191 = math.tanh %185 : vector<8x128xf32>
    %192 = vector.extract_strided_slice %190 {offsets = [0, 0], sizes = [8, 32], strides = [1, 1]} : vector<8x128xf32> to vector<8x32xf32>
    %193 = vector.extract_strided_slice %190 {offsets = [0, 32], sizes = [8, 32], strides = [1, 1]} : vector<8x128xf32> to vector<8x32xf32>
    %194 = vector.extract_strided_slice %191 {offsets = [0, 64], sizes = [8, 32], strides = [1, 1]} : vector<8x128xf32> to vector<8x32xf32>
    %195 = vector.extract_strided_slice %190 {offsets = [0, 96], sizes = [8, 32], strides = [1, 1]} : vector<8x128xf32> to vector<8x32xf32>
    %196 = arith.mulf %193, %160 : vector<8x32xf32>
    %197 = arith.mulf %192, %194 : vector<8x32xf32>
    %198 = arith.addf %196, %197 : vector<8x32xf32>
    %199 = math.tanh %198 : vector<8x32xf32>
    %200 = arith.mulf %195, %199 : vector<8x32xf32>
    %201 = vector.extract_strided_slice %44 {offsets = [32, 0], sizes = [8, 128], strides = [1, 1]} : vector<64x128xf32> to vector<8x128xf32>
    %cst_49 = arith.constant dense<0.000000e+00> : vector<8x128xf32>
    %202 = tpu.matmul %180, %45, %cst_49 {dimension_numbers = #tpu.dot_dimension_numbers<[1], [0], [0], [1], [0, 0, 1, 1], [], []>} : vector<8x32xf32>, vector<32x128xf32>, vector<8x128xf32> -> vector<8x128xf32>
    %203 = arith.addf %201, %202 : vector<8x128xf32>
    %204 = arith.negf %203 : vector<8x128xf32>
    %205 = math.exp %204 : vector<8x128xf32>
    %cst_50 = arith.constant 1.000000e+00 : f32
    %206 = vector.broadcast %cst_50 : f32 to vector<8x128xf32>
    %207 = arith.addf %206, %205 : vector<8x128xf32>
    %208 = arith.divf %206, %207 : vector<8x128xf32>
    %209 = math.tanh %203 : vector<8x128xf32>
    %210 = vector.extract_strided_slice %208 {offsets = [0, 0], sizes = [8, 32], strides = [1, 1]} : vector<8x128xf32> to vector<8x32xf32>
    %211 = vector.extract_strided_slice %208 {offsets = [0, 32], sizes = [8, 32], strides = [1, 1]} : vector<8x128xf32> to vector<8x32xf32>
    %212 = vector.extract_strided_slice %209 {offsets = [0, 64], sizes = [8, 32], strides = [1, 1]} : vector<8x128xf32> to vector<8x32xf32>
    %213 = vector.extract_strided_slice %208 {offsets = [0, 96], sizes = [8, 32], strides = [1, 1]} : vector<8x128xf32> to vector<8x32xf32>
    %214 = arith.mulf %211, %178 : vector<8x32xf32>
    %215 = arith.mulf %210, %212 : vector<8x32xf32>
    %216 = arith.addf %214, %215 : vector<8x32xf32>
    %217 = math.tanh %216 : vector<8x32xf32>
    %218 = arith.mulf %213, %217 : vector<8x32xf32>
    %cst_51 = arith.constant dense<0.000000e+00> : vector<8x128xf32>
    %219 = tpu.matmul %218, %46, %cst_51 {dimension_numbers = #tpu.dot_dimension_numbers<[1], [0], [0], [1], [0, 0, 1, 1], [], []>} : vector<8x32xf32>, vector<32x128xf32>, vector<8x128xf32> -> vector<8x128xf32>
    %cst_52 = arith.constant dense<0.000000e+00> : vector<8x128xf32>
    %220 = tpu.matmul %200, %47, %cst_52 {dimension_numbers = #tpu.dot_dimension_numbers<[1], [0], [0], [1], [0, 0, 1, 1], [], []>} : vector<8x32xf32>, vector<32x128xf32>, vector<8x128xf32> -> vector<8x128xf32>
    %221 = arith.addf %219, %220 : vector<8x128xf32>
    %222 = vector.broadcast %5 : vector<1x128xf32> to vector<8x128xf32>
    %223 = arith.addf %221, %222 : vector<8x128xf32>
    %224 = arith.negf %223 : vector<8x128xf32>
    %225 = math.exp %224 : vector<8x128xf32>
    %cst_53 = arith.constant 1.000000e+00 : f32
    %226 = vector.broadcast %cst_53 : f32 to vector<8x128xf32>
    %227 = arith.addf %226, %225 : vector<8x128xf32>
    %228 = arith.divf %226, %227 : vector<8x128xf32>
    %229 = math.tanh %223 : vector<8x128xf32>
    %230 = vector.extract_strided_slice %228 {offsets = [0, 0], sizes = [8, 32], strides = [1, 1]} : vector<8x128xf32> to vector<8x32xf32>
    %231 = vector.extract_strided_slice %228 {offsets = [0, 32], sizes = [8, 32], strides = [1, 1]} : vector<8x128xf32> to vector<8x32xf32>
    %232 = vector.extract_strided_slice %229 {offsets = [0, 64], sizes = [8, 32], strides = [1, 1]} : vector<8x128xf32> to vector<8x32xf32>
    %233 = vector.extract_strided_slice %228 {offsets = [0, 96], sizes = [8, 32], strides = [1, 1]} : vector<8x128xf32> to vector<8x32xf32>
    %234 = arith.mulf %231, %198 : vector<8x32xf32>
    %235 = arith.mulf %230, %232 : vector<8x32xf32>
    %236 = arith.addf %234, %235 : vector<8x32xf32>
    %237 = math.tanh %236 : vector<8x32xf32>
    %238 = arith.mulf %233, %237 : vector<8x32xf32>
    %239 = vector.extract_strided_slice %44 {offsets = [40, 0], sizes = [8, 128], strides = [1, 1]} : vector<64x128xf32> to vector<8x128xf32>
    %cst_54 = arith.constant dense<0.000000e+00> : vector<8x128xf32>
    %240 = tpu.matmul %218, %45, %cst_54 {dimension_numbers = #tpu.dot_dimension_numbers<[1], [0], [0], [1], [0, 0, 1, 1], [], []>} : vector<8x32xf32>, vector<32x128xf32>, vector<8x128xf32> -> vector<8x128xf32>
    %241 = arith.addf %239, %240 : vector<8x128xf32>
    %242 = arith.negf %241 : vector<8x128xf32>
    %243 = math.exp %242 : vector<8x128xf32>
    %cst_55 = arith.constant 1.000000e+00 : f32
    %244 = vector.broadcast %cst_55 : f32 to vector<8x128xf32>
    %245 = arith.addf %244, %243 : vector<8x128xf32>
    %246 = arith.divf %244, %245 : vector<8x128xf32>
    %247 = math.tanh %241 : vector<8x128xf32>
    %248 = vector.extract_strided_slice %246 {offsets = [0, 0], sizes = [8, 32], strides = [1, 1]} : vector<8x128xf32> to vector<8x32xf32>
    %249 = vector.extract_strided_slice %246 {offsets = [0, 32], sizes = [8, 32], strides = [1, 1]} : vector<8x128xf32> to vector<8x32xf32>
    %250 = vector.extract_strided_slice %247 {offsets = [0, 64], sizes = [8, 32], strides = [1, 1]} : vector<8x128xf32> to vector<8x32xf32>
    %251 = vector.extract_strided_slice %246 {offsets = [0, 96], sizes = [8, 32], strides = [1, 1]} : vector<8x128xf32> to vector<8x32xf32>
    %252 = arith.mulf %249, %216 : vector<8x32xf32>
    %253 = arith.mulf %248, %250 : vector<8x32xf32>
    %254 = arith.addf %252, %253 : vector<8x32xf32>
    %255 = math.tanh %254 : vector<8x32xf32>
    %256 = arith.mulf %251, %255 : vector<8x32xf32>
    %cst_56 = arith.constant dense<0.000000e+00> : vector<8x128xf32>
    %257 = tpu.matmul %256, %46, %cst_56 {dimension_numbers = #tpu.dot_dimension_numbers<[1], [0], [0], [1], [0, 0, 1, 1], [], []>} : vector<8x32xf32>, vector<32x128xf32>, vector<8x128xf32> -> vector<8x128xf32>
    %cst_57 = arith.constant dense<0.000000e+00> : vector<8x128xf32>
    %258 = tpu.matmul %238, %47, %cst_57 {dimension_numbers = #tpu.dot_dimension_numbers<[1], [0], [0], [1], [0, 0, 1, 1], [], []>} : vector<8x32xf32>, vector<32x128xf32>, vector<8x128xf32> -> vector<8x128xf32>
    %259 = arith.addf %257, %258 : vector<8x128xf32>
    %260 = vector.broadcast %5 : vector<1x128xf32> to vector<8x128xf32>
    %261 = arith.addf %259, %260 : vector<8x128xf32>
    %262 = arith.negf %261 : vector<8x128xf32>
    %263 = math.exp %262 : vector<8x128xf32>
    %cst_58 = arith.constant 1.000000e+00 : f32
    %264 = vector.broadcast %cst_58 : f32 to vector<8x128xf32>
    %265 = arith.addf %264, %263 : vector<8x128xf32>
    %266 = arith.divf %264, %265 : vector<8x128xf32>
    %267 = math.tanh %261 : vector<8x128xf32>
    %268 = vector.extract_strided_slice %266 {offsets = [0, 0], sizes = [8, 32], strides = [1, 1]} : vector<8x128xf32> to vector<8x32xf32>
    %269 = vector.extract_strided_slice %266 {offsets = [0, 32], sizes = [8, 32], strides = [1, 1]} : vector<8x128xf32> to vector<8x32xf32>
    %270 = vector.extract_strided_slice %267 {offsets = [0, 64], sizes = [8, 32], strides = [1, 1]} : vector<8x128xf32> to vector<8x32xf32>
    %271 = vector.extract_strided_slice %266 {offsets = [0, 96], sizes = [8, 32], strides = [1, 1]} : vector<8x128xf32> to vector<8x32xf32>
    %272 = arith.mulf %269, %236 : vector<8x32xf32>
    %273 = arith.mulf %268, %270 : vector<8x32xf32>
    %274 = arith.addf %272, %273 : vector<8x32xf32>
    %275 = math.tanh %274 : vector<8x32xf32>
    %276 = arith.mulf %271, %275 : vector<8x32xf32>
    %277 = vector.extract_strided_slice %44 {offsets = [48, 0], sizes = [8, 128], strides = [1, 1]} : vector<64x128xf32> to vector<8x128xf32>
    %cst_59 = arith.constant dense<0.000000e+00> : vector<8x128xf32>
    %278 = tpu.matmul %256, %45, %cst_59 {dimension_numbers = #tpu.dot_dimension_numbers<[1], [0], [0], [1], [0, 0, 1, 1], [], []>} : vector<8x32xf32>, vector<32x128xf32>, vector<8x128xf32> -> vector<8x128xf32>
    %279 = arith.addf %277, %278 : vector<8x128xf32>
    %280 = arith.negf %279 : vector<8x128xf32>
    %281 = math.exp %280 : vector<8x128xf32>
    %cst_60 = arith.constant 1.000000e+00 : f32
    %282 = vector.broadcast %cst_60 : f32 to vector<8x128xf32>
    %283 = arith.addf %282, %281 : vector<8x128xf32>
    %284 = arith.divf %282, %283 : vector<8x128xf32>
    %285 = math.tanh %279 : vector<8x128xf32>
    %286 = vector.extract_strided_slice %284 {offsets = [0, 0], sizes = [8, 32], strides = [1, 1]} : vector<8x128xf32> to vector<8x32xf32>
    %287 = vector.extract_strided_slice %284 {offsets = [0, 32], sizes = [8, 32], strides = [1, 1]} : vector<8x128xf32> to vector<8x32xf32>
    %288 = vector.extract_strided_slice %285 {offsets = [0, 64], sizes = [8, 32], strides = [1, 1]} : vector<8x128xf32> to vector<8x32xf32>
    %289 = vector.extract_strided_slice %284 {offsets = [0, 96], sizes = [8, 32], strides = [1, 1]} : vector<8x128xf32> to vector<8x32xf32>
    %290 = arith.mulf %287, %254 : vector<8x32xf32>
    %291 = arith.mulf %286, %288 : vector<8x32xf32>
    %292 = arith.addf %290, %291 : vector<8x32xf32>
    %293 = math.tanh %292 : vector<8x32xf32>
    %294 = arith.mulf %289, %293 : vector<8x32xf32>
    %cst_61 = arith.constant dense<0.000000e+00> : vector<8x128xf32>
    %295 = tpu.matmul %294, %46, %cst_61 {dimension_numbers = #tpu.dot_dimension_numbers<[1], [0], [0], [1], [0, 0, 1, 1], [], []>} : vector<8x32xf32>, vector<32x128xf32>, vector<8x128xf32> -> vector<8x128xf32>
    %cst_62 = arith.constant dense<0.000000e+00> : vector<8x128xf32>
    %296 = tpu.matmul %276, %47, %cst_62 {dimension_numbers = #tpu.dot_dimension_numbers<[1], [0], [0], [1], [0, 0, 1, 1], [], []>} : vector<8x32xf32>, vector<32x128xf32>, vector<8x128xf32> -> vector<8x128xf32>
    %297 = arith.addf %295, %296 : vector<8x128xf32>
    %298 = vector.broadcast %5 : vector<1x128xf32> to vector<8x128xf32>
    %299 = arith.addf %297, %298 : vector<8x128xf32>
    %300 = arith.negf %299 : vector<8x128xf32>
    %301 = math.exp %300 : vector<8x128xf32>
    %cst_63 = arith.constant 1.000000e+00 : f32
    %302 = vector.broadcast %cst_63 : f32 to vector<8x128xf32>
    %303 = arith.addf %302, %301 : vector<8x128xf32>
    %304 = arith.divf %302, %303 : vector<8x128xf32>
    %305 = math.tanh %299 : vector<8x128xf32>
    %306 = vector.extract_strided_slice %304 {offsets = [0, 0], sizes = [8, 32], strides = [1, 1]} : vector<8x128xf32> to vector<8x32xf32>
    %307 = vector.extract_strided_slice %304 {offsets = [0, 32], sizes = [8, 32], strides = [1, 1]} : vector<8x128xf32> to vector<8x32xf32>
    %308 = vector.extract_strided_slice %305 {offsets = [0, 64], sizes = [8, 32], strides = [1, 1]} : vector<8x128xf32> to vector<8x32xf32>
    %309 = vector.extract_strided_slice %304 {offsets = [0, 96], sizes = [8, 32], strides = [1, 1]} : vector<8x128xf32> to vector<8x32xf32>
    %310 = arith.mulf %307, %274 : vector<8x32xf32>
    %311 = arith.mulf %306, %308 : vector<8x32xf32>
    %312 = arith.addf %310, %311 : vector<8x32xf32>
    %313 = math.tanh %312 : vector<8x32xf32>
    %314 = arith.mulf %309, %313 : vector<8x32xf32>
    %315 = vector.extract_strided_slice %44 {offsets = [56, 0], sizes = [8, 128], strides = [1, 1]} : vector<64x128xf32> to vector<8x128xf32>
    %cst_64 = arith.constant dense<0.000000e+00> : vector<8x128xf32>
    %316 = tpu.matmul %294, %45, %cst_64 {dimension_numbers = #tpu.dot_dimension_numbers<[1], [0], [0], [1], [0, 0, 1, 1], [], []>} : vector<8x32xf32>, vector<32x128xf32>, vector<8x128xf32> -> vector<8x128xf32>
    %317 = arith.addf %315, %316 : vector<8x128xf32>
    %318 = arith.negf %317 : vector<8x128xf32>
    %319 = math.exp %318 : vector<8x128xf32>
    %cst_65 = arith.constant 1.000000e+00 : f32
    %320 = vector.broadcast %cst_65 : f32 to vector<8x128xf32>
    %321 = arith.addf %320, %319 : vector<8x128xf32>
    %322 = arith.divf %320, %321 : vector<8x128xf32>
    %323 = math.tanh %317 : vector<8x128xf32>
    %324 = vector.extract_strided_slice %322 {offsets = [0, 0], sizes = [8, 32], strides = [1, 1]} : vector<8x128xf32> to vector<8x32xf32>
    %325 = vector.extract_strided_slice %322 {offsets = [0, 32], sizes = [8, 32], strides = [1, 1]} : vector<8x128xf32> to vector<8x32xf32>
    %326 = vector.extract_strided_slice %323 {offsets = [0, 64], sizes = [8, 32], strides = [1, 1]} : vector<8x128xf32> to vector<8x32xf32>
    %327 = vector.extract_strided_slice %322 {offsets = [0, 96], sizes = [8, 32], strides = [1, 1]} : vector<8x128xf32> to vector<8x32xf32>
    %328 = arith.mulf %325, %292 : vector<8x32xf32>
    %329 = arith.mulf %324, %326 : vector<8x32xf32>
    %330 = arith.addf %328, %329 : vector<8x32xf32>
    %331 = math.tanh %330 : vector<8x32xf32>
    %332 = arith.mulf %327, %331 : vector<8x32xf32>
    %cst_66 = arith.constant dense<0.000000e+00> : vector<8x128xf32>
    %333 = tpu.matmul %332, %46, %cst_66 {dimension_numbers = #tpu.dot_dimension_numbers<[1], [0], [0], [1], [0, 0, 1, 1], [], []>} : vector<8x32xf32>, vector<32x128xf32>, vector<8x128xf32> -> vector<8x128xf32>
    %cst_67 = arith.constant dense<0.000000e+00> : vector<8x128xf32>
    %334 = tpu.matmul %314, %47, %cst_67 {dimension_numbers = #tpu.dot_dimension_numbers<[1], [0], [0], [1], [0, 0, 1, 1], [], []>} : vector<8x32xf32>, vector<32x128xf32>, vector<8x128xf32> -> vector<8x128xf32>
    %335 = arith.addf %333, %334 : vector<8x128xf32>
    %336 = vector.broadcast %5 : vector<1x128xf32> to vector<8x128xf32>
    %337 = arith.addf %335, %336 : vector<8x128xf32>
    %338 = arith.negf %337 : vector<8x128xf32>
    %339 = math.exp %338 : vector<8x128xf32>
    %cst_68 = arith.constant 1.000000e+00 : f32
    %340 = vector.broadcast %cst_68 : f32 to vector<8x128xf32>
    %341 = arith.addf %340, %339 : vector<8x128xf32>
    %342 = arith.divf %340, %341 : vector<8x128xf32>
    %343 = math.tanh %337 : vector<8x128xf32>
    %344 = vector.extract_strided_slice %342 {offsets = [0, 0], sizes = [8, 32], strides = [1, 1]} : vector<8x128xf32> to vector<8x32xf32>
    %345 = vector.extract_strided_slice %342 {offsets = [0, 32], sizes = [8, 32], strides = [1, 1]} : vector<8x128xf32> to vector<8x32xf32>
    %346 = vector.extract_strided_slice %343 {offsets = [0, 64], sizes = [8, 32], strides = [1, 1]} : vector<8x128xf32> to vector<8x32xf32>
    %347 = vector.extract_strided_slice %342 {offsets = [0, 96], sizes = [8, 32], strides = [1, 1]} : vector<8x128xf32> to vector<8x32xf32>
    %348 = arith.mulf %345, %312 : vector<8x32xf32>
    %349 = arith.mulf %344, %346 : vector<8x32xf32>
    %350 = arith.addf %348, %349 : vector<8x32xf32>
    %351 = math.tanh %350 : vector<8x32xf32>
    %352 = arith.mulf %347, %351 : vector<8x32xf32>
    %353 = tpu.concatenate %86, %124, %162, %200, %238, %276, %314, %352 in 0 : vector<8x32xf32>, vector<8x32xf32>, vector<8x32xf32>, vector<8x32xf32>, vector<8x32xf32>, vector<8x32xf32>, vector<8x32xf32>, vector<8x32xf32> -> vector<64x32xf32>
    %cst_69 = arith.constant dense<0.000000e+00> : vector<64xf32>
    %354 = vector.multi_reduction <add>, %353, %cst_69 [1] : vector<64x32xf32> to vector<64xf32>
    %355 = vector.shape_cast %354 : vector<64xf32> to vector<64x1xf32>
    %cst_70 = arith.constant 3.200000e+01 : f32
    %356 = vector.broadcast %cst_70 : f32 to vector<64x1xf32>
    %357 = arith.divf %355, %356 : vector<64x1xf32>
    %358 = vector.broadcast %357 : vector<64x1xf32> to vector<64x32xf32>
    %359 = arith.subf %353, %358 : vector<64x32xf32>
    %360 = arith.mulf %359, %359 : vector<64x32xf32>
    %cst_71 = arith.constant dense<0.000000e+00> : vector<64xf32>
    %361 = vector.multi_reduction <add>, %360, %cst_71 [1] : vector<64x32xf32> to vector<64xf32>
    %362 = vector.shape_cast %361 : vector<64xf32> to vector<64x1xf32>
    %cst_72 = arith.constant 3.200000e+01 : f32
    %363 = vector.broadcast %cst_72 : f32 to vector<64x1xf32>
    %364 = arith.divf %362, %363 : vector<64x1xf32>
    %365 = vector.broadcast %357 : vector<64x1xf32> to vector<64x32xf32>
    %366 = arith.subf %353, %365 : vector<64x32xf32>
    %cst_73 = arith.constant 9.99999974E-6 : f32
    %367 = vector.broadcast %cst_73 : f32 to vector<64x1xf32>
    %368 = arith.addf %364, %367 : vector<64x1xf32>
    %369 = math.rsqrt %368 : vector<64x1xf32>
    %370 = vector.broadcast %369 : vector<64x1xf32> to vector<64x32xf32>
    %371 = arith.mulf %366, %370 : vector<64x32xf32>
    %372 = vector.broadcast %6 : vector<1x32xf32> to vector<64x32xf32>
    %373 = arith.mulf %371, %372 : vector<64x32xf32>
    %374 = vector.broadcast %7 : vector<1x32xf32> to vector<64x32xf32>
    %375 = arith.addf %373, %374 : vector<64x32xf32>
    %c8_74 = arith.constant 8 : index
    %c0_75 = arith.constant 0 : index
    %376 = vector.load %arg2[%c8_74, %c0_75] : memref<40x32xf32, #tpu.memory_space<vmem>>, vector<32x32xf32>
    %cst_76 = arith.constant dense<0.000000e+00> : vector<64x32xf32>
    %377 = tpu.matmul %375, %376, %cst_76 {dimension_numbers = #tpu.dot_dimension_numbers<[1], [0], [0], [1], [0, 0, 1, 1], [], []>} : vector<64x32xf32>, vector<32x32xf32>, vector<64x32xf32> -> vector<64x32xf32>
    %378 = vector.broadcast %8 : vector<1x32xf32> to vector<64x32xf32>
    %379 = arith.addf %377, %378 : vector<64x32xf32>
    %cst_77 = arith.constant 0.000000e+00 : f32
    %380 = vector.broadcast %cst_77 : f32 to vector<64x32xf32>
    %381 = arith.maximumf %379, %380 : vector<64x32xf32>
    %c136 = arith.constant 136 : index
    %c0_78 = arith.constant 0 : index
    %382 = vector.load %arg1[%c136, %c0_78] : memref<168x128xf32, #tpu.memory_space<vmem>>, vector<32x128xf32>
    %cst_79 = arith.constant dense<0.000000e+00> : vector<64x128xf32>
    %383 = tpu.matmul %381, %382, %cst_79 {dimension_numbers = #tpu.dot_dimension_numbers<[1], [0], [0], [1], [0, 0, 1, 1], [], []>} : vector<64x32xf32>, vector<32x128xf32>, vector<64x128xf32> -> vector<64x128xf32>
    %384 = vector.broadcast %9 : vector<1x128xf32> to vector<64x128xf32>
    %385 = arith.addf %383, %384 : vector<64x128xf32>
    %c0_80 = arith.constant 0 : index
    %c0_81 = arith.constant 0 : index
    %386 = vector.load %arg4[%c0_80, %c0_81] : memref<64x128xf32, #tpu.memory_space<vmem>>, vector<64x128xf32>
    tpu.vector_store %arg4[%c0_80, %c0_81], %385 {strides = array<i32>} : memref<64x128xf32, #tpu.memory_space<vmem>>, vector<64x128xf32>,
    %387 = tpu.concatenate %332, %352, %330, %350 in 1 : vector<8x32xf32>, vector<8x32xf32>, vector<8x32xf32>, vector<8x32xf32> -> vector<8x128xf32>
    %c0_82 = arith.constant 0 : index
    %c0_83 = arith.constant 0 : index
    %388 = vector.load %arg5[%c0_82, %c0_83] : memref<8x128xf32, #tpu.memory_space<vmem>>, vector<8x128xf32>
    tpu.vector_store %arg5[%c0_82, %c0_83], %387 {strides = array<i32>} : memref<8x128xf32, #tpu.memory_space<vmem>>, vector<8x128xf32>,
    return
  }
}

</mosaic_0001>

<llo_original>
// kernel: sketchgen_forward.1
$region0: #{sketchgen_forward.1}
  #allocation0 [shape = 'u32[]', space=smem, size = 0x4, offset = 0x4, fixed_abs, tag = 'smem constant byte address 0x4 - core index']
  #allocation1 [shape = 'u32[144,128]{1,0:T(1,128)}', space=vmem, size = 0x12000, scoped, tag = 'internal scratch']
  %s0 = inlined_call_operand.vmem [shape: f32[64,8], index: 0, kind: input, shape index: {}]
  %s1 = inlined_call_operand.vmem [shape: f32[168,128], index: 1, kind: input, shape index: {}]
  %s2 = inlined_call_operand.vmem [shape: f32[40,32], index: 2, kind: input, shape index: {}]
  %s3 = inlined_call_operand.vmem [shape: f32[16,128], index: 3, kind: input, shape index: {}]
  %s4 = inlined_call_operand.vmem [shape: f32[64,128], index: 4, kind: output, shape index: {0}]
  %s5 = inlined_call_operand.vmem [shape: f32[8,128], index: 5, kind: output, shape index: {1}]
  %6 = xla_tuple %s4, %s5
  %s7 = sld [smem:[#allocation0]]
  $region34: #{sketchgen_forward.1} parent=0
    _
  %s9 = ssub.s32 1, %s7
  %s10 = scalar_select 0, %s9, %s7
  // Predicated region
  $region2: #{sketchgen_forward.1} parent=0 // pred_check
    _
  $region3: #{sketchgen_forward.1} parent=0 // pred_check_branch
    %12 = sbr.rel (0) target = $region5
  $region4: #{sketchgen_forward.1} parent=0 // pred_region
    _
  $region5: #{sketchgen_forward.1} parent=0 // pred_fallthru
    _
  // Predicated region
  $region6: #{sketchgen_forward.1} parent=0 // pred_check
    _
  $region7: #{sketchgen_forward.1} parent=0 // pred_check_branch
    %14 = sbr.rel (0) target = $region9
  $region8: #{sketchgen_forward.1} parent=0 // pred_region
    _
  $region9: #{sketchgen_forward.1} parent=0 // pred_fallthru
    _
  // Predicated region
  $region10: #{sketchgen_forward.1} parent=0 // pred_check
    _
  $region11: #{sketchgen_forward.1} parent=0 // pred_check_branch
    %16 = sbr.rel (0) target = $region13
  $region12: #{sketchgen_forward.1} parent=0 // pred_region
    _
  $region13: #{sketchgen_forward.1} parent=0 // pred_fallthru
    _
  // Predicated region
  $region14: #{sketchgen_forward.1} parent=0 // pred_check
    _
  $region15: #{sketchgen_forward.1} parent=0 // pred_check_branch
    %18 = sbr.rel (0) target = $region17
  $region16: #{sketchgen_forward.1} parent=0 // pred_region
    _
  $region17: #{sketchgen_forward.1} parent=0 // pred_fallthru
    _
  %v19 = vld [vmem:[%s0] sm:$0xff]
  %v20 = vld [vmem:[%s0 + $0x8] sm:$0xff]
  %v21 = vld [vmem:[%s0 + $0x10] sm:$0xff]
  %v22 = vld [vmem:[%s0 + $0x18] sm:$0xff]
  %v23 = vld [vmem:[%s0 + $0x20] sm:$0xff]
  %v24 = vld [vmem:[%s0 + $0x28] sm:$0xff]
  %v25 = vld [vmem:[%s0 + $0x30] sm:$0xff]
  %v26 = vld [vmem:[%s0 + $0x38] sm:$0xff]
  %v27 = vld [vmem:[%s3] sm:$0x1]
  %v28 = vld [vmem:[%s3 + $0x1] sm:$0x1]
  %v29 = vld [vmem:[%s3 + $0x2] sm:$0x1]
  %v30 = vld [vmem:[%s3 + $0x3] sm:$0x1]
  %v31 = vld [vmem:[%s3 + $0x4] sm:$0x1]
  %v32 = vld [vmem:[%s3 + $0x5] sm:$0x1]
  %v33 = vld [vmem:[%s3 + $0x6] sm:$0x1]
  %v34 = vld [vmem:[%s3 + $0x7] sm:$0x1]
  %v35 = vld [vmem:[%s3 + $0x8] sm:$0x1]
  %v36 = vld [vmem:[%s2] sm:$0xff]
  %v37 = vlaneseq
  %v38 = vshrl.u32 %v37, 7
  %v39 = vsub.s32 0, %v38
  %v40 = vrot.slane %v27, %v39
  %vm41 = vcmask 64512
  %v43 = vsel %vm41, %v19, 0
  %v46 = vsel %vm41, %v20, 0
  %v49 = vsel %vm41, %v21, 0
  %v52 = vsel %vm41, %v22, 0
  %v55 = vsel %vm41, %v23, 0
  %v58 = vsel %vm41, %v24, 0
  %v61 = vsel %vm41, %v25, 0
  %v64 = vsel %vm41, %v26, 0
  %66 = vmatprep.subr.mxu0 0.0
  %67 = vmatpush1.msra.mxu0 0.0
  %68 = vmatprep.subr.mxu0 0.0
  %69 = vmatpush1.msra.mxu0 0.0
  %70 = vmatprep.subr.mxu0 0.0
  %71 = vmatpush1.msra.mxu0 0.0
  %72 = vmatprep.subr.mxu0 0.0
  %73 = vmatpush1.msra.mxu0 0.0
  %74 = vmatprep.subr.mxu0 0.0
  %75 = vmatpush1.msra.mxu0 0.0
  %76 = vmatprep.subr.mxu0 0.0
  %77 = vmatpush1.msra.mxu0 0.0
  %78 = vmatprep.subr.mxu0 0.0
  %79 = vmatpush1.msra.mxu0 0.0
  %80 = vmatprep.subr.mxu0 0.0
  %81 = vmatpush1.msra.mxu0 0.0
  %82 = vmatprep.subr.mxu0 0.0
  %83 = vmatpush1.msra.mxu0 0.0
  %84 = vmatprep.subr.mxu0 0.0
  %85 = vmatpush1.msra.mxu0 0.0
  %86 = vmatprep.subr.mxu0 0.0
  %87 = vmatpush1.msra.mxu0 0.0
  %88 = vmatprep.subr.mxu0 0.0
  %89 = vmatpush1.msra.mxu0 0.0
  %90 = vmatprep.subr.mxu0 0.0
  %91 = vmatpush1.msra.mxu0 0.0
  %92 = vmatprep.subr.mxu0 0.0
  %93 = vmatpush1.msra.mxu0 0.0
  %94 = vmatprep.subr.mxu0 0.0
  %95 = vmatpush1.msra.mxu0 0.0
  %96 = vmatprep.subr.mxu0 0.0
  %97 = vmatpush1.msra.mxu0 %v36
  %98 = vmatprep.subr.mxu0 0.0
  %99 = vmatpush2.msra.mxu0 0.0
  %100 = vmatprep.subr.mxu0 0.0
  %101 = vmatpush2.msra.mxu0 0.0
  %102 = vmatprep.subr.mxu0 0.0
  %103 = vmatpush2.msra.mxu0 0.0
  %104 = vmatprep.subr.mxu0 0.0
  %105 = vmatpush2.msra.mxu0 0.0
  %106 = vmatprep.subr.mxu0 0.0
  %107 = vmatpush2.msra.mxu0 0.0
  %108 = vmatprep.subr.mxu0 0.0
  %109 = vmatpush2.msra.mxu0 0.0
  %110 = vmatprep.subr.mxu0 0.0
  %111 = vmatpush2.msra.mxu0 0.0
  %112 = vmatprep.subr.mxu0 0.0
  %113 = vmatpush2.msra.mxu0 0.0
  %114 = vmatprep.subr.mxu0 0.0
  %115 = vmatpush2.msra.mxu0 0.0
  %116 = vmatprep.subr.mxu0 0.0
  %117 = vmatpush2.msra.mxu0 0.0
  %118 = vmatprep.subr.mxu0 0.0
  %119 = vmatpush2.msra.mxu0 0.0
  %120 = vmatprep.subr.mxu0 0.0
  %121 = vmatpush2.msra.mxu0 0.0
  %122 = vmatprep.subr.mxu0 0.0
  %123 = vmatpush2.msra.mxu0 0.0
  %124 = vmatprep.subr.mxu0 0.0
  %125 = vmatpush2.msra.mxu0 0.0
  %126 = vmatprep.subr.mxu0 0.0
  %127 = vmatpush2.msra.mxu0 0.0
  %128 = vmatprep.subr.mxu0 0.0
  %129 = vmatpush2.msra.mxu0 0.0
  %130 = vmatprep.mubr.f32.mxu0 0.0
  %131 = vmatmul.mubr.f32.gmra.mxu0 %v43
  %v132 = vpop.f32.mrf.mxu0
  %v133 = vadd.f32 %v40, %v132
  %v134 = vpop.f32.mrf.mxu0
  %135 = vmatprep.mubr.f32.mxu0 0.0
  %136 = vmatmul.mubr.f32.gmra.mxu0 %v46
  %v137 = vpop.f32.mrf.mxu0
  %v138 = vadd.f32 %v40, %v137
  %v139 = vpop.f32.mrf.mxu0
  %140 = vmatprep.mubr.f32.mxu0 0.0
  %141 = vmatmul.mubr.f32.gmra.mxu0 %v49
  %v142 = vpop.f32.mrf.mxu0
  %v143 = vadd.f32 %v40, %v142
  %v144 = vpop.f32.mrf.mxu0
  %145 = vmatprep.mubr.f32.mxu0 0.0
  %146 = vmatmul.mubr.f32.gmra.mxu0 %v52
  %v147 = vpop.f32.mrf.mxu0
  %v148 = vadd.f32 %v40, %v147
  %v149 = vpop.f32.mrf.mxu0
  %150 = vmatprep.mubr.f32.mxu0 0.0
  %151 = vmatmul.mubr.f32.gmra.mxu0 %v55
  %v152 = vpop.f32.mrf.mxu0
  %v153 = vadd.f32 %v40, %v152
  %v154 = vpop.f32.mrf.mxu0
  %155 = vmatprep.mubr.f32.mxu0 0.0
  %156 = vmatmul.mubr.f32.gmra.mxu0 %v58
  %v157 = vpop.f32.mrf.mxu0
  %v158 = vadd.f32 %v40, %v157
  %v159 = vpop.f32.mrf.mxu0
  %160 = vmatprep.mubr.f32.mxu0 0.0
  %161 = vmatmul.mubr.f32.gmra.mxu0 %v61
  %v162 = vpop.f32.mrf.mxu0
  %v163 = vadd.f32 %v40, %v162
  %v164 = vpop.f32.mrf.mxu0
  %165 = vmatprep.mubr.f32.mxu0 0.0
  %166 = vmatmul.mubr.f32.gmra.mxu0 %v64
  %v167 = vpop.f32.mrf.mxu0
  %v168 = vadd.f32 %v40, %v167
  %v169 = vpop.f32.mrf.mxu0
  %170 = vdwg.mxu0
  %vm171 = vcmask 261120
  %v172 = vsel %vm171, %v133, 0.0
  %173 = vadd.xlane.f32.xlu0 %v172
  %v174 = vpop.xlane.xlu0 %173
  %v175 = vsel %vm171, %v138, 0.0
  %176 = vadd.xlane.f32.xlu0 %v175
  %v177 = vpop.xlane.xlu0 %176
  %v178 = vsel %vm171, %v143, 0.0
  %179 = vadd.xlane.f32.xlu0 %v178
  %v180 = vpop.xlane.xlu0 %179
  %v181 = vsel %vm171, %v148, 0.0
  %182 = vadd.xlane.f32.xlu0 %v181
  %v183 = vpop.xlane.xlu0 %182
  %v184 = vsel %vm171, %v153, 0.0
  %185 = vadd.xlane.f32.xlu0 %v184
  %v186 = vpop.xlane.xlu0 %185
  %v187 = vsel %vm171, %v158, 0.0
  %188 = vadd.xlane.f32.xlu0 %v187
  %v189 = vpop.xlane.xlu0 %188
  %v190 = vsel %vm171, %v163, 0.0
  %191 = vadd.xlane.f32.xlu0 %v190
  %v192 = vpop.xlane.xlu0 %191
  %v193 = vsel %vm171, %v168, 0.0
  %194 = vadd.xlane.f32.xlu0 %v193
  %v195 = vpop.xlane.xlu0 %194
  %v196 = vrcp.pop 32.0
  %v197 = vmul.f32 %v174, %v196
  %v198 = vmul.f32 %v177, %v196
  %v199 = vmul.f32 %v180, %v196
  %v200 = vmul.f32 %v183, %v196
  %v201 = vmul.f32 %v186, %v196
  %v202 = vmul.f32 %v189, %v196
  %v203 = vmul.f32 %v192, %v196
  %v204 = vmul.f32 %v195, %v196
  %v205 = vsub.f32 %v133, %v197
  %v206 = vsub.f32 %v138, %v198
  %v207 = vsub.f32 %v143, %v199
  %v208 = vsub.f32 %v148, %v200
  %v209 = vsub.f32 %v153, %v201
  %v210 = vsub.f32 %v158, %v202
  %v211 = vsub.f32 %v163, %v203
  %v212 = vsub.f32 %v168, %v204
  %v213 = vmul.f32 %v205, %v205
  %v214 = vmul.f32 %v206, %v206
  %v215 = vmul.f32 %v207, %v207
  %v216 = vmul.f32 %v208, %v208
  %v217 = vmul.f32 %v209, %v209
  %v218 = vmul.f32 %v210, %v210
  %v219 = vmul.f32 %v211, %v211
  %v220 = vmul.f32 %v212, %v212
  %v221 = vsel %vm171, %v213, 0.0
  %222 = vadd.xlane.f32.xlu0 %v221
  %v223 = vpop.xlane.xlu0 %222
  %v224 = vsel %vm171, %v214, 0.0
  %225 = vadd.xlane.f32.xlu0 %v224
  %v226 = vpop.xlane.xlu0 %225
  %v227 = vsel %vm171, %v215, 0.0
  %228 = vadd.xlane.f32.xlu0 %v227
  %v229 = vpop.xlane.xlu0 %228
  %v230 = vsel %vm171, %v216, 0.0
  %231 = vadd.xlane.f32.xlu0 %v230
  %v232 = vpop.xlane.xlu0 %231
  %v233 = vsel %vm171, %v217, 0.0
  %234 = vadd.xlane.f32.xlu0 %v233
  %v235 = vpop.xlane.xlu0 %234
  %v236 = vsel %vm171, %v218, 0.0
  %237 = vadd.xlane.f32.xlu0 %v236
  %v238 = vpop.xlane.xlu0 %237
  %v239 = vsel %vm171, %v219, 0.0
  %240 = vadd.xlane.f32.xlu0 %v239
  %v241 = vpop.xlane.xlu0 %240
  %v242 = vsel %vm171, %v220, 0.0
  %243 = vadd.xlane.f32.xlu0 %v242
  %v244 = vpop.xlane.xlu0 %243
  %v245 = vmul.f32 %v223, %v196
  %v246 = vmul.f32 %v226, %v196
  %v247 = vmul.f32 %v229, %v196
  %v248 = vmul.f32 %v232, %v196
  %v249 = vmul.f32 %v235, %v196
  %v250 = vmul.f32 %v238, %v196
  %v251 = vmul.f32 %v241, %v196
  %v252 = vmul.f32 %v244, %v196
  %v253 = vadd.f32 %v245, 1e-05
  %v254 = vadd.f32 %v246, 1e-05
  %v255 = vadd.f32 %v247, 1e-05
  %v256 = vadd.f32 %v248, 1e-05
  %v257 = vadd.f32 %v249, 1e-05
  %v258 = vadd.f32 %v250, 1e-05
  %v259 = vadd.f32 %v251, 1e-05
  %v260 = vadd.f32 %v252, 1e-05
  %v261 = vrsqrt.pop %v253
  %v262 = vrsqrt.pop %v254
  %v263 = vrsqrt.pop %v255
  %v264 = vrsqrt.pop %v256
  %v265 = vrsqrt.pop %v257
  %v266 = vrsqrt.pop %v258
  %v267 = vrsqrt.pop %v259
  %v268 = vrsqrt.pop %v260
  %v269 = vmul.f32 %v205, %v261
  %v270 = vmul.f32 %v206, %v262
  %v271 = vmul.f32 %v207, %v263
  %v272 = vmul.f32 %v208, %v264
  %v273 = vmul.f32 %v209, %v265
  %v274 = vmul.f32 %v210, %v266
  %v275 = vmul.f32 %v211, %v267
  %v276 = vmul.f32 %v212, %v268
  %v277 = vlaneseq
  %v278 = vshrl.u32 %v277, 7
  %v279 = vsub.s32 0, %v278
  %v280 = vrot.slane %v28, %v279
  %v281 = vmul.f32 %v269, %v280
  %v282 = vmul.f32 %v270, %v280
  %v283 = vmul.f32 %v271, %v280
  %v284 = vmul.f32 %v272, %v280
  %v285 = vmul.f32 %v273, %v280
  %v286 = vmul.f32 %v274, %v280
  %v287 = vmul.f32 %v275, %v280
  %v288 = vmul.f32 %v276, %v280
  %v289 = vlaneseq
  %v290 = vshrl.u32 %v289, 7
  %v291 = vsub.s32 0, %v290
  %v292 = vrot.slane %v29, %v291
  %v293 = vadd.f32 %v281, %v292
  %v294 = vadd.f32 %v282, %v292
  %v295 = vadd.f32 %v283, %v292
  %v296 = vadd.f32 %v284, %v292
  %v297 = vadd.f32 %v285, %v292
  %v298 = vadd.f32 %v286, %v292
  %v299 = vadd.f32 %v287, %v292
  %v300 = vadd.f32 %v288, %v292
  %v301 = vmax.f32 %v293, 0.0
  %v302 = vmax.f32 %v294, 0.0
  %v303 = vmax.f32 %v295, 0.0
  %v304 = vmax.f32 %v296, 0.0
  %v305 = vmax.f32 %v297, 0.0
  %v306 = vmax.f32 %v298, 0.0
  %v307 = vmax.f32 %v299, 0.0
  %v308 = vmax.f32 %v300, 0.0
  %v309 = vld [vmem:[%s1] sm:$0xff]
  %310 = vmatprep.subr.mxu0 0.0
  %311 = vmatpush1.msra.mxu0 0.0
  %312 = vmatprep.subr.mxu0 0.0
  %313 = vmatpush1.msra.mxu0 0.0
  %314 = vmatprep.subr.mxu0 0.0
  %315 = vmatpush1.msra.mxu0 0.0
  %316 = vmatprep.subr.mxu0 0.0
  %317 = vmatpush1.msra.mxu0 0.0
  %318 = vmatprep.subr.mxu0 0.0
  %319 = vmatpush1.msra.mxu0 0.0
  %320 = vmatprep.subr.mxu0 0.0
  %321 = vmatpush1.msra.mxu0 0.0
  %322 = vmatprep.subr.mxu0 0.0
  %323 = vmatpush1.msra.mxu0 0.0
  %324 = vmatprep.subr.mxu0 0.0
  %325 = vmatpush1.msra.mxu0 0.0
  %326 = vmatprep.subr.mxu0 0.0
  %327 = vmatpush1.msra.mxu0 0.0
  %328 = vmatprep.subr.mxu0 0.0
  %329 = vmatpush1.msra.mxu0 0.0
  %330 = vmatprep.subr.mxu0 0.0
  %331 = vmatpush1.msra.mxu0 0.0
  %332 = vmatprep.subr.mxu0 0.0
  %333 = vmatpush1.msra.mxu0 0.0
  %334 = vmatprep.subr.mxu0 0.0
  %335 = vmatpush1.msra.mxu0 0.0
  %336 = vmatprep.subr.mxu0 0.0
  %337 = vmatpush1.msra.mxu0 0.0
  %338 = vmatprep.subr.mxu0 0.0
  %339 = vmatpush1.msra.mxu0 0.0
  %340 = vmatprep.subr.mxu0 0.0
  %341 = vmatpush1.msra.mxu0 %v309
  %342 = vmatprep.subr.mxu0 0.0
  %343 = vmatpush2.msra.mxu0 0.0
  %344 = vmatprep.subr.mxu0 0.0
  %345 = vmatpush2.msra.mxu0 0.0
  %346 = vmatprep.subr.mxu0 0.0
  %347 = vmatpush2.msra.mxu0 0.0
  %348 = vmatprep.subr.mxu0 0.0
  %349 = vmatpush2.msra.mxu0 0.0
  %350 = vmatprep.subr.mxu0 0.0
  %351 = vmatpush2.msra.mxu0 0.0
  %352 = vmatprep.subr.mxu0 0.0
  %353 = vmatpush2.msra.mxu0 0.0
  %354 = vmatprep.subr.mxu0 0.0
  %355 = vmatpush2.msra.mxu0 0.0
  %356 = vmatprep.subr.mxu0 0.0
  %357 = vmatpush2.msra.mxu0 0.0
  %358 = vmatprep.subr.mxu0 0.0
  %359 = vmatpush2.msra.mxu0 0.0
  %360 = vmatprep.subr.mxu0 0.0
  %361 = vmatpush2.msra.mxu0 0.0
  %362 = vmatprep.subr.mxu0 0.0
  %363 = vmatpush2.msra.mxu0 0.0
  %364 = vmatprep.subr.mxu0 0.0
  %365 = vmatpush2.msra.mxu0 0.0
  %366 = vmatprep.subr.mxu0 0.0
  %367 = vmatpush2.msra.mxu0 0.0
  %368 = vmatprep.subr.mxu0 0.0
  %369 = vmatpush2.msra.mxu0 0.0
  %370 = vmatprep.subr.mxu0 0.0
  %371 = vmatpush2.msra.mxu0 0.0
  %372 = vmatprep.subr.mxu0 0.0
  %373 = vmatpush2.msra.mxu0 0.0
  %374 = vmatprep.mubr.f32.mxu0 0.0
  %375 = vmatmul.mubr.f32.gmra.mxu0 %v43
  %v376 = vpop.f32.mrf.mxu0
  %v377 = vadd.f32 0.0, %v376
  %v378 = vpop.f32.mrf.mxu0
  %379 = vmatprep.mubr.f32.mxu0 0.0
  %380 = vmatmul.mubr.f32.gmra.mxu0 %v46
  %v381 = vpop.f32.mrf.mxu0
  %v382 = vadd.f32 0.0, %v381
  %v383 = vpop.f32.mrf.mxu0
  %384 = vmatprep.mubr.f32.mxu0 0.0
  %385 = vmatmul.mubr.f32.gmra.mxu0 %v49
  %v386 = vpop.f32.mrf.mxu0
  %v387 = vadd.f32 0.0, %v386
  %v388 = vpop.f32.mrf.mxu0
  %389 = vmatprep.mubr.f32.mxu0 0.0
  %390 = vmatmul.mubr.f32.gmra.mxu0 %v52
  %v391 = vpop.f32.mrf.mxu0
  %v392 = vadd.f32 0.0, %v391
  %v393 = vpop.f32.mrf.mxu0
  %394 = vmatprep.mubr.f32.mxu0 0.0
  %395 = vmatmul.mubr.f32.gmra.mxu0 %v55
  %v396 = vpop.f32.mrf.mxu0
  %v397 = vadd.f32 0.0, %v396
  %v398 = vpop.f32.mrf.mxu0
  %399 = vmatprep.mubr.f32.mxu0 0.0
  %400 = vmatmul.mubr.f32.gmra.mxu0 %v58
  %v401 = vpop.f32.mrf.mxu0
  %v402 = vadd.f32 0.0, %v401
  %v403 = vpop.f32.mrf.mxu0
  %404 = vmatprep.mubr.f32.mxu0 0.0
  %405 = vmatmul.mubr.f32.gmra.mxu0 %v61
  %v406 = vpop.f32.mrf.mxu0
  %v407 = vadd.f32 0.0, %v406
  %v408 = vpop.f32.mrf.mxu0
  %409 = vmatprep.mubr.f32.mxu0 0.0
  %410 = vmatmul.mubr.f32.gmra.mxu0 %v64
  %v411 = vpop.f32.mrf.mxu0
  %v412 = vadd.f32 0.0, %v411
  %v413 = vpop.f32.mrf.mxu0
  %414 = vdwg.mxu0
  %v415 = vld [vmem:[%s1 + $0x8] sm:$0xff]
  %v416 = vld [vmem:[%s1 + $0x10] sm:$0xff]
  %v417 = vld [vmem:[%s1 + $0x18] sm:$0xff]
  %v418 = vld [vmem:[%s1 + $0x20] sm:$0xff]
  %v420 = vsel %vm171, %v301, 0
  %v423 = vsel %vm171, %v302, 0
  %v426 = vsel %vm171, %v303, 0
  %v429 = vsel %vm171, %v304, 0
  %v432 = vsel %vm171, %v305, 0
  %v435 = vsel %vm171, %v306, 0
  %v438 = vsel %vm171, %v307, 0
  %v441 = vsel %vm171, %v308, 0
  %443 = vmatprep.subr.mxu0 0.0
  %444 = vmatpush1.msra.mxu0 0.0
  %445 = vmatprep.subr.mxu0 0.0
  %446 = vmatpush1.msra.mxu0 0.0
  %447 = vmatprep.subr.mxu0 0.0
  %448 = vmatpush1.msra.mxu0 0.0
  %449 = vmatprep.subr.mxu0 0.0
  %450 = vmatpush1.msra.mxu0 0.0
  %451 = vmatprep.subr.mxu0 0.0
  %452 = vmatpush1.msra.mxu0 0.0
  %453 = vmatprep.subr.mxu0 0.0
  %454 = vmatpush1.msra.mxu0 0.0
  %455 = vmatprep.subr.mxu0 0.0
  %456 = vmatpush1.msra.mxu0 0.0
  %457 = vmatprep.subr.mxu0 0.0
  %458 = vmatpush1.msra.mxu0 0.0
  %459 = vmatprep.subr.mxu0 0.0
  %460 = vmatpush1.msra.mxu0 0.0
  %461 = vmatprep.subr.mxu0 0.0
  %462 = vmatpush1.msra.mxu0 0.0
  %463 = vmatprep.subr.mxu0 0.0
  %464 = vmatpush1.msra.mxu0 0.0
  %465 = vmatprep.subr.mxu0 0.0
  %466 = vmatpush1.msra.mxu0 0.0
  %467 = vmatprep.subr.mxu0 0.0
  %468 = vmatpush1.msra.mxu0 %v418
  %469 = vmatprep.subr.mxu0 0.0
  %470 = vmatpush1.msra.mxu0 %v417
  %471 = vmatprep.subr.mxu0 0.0
  %472 = vmatpush1.msra.mxu0 %v416
  %473 = vmatprep.subr.mxu0 0.0
  %474 = vmatpush1.msra.mxu0 %v415
  %475 = vmatprep.subr.mxu0 0.0
  %476 = vmatpush2.msra.mxu0 0.0
  %477 = vmatprep.subr.mxu0 0.0
  %478 = vmatpush2.msra.mxu0 0.0
  %479 = vmatprep.subr.mxu0 0.0
  %480 = vmatpush2.msra.mxu0 0.0
  %481 = vmatprep.subr.mxu0 0.0
  %482 = vmatpush2.msra.mxu0 0.0
  %483 = vmatprep.subr.mxu0 0.0
  %484 = vmatpush2.msra.mxu0 0.0
  %485 = vmatprep.subr.mxu0 0.0
  %486 = vmatpush2.msra.mxu0 0.0
  %487 = vmatprep.subr.mxu0 0.0
  %488 = vmatpush2.msra.mxu0 0.0
  %489 = vmatprep.subr.mxu0 0.0
  %490 = vmatpush2.msra.mxu0 0.0
  %491 = vmatprep.subr.mxu0 0.0
  %492 = vmatpush2.msra.mxu0 0.0
  %493 = vmatprep.subr.mxu0 0.0
  %494 = vmatpush2.msra.mxu0 0.0
  %495 = vmatprep.subr.mxu0 0.0
  %496 = vmatpush2.msra.mxu0 0.0
  %497 = vmatprep.subr.mxu0 0.0
  %498 = vmatpush2.msra.mxu0 0.0
  %499 = vmatprep.subr.mxu0 0.0
  %500 = vmatpush2.msra.mxu0 0.0
  %501 = vmatprep.subr.mxu0 0.0
  %502 = vmatpush2.msra.mxu0 0.0
  %503 = vmatprep.subr.mxu0 0.0
  %504 = vmatpush2.msra.mxu0 0.0
  %505 = vmatprep.subr.mxu0 0.0
  %506 = vmatpush2.msra.mxu0 0.0
  %507 = vmatprep.mubr.f32.mxu0 0.0
  %508 = vmatmul.mubr.f32.gmra.mxu0 %v420
  %v509 = vpop.f32.mrf.mxu0
  %v510 = vadd.f32 %v377, %v509
  %v511 = vpop.f32.mrf.mxu0
  %512 = vmatprep.mubr.f32.mxu0 0.0
  %513 = vmatmul.mubr.f32.gmra.mxu0 %v423
  %v514 = vpop.f32.mrf.mxu0
  %v515 = vadd.f32 %v382, %v514
  %v516 = vpop.f32.mrf.mxu0
  %517 = vmatprep.mubr.f32.mxu0 0.0
  %518 = vmatmul.mubr.f32.gmra.mxu0 %v426
  %v519 = vpop.f32.mrf.mxu0
  %v520 = vadd.f32 %v387, %v519
  %v521 = vpop.f32.mrf.mxu0
  %522 = vmatprep.mubr.f32.mxu0 0.0
  %523 = vmatmul.mubr.f32.gmra.mxu0 %v429
  %v524 = vpop.f32.mrf.mxu0
  %v525 = vadd.f32 %v392, %v524
  %v526 = vpop.f32.mrf.mxu0
  %527 = vmatprep.mubr.f32.mxu0 0.0
  %528 = vmatmul.mubr.f32.gmra.mxu0 %v432
  %v529 = vpop.f32.mrf.mxu0
  %v530 = vadd.f32 %v397, %v529
  %v531 = vpop.f32.mrf.mxu0
  %532 = vmatprep.mubr.f32.mxu0 0.0
  %533 = vmatmul.mubr.f32.gmra.mxu0 %v435
  %v534 = vpop.f32.mrf.mxu0
  %v535 = vadd.f32 %v402, %v534
  %v536 = vpop.f32.mrf.mxu0
  %537 = vmatprep.mubr.f32.mxu0 0.0
  %538 = vmatmul.mubr.f32.gmra.mxu0 %v438
  %v539 = vpop.f32.mrf.mxu0
  %v540 = vadd.f32 %v407, %v539
  %v541 = vpop.f32.mrf.mxu0
  %542 = vmatprep.mubr.f32.mxu0 0.0
  %543 = vmatmul.mubr.f32.gmra.mxu0 %v441
  %v544 = vpop.f32.mrf.mxu0
  %v545 = vadd.f32 %v412, %v544
  %v546 = vpop.f32.mrf.mxu0
  %547 = vdwg.mxu0
  %v548 = vlaneseq
  %v549 = vshrl.u32 %v548, 7
  %v550 = vsub.s32 0, %v549
  %v551 = vrot.slane %v30, %v550
  %v552 = vadd.f32 %v510, %v551
  %v553 = vadd.f32 %v515, %v551
  %v554 = vadd.f32 %v520, %v551
  %v555 = vadd.f32 %v525, %v551
  %v556 = vadd.f32 %v530, %v551
  %v557 = vadd.f32 %v535, %v551
  %v558 = vadd.f32 %v540, %v551
  %v559 = vadd.f32 %v545, %v551
  %v560 = vld [vmem:[%s1 + $0x28] sm:$0xff]
  %v561 = vld [vmem:[%s1 + $0x30] sm:$0xff]
  %v562 = vld [vmem:[%s1 + $0x38] sm:$0xff]
  %v563 = vld [vmem:[%s1 + $0x40] sm:$0xff]
  %v564 = vld [vmem:[%s1 + $0x48] sm:$0xff]
  %v565 = vld [vmem:[%s1 + $0x50] sm:$0xff]
  %v566 = vld [vmem:[%s1 + $0x58] sm:$0xff]
  %v567 = vld [vmem:[%s1 + $0x60] sm:$0xff]
  %v568 = vld [vmem:[%s1 + $0x68] sm:$0xff]
  %v569 = vld [vmem:[%s1 + $0x70] sm:$0xff]
  %v570 = vld [vmem:[%s1 + $0x78] sm:$0xff]
  %v571 = vld [vmem:[%s1 + $0x80] sm:$0xff]
  %v573 = vsel %vm171, 0.0, 0
  %575 = vmatprep.subr.mxu0 0.0
  %576 = vmatpush1.msra.mxu0 0.0
  %577 = vmatprep.subr.mxu0 0.0
  %578 = vmatpush1.msra.mxu0 0.0
  %579 = vmatprep.subr.mxu0 0.0
  %580 = vmatpush1.msra.mxu0 0.0
  %581 = vmatprep.subr.mxu0 0.0
  %582 = vmatpush1.msra.mxu0 0.0
  %583 = vmatprep.subr.mxu0 0.0
  %584 = vmatpush1.msra.mxu0 0.0
  %585 = vmatprep.subr.mxu0 0.0
  %586 = vmatpush1.msra.mxu0 0.0
  %587 = vmatprep.subr.mxu0 0.0
  %588 = vmatpush1.msra.mxu0 0.0
  %589 = vmatprep.subr.mxu0 0.0
  %590 = vmatpush1.msra.mxu0 0.0
  %591 = vmatprep.subr.mxu0 0.0
  %592 = vmatpush1.msra.mxu0 0.0
  %593 = vmatprep.subr.mxu0 0.0
  %594 = vmatpush1.msra.mxu0 0.0
  %595 = vmatprep.subr.mxu0 0.0
  %596 = vmatpush1.msra.mxu0 0.0
  %597 = vmatprep.subr.mxu0 0.0
  %598 = vmatpush1.msra.mxu0 0.0
  %599 = vmatprep.subr.mxu0 0.0
  %600 = vmatpush1.msra.mxu0 %v563
  %601 = vmatprep.subr.mxu0 0.0
  %602 = vmatpush1.msra.mxu0 %v562
  %603 = vmatprep.subr.mxu0 0.0
  %604 = vmatpush1.msra.mxu0 %v561
  %605 = vmatprep.subr.mxu0 0.0
  %606 = vmatpush1.msra.mxu0 %v560
  %607 = vmatprep.subr.mxu0 0.0
  %608 = vmatpush2.msra.mxu0 0.0
  %609 = vmatprep.subr.mxu0 0.0
  %610 = vmatpush2.msra.mxu0 0.0
  %611 = vmatprep.subr.mxu0 0.0
  %612 = vmatpush2.msra.mxu0 0.0
  %613 = vmatprep.subr.mxu0 0.0
  %614 = vmatpush2.msra.mxu0 0.0
  %615 = vmatprep.subr.mxu0 0.0
  %616 = vmatpush2.msra.mxu0 0.0
  %617 = vmatprep.subr.mxu0 0.0
  %618 = vmatpush2.msra.mxu0 0.0
  %619 = vmatprep.subr.mxu0 0.0
  %620 = vmatpush2.msra.mxu0 0.0
  %621 = vmatprep.subr.mxu0 0.0
  %622 = vmatpush2.msra.mxu0 0.0
  %623 = vmatprep.subr.mxu0 0.0
  %624 = vmatpush2.msra.mxu0 0.0
  %625 = vmatprep.subr.mxu0 0.0
  %626 = vmatpush2.msra.mxu0 0.0
  %627 = vmatprep.subr.mxu0 0.0
  %628 = vmatpush2.msra.mxu0 0.0
  %629 = vmatprep.subr.mxu0 0.0
  %630 = vmatpush2.msra.mxu0 0.0
  %631 = vmatprep.subr.mxu0 0.0
  %632 = vmatpush2.msra.mxu0 0.0
  %633 = vmatprep.subr.mxu0 0.0
  %634 = vmatpush2.msra.mxu0 0.0
  %635 = vmatprep.subr.mxu0 0.0
  %636 = vmatpush2.msra.mxu0 0.0
  %637 = vmatprep.subr.mxu0 0.0
  %638 = vmatpush2.msra.mxu0 0.0
  %639 = vmatprep.mubr.f32.mxu0 0.0
  %640 = vmatmul.mubr.f32.gmra.mxu0 %v573
  %v641 = vpop.f32.mrf.mxu0
  %v642 = vadd.f32 0.0, %v641
  %v643 = vpop.f32.mrf.mxu0
  %644 = vdwg.mxu0
  %v645 = vadd.f32 %v552, %v642
  %v646 = vxor.u32 %v645, 2147483648
  %v647 = vmul.f32 %v646, 1.442695
  %v648 = vpow.pop %v647
  %v649 = vadd.f32 %v648, 1.0
  %v650 = vrcp.pop %v649
  %v651 = vmul.f32 1.0, %v650
  %v652 = vtanh.pop %v645
  %v653 = vmul.f32 %v651, 0.0
  %655 = vrot.lane.b32.xlu0 %v652, 64
  %v656 = vpop.permute.xlu0 %655
  %v658 = vmul.f32 %v651, %v656
  %660 = vrot.lane.b32.xlu0 %v658, 32
  %v661 = vpop.permute.xlu0 %660
  %v663 = vadd.f32 %v653, %v661
  %v664 = vtanh.pop %v663
  %666 = vrot.lane.b32.xlu0 %v664, 64
  %v667 = vpop.permute.xlu0 %666
  %v669 = vmul.f32 %v651, %v667
  %670 = vmatprep.subr.mxu0 0.0
  %671 = vmatpush1.msra.mxu0 0.0
  %672 = vmatprep.subr.mxu0 0.0
  %673 = vmatpush1.msra.mxu0 0.0
  %674 = vmatprep.subr.mxu0 0.0
  %675 = vmatpush1.msra.mxu0 0.0
  %676 = vmatprep.subr.mxu0 0.0
  %677 = vmatpush1.msra.mxu0 0.0
  %678 = vmatprep.subr.mxu0 0.0
  %679 = vmatpush1.msra.mxu0 0.0
  %680 = vmatprep.subr.mxu0 0.0
  %681 = vmatpush1.msra.mxu0 0.0
  %682 = vmatprep.subr.mxu0 0.0
  %683 = vmatpush1.msra.mxu0 0.0
  %684 = vmatprep.subr.mxu0 0.0
  %685 = vmatpush1.msra.mxu0 0.0
  %686 = vmatprep.subr.mxu0 0.0
  %687 = vmatpush1.msra.mxu0 0.0
  %688 = vmatprep.subr.mxu0 0.0
  %689 = vmatpush1.msra.mxu0 0.0
  %690 = vmatprep.subr.mxu0 0.0
  %691 = vmatpush1.msra.mxu0 0.0
  %692 = vmatprep.subr.mxu0 0.0
  %693 = vmatpush1.msra.mxu0 0.0
  %694 = vmatprep.subr.mxu0 0.0
  %695 = vmatpush1.msra.mxu0 %v571
  %696 = vmatprep.subr.mxu0 0.0
  %697 = vmatpush1.msra.mxu0 %v570
  %698 = vmatprep.subr.mxu0 0.0
  %699 = vmatpush1.msra.mxu0 %v569
  %700 = vmatprep.subr.mxu0 0.0
  %701 = vmatpush1.msra.mxu0 %v568
  %702 = vmatprep.subr.mxu0 0.0
  %703 = vmatpush2.msra.mxu0 0.0
  %704 = vmatprep.subr.mxu0 0.0
  %705 = vmatpush2.msra.mxu0 0.0
  %706 = vmatprep.subr.mxu0 0.0
  %707 = vmatpush2.msra.mxu0 0.0
  %708 = vmatprep.subr.mxu0 0.0
  %709 = vmatpush2.msra.mxu0 0.0
  %710 = vmatprep.subr.mxu0 0.0
  %711 = vmatpush2.msra.mxu0 0.0
  %712 = vmatprep.subr.mxu0 0.0
  %713 = vmatpush2.msra.mxu0 0.0
  %714 = vmatprep.subr.mxu0 0.0
  %715 = vmatpush2.msra.mxu0 0.0
  %716 = vmatprep.subr.mxu0 0.0
  %717 = vmatpush2.msra.mxu0 0.0
  %718 = vmatprep.subr.mxu0 0.0
  %719 = vmatpush2.msra.mxu0 0.0
  %720 = vmatprep.subr.mxu0 0.0
  %721 = vmatpush2.msra.mxu0 0.0
  %722 = vmatprep.subr.mxu0 0.0
  %723 = vmatpush2.msra.mxu0 0.0
  %724 = vmatprep.subr.mxu0 0.0
  %725 = vmatpush2.msra.mxu0 0.0
  %726 = vmatprep.subr.mxu0 0.0
  %727 = vmatpush2.msra.mxu0 0.0
  %728 = vmatprep.subr.mxu0 0.0
  %729 = vmatpush2.msra.mxu0 0.0
  %730 = vmatprep.subr.mxu0 0.0
  %731 = vmatpush2.msra.mxu0 0.0
  %732 = vmatprep.subr.mxu0 0.0
  %733 = vmatpush2.msra.mxu0 0.0
  %734 = vmatprep.mubr.f32.mxu0 0.0
  %735 = vmatmul.mubr.f32.gmra.mxu0 %v573
  %v736 = vpop.f32.mrf.mxu0
  %v737 = vadd.f32 0.0, %v736
  %v738 = vpop.f32.mrf.mxu0
  %739 = vdwg.mxu0
  %741 = vrot.lane.b32.xlu0 %v669, 32
  %v742 = vpop.permute.xlu0 %741
  %v743 = vsel %vm171, %v742, 0
  %745 = vmatprep.subr.mxu0 0.0
  %746 = vmatpush1.msra.mxu0 0.0
  %747 = vmatprep.subr.mxu0 0.0
  %748 = vmatpush1.msra.mxu0 0.0
  %749 = vmatprep.subr.mxu0 0.0
  %750 = vmatpush1.msra.mxu0 0.0
  %751 = vmatprep.subr.mxu0 0.0
  %752 = vmatpush1.msra.mxu0 0.0
  %753 = vmatprep.subr.mxu0 0.0
  %754 = vmatpush1.msra.mxu0 0.0
  %755 = vmatprep.subr.mxu0 0.0
  %756 = vmatpush1.msra.mxu0 0.0
  %757 = vmatprep.subr.mxu0 0.0
  %758 = vmatpush1.msra.mxu0 0.0
  %759 = vmatprep.subr.mxu0 0.0
  %760 = vmatpush1.msra.mxu0 0.0
  %761 = vmatprep.subr.mxu0 0.0
  %762 = vmatpush1.msra.mxu0 0.0
  %763 = vmatprep.subr.mxu0 0.0
  %764 = vmatpush1.msra.mxu0 0.0
  %765 = vmatprep.subr.mxu0 0.0
  %766 = vmatpush1.msra.mxu0 0.0
  %767 = vmatprep.subr.mxu0 0.0
  %768 = vmatpush1.msra.mxu0 0.0
  %769 = vmatprep.subr.mxu0 0.0
  %770 = vmatpush1.msra.mxu0 %v567
  %771 = vmatprep.subr.mxu0 0.0
  %772 = vmatpush1.msra.mxu0 %v566
  %773 = vmatprep.subr.mxu0 0.0
  %774 = vmatpush1.msra.mxu0 %v565
  %775 = vmatprep.subr.mxu0 0.0
  %776 = vmatpush1.msra.mxu0 %v564
  %777 = vmatprep.subr.mxu0 0.0
  %778 = vmatpush2.msra.mxu0 0.0
  %779 = vmatprep.subr.mxu0 0.0
  %780 = vmatpush2.msra.mxu0 0.0
  %781 = vmatprep.subr.mxu0 0.0
  %782 = vmatpush2.msra.mxu0 0.0
  %783 = vmatprep.subr.mxu0 0.0
  %784 = vmatpush2.msra.mxu0 0.0
  %785 = vmatprep.subr.mxu0 0.0
  %786 = vmatpush2.msra.mxu0 0.0
  %787 = vmatprep.subr.mxu0 0.0
  %788 = vmatpush2.msra.mxu0 0.0
  %789 = vmatprep.subr.mxu0 0.0
  %790 = vmatpush2.msra.mxu0 0.0
  %791 = vmatprep.subr.mxu0 0.0
  %792 = vmatpush2.msra.mxu0 0.0
  %793 = vmatprep.subr.mxu0 0.0
  %794 = vmatpush2.msra.mxu0 0.0
  %795 = vmatprep.subr.mxu0 0.0
  %796 = vmatpush2.msra.mxu0 0.0
  %797 = vmatprep.subr.mxu0 0.0
  %798 = vmatpush2.msra.mxu0 0.0
  %799 = vmatprep.subr.mxu0 0.0
  %800 = vmatpush2.msra.mxu0 0.0
  %801 = vmatprep.subr.mxu0 0.0
  %802 = vmatpush2.msra.mxu0 0.0
  %803 = vmatprep.subr.mxu0 0.0
  %804 = vmatpush2.msra.mxu0 0.0
  %805 = vmatprep.subr.mxu0 0.0
  %806 = vmatpush2.msra.mxu0 0.0
  %807 = vmatprep.subr.mxu0 0.0
  %808 = vmatpush2.msra.mxu0 0.0
  %809 = vmatprep.mubr.f32.mxu0 0.0
  %810 = vmatmul.mubr.f32.gmra.mxu0 %v743
  %v811 = vpop.f32.mrf.mxu0
  %v812 = vadd.f32 %v737, %v811
  %v813 = vpop.f32.mrf.mxu0
  %814 = vdwg.mxu0
  %v815 = vlaneseq
  %v816 = vshrl.u32 %v815, 7
  %v817 = vsub.s32 0, %v816
  %v818 = vrot.slane %v31, %v817
  %v819 = vadd.f32 %v812, %v818
  %v820 = vxor.u32 %v819, 2147483648
  %v821 = vmul.f32 %v820, 1.442695
  %v822 = vpow.pop %v821
  %v823 = vadd.f32 %v822, 1.0
  %v824 = vrcp.pop %v823
  %v825 = vmul.f32 1.0, %v824
  %v826 = vtanh.pop %v819
  %v827 = vmul.f32 %v825, 0.0
  %829 = vrot.lane.b32.xlu0 %v826, 64
  %v830 = vpop.permute.xlu0 %829
  %v832 = vmul.f32 %v825, %v830
  %834 = vrot.lane.b32.xlu0 %v832, 32
  %v835 = vpop.permute.xlu0 %834
  %v837 = vadd.f32 %v827, %v835
  %v838 = vtanh.pop %v837
  %840 = vrot.lane.b32.xlu0 %v838, 64
  %v841 = vpop.permute.xlu0 %840
  %v843 = vmul.f32 %v825, %v841
  %844 = vmatprep.subr.mxu0 0.0
  %845 = vmatpush1.msra.mxu0 0.0
  %846 = vmatprep.subr.mxu0 0.0
  %847 = vmatpush1.msra.mxu0 0.0
  %848 = vmatprep.subr.mxu0 0.0
  %849 = vmatpush1.msra.mxu0 0.0
  %850 = vmatprep.subr.mxu0 0.0
  %851 = vmatpush1.msra.mxu0 0.0
  %852 = vmatprep.subr.mxu0 0.0
  %853 = vmatpush1.msra.mxu0 0.0
  %854 = vmatprep.subr.mxu0 0.0
  %855 = vmatpush1.msra.mxu0 0.0
  %856 = vmatprep.subr.mxu0 0.0
  %857 = vmatpush1.msra.mxu0 0.0
  %858 = vmatprep.subr.mxu0 0.0
  %859 = vmatpush1.msra.mxu0 0.0
  %860 = vmatprep.subr.mxu0 0.0
  %861 = vmatpush1.msra.mxu0 0.0
  %862 = vmatprep.subr.mxu0 0.0
  %863 = vmatpush1.msra.mxu0 0.0
  %864 = vmatprep.subr.mxu0 0.0
  %865 = vmatpush1.msra.mxu0 0.0
  %866 = vmatprep.subr.mxu0 0.0
  %867 = vmatpush1.msra.mxu0 0.0
  %868 = vmatprep.subr.mxu0 0.0
  %869 = vmatpush1.msra.mxu0 %v563
  %870 = vmatprep.subr.mxu0 0.0
  %871 = vmatpush1.msra.mxu0 %v562
  %872 = vmatprep.subr.mxu0 0.0
  %873 = vmatpush1.msra.mxu0 %v561
  %874 = vmatprep.subr.mxu0 0.0
  %875 = vmatpush1.msra.mxu0 %v560
  %876 = vmatprep.subr.mxu0 0.0
  %877 = vmatpush2.msra.mxu0 0.0
  %878 = vmatprep.subr.mxu0 0.0
  %879 = vmatpush2.msra.mxu0 0.0
  %880 = vmatprep.subr.mxu0 0.0
  %881 = vmatpush2.msra.mxu0 0.0
  %882 = vmatprep.subr.mxu0 0.0
  %883 = vmatpush2.msra.mxu0 0.0
  %884 = vmatprep.subr.mxu0 0.0
  %885 = vmatpush2.msra.mxu0 0.0
  %886 = vmatprep.subr.mxu0 0.0
  %887 = vmatpush2.msra.mxu0 0.0
  %888 = vmatprep.subr.mxu0 0.0
  %889 = vmatpush2.msra.mxu0 0.0
  %890 = vmatprep.subr.mxu0 0.0
  %891 = vmatpush2.msra.mxu0 0.0
  %892 = vmatprep.subr.mxu0 0.0
  %893 = vmatpush2.msra.mxu0 0.0
  %894 = vmatprep.subr.mxu0 0.0
  %895 = vmatpush2.msra.mxu0 0.0
  %896 = vmatprep.subr.mxu0 0.0
  %897 = vmatpush2.msra.mxu0 0.0
  %898 = vmatprep.subr.mxu0 0.0
  %899 = vmatpush2.msra.mxu0 0.0
  %900 = vmatprep.subr.mxu0 0.0
  %901 = vmatpush2.msra.mxu0 0.0
  %902 = vmatprep.subr.mxu0 0.0
  %903 = vmatpush2.msra.mxu0 0.0
  %904 = vmatprep.subr.mxu0 0.0
  %905 = vmatpush2.msra.mxu0 0.0
  %906 = vmatprep.subr.mxu0 0.0
  %907 = vmatpush2.msra.mxu0 0.0
  %908 = vmatprep.mubr.f32.mxu0 0.0
  %909 = vmatmul.mubr.f32.gmra.mxu0 %v743
  %v910 = vpop.f32.mrf.mxu0
  %v911 = vadd.f32 0.0, %v910
  %v912 = vpop.f32.mrf.mxu0
  %913 = vdwg.mxu0
  %v914 = vadd.f32 %v553, %v911
  %v915 = vxor.u32 %v914, 2147483648
  %v916 = vmul.f32 %v915, 1.442695
  %v917 = vpow.pop %v916
  %v918 = vadd.f32 %v917, 1.0
  %v919 = vrcp.pop %v918
  %v920 = vmul.f32 1.0, %v919
  %v921 = vtanh.pop %v914
  %v922 = vmul.f32 %v920, %v663
  %924 = vrot.lane.b32.xlu0 %v921, 64
  %v925 = vpop.permute.xlu0 %924
  %v927 = vmul.f32 %v920, %v925
  %929 = vrot.lane.b32.xlu0 %v927, 32
  %v930 = vpop.permute.xlu0 %929
  %v932 = vadd.f32 %v922, %v930
  %v933 = vtanh.pop %v932
  %935 = vrot.lane.b32.xlu0 %v933, 64
  %v936 = vpop.permute.xlu0 %935
  %v938 = vmul.f32 %v920, %v936
  %940 = vrot.lane.b32.xlu0 %v843, 32
  %v941 = vpop.permute.xlu0 %940
  %v942 = vsel %vm171, %v941, 0
  %944 = vmatprep.subr.mxu0 0.0
  %945 = vmatpush1.msra.mxu0 0.0
  %946 = vmatprep.subr.mxu0 0.0
  %947 = vmatpush1.msra.mxu0 0.0
  %948 = vmatprep.subr.mxu0 0.0
  %949 = vmatpush1.msra.mxu0 0.0
  %950 = vmatprep.subr.mxu0 0.0
  %951 = vmatpush1.msra.mxu0 0.0
  %952 = vmatprep.subr.mxu0 0.0
  %953 = vmatpush1.msra.mxu0 0.0
  %954 = vmatprep.subr.mxu0 0.0
  %955 = vmatpush1.msra.mxu0 0.0
  %956 = vmatprep.subr.mxu0 0.0
  %957 = vmatpush1.msra.mxu0 0.0
  %958 = vmatprep.subr.mxu0 0.0
  %959 = vmatpush1.msra.mxu0 0.0
  %960 = vmatprep.subr.mxu0 0.0
  %961 = vmatpush1.msra.mxu0 0.0
  %962 = vmatprep.subr.mxu0 0.0
  %963 = vmatpush1.msra.mxu0 0.0
  %964 = vmatprep.subr.mxu0 0.0
  %965 = vmatpush1.msra.mxu0 0.0
  %966 = vmatprep.subr.mxu0 0.0
  %967 = vmatpush1.msra.mxu0 0.0
  %968 = vmatprep.subr.mxu0 0.0
  %969 = vmatpush1.msra.mxu0 %v571
  %970 = vmatprep.subr.mxu0 0.0
  %971 = vmatpush1.msra.mxu0 %v570
  %972 = vmatprep.subr.mxu0 0.0
  %973 = vmatpush1.msra.mxu0 %v569
  %974 = vmatprep.subr.mxu0 0.0
  %975 = vmatpush1.msra.mxu0 %v568
  %976 = vmatprep.subr.mxu0 0.0
  %977 = vmatpush2.msra.mxu0 0.0
  %978 = vmatprep.subr.mxu0 0.0
  %979 = vmatpush2.msra.mxu0 0.0
  %980 = vmatprep.subr.mxu0 0.0
  %981 = vmatpush2.msra.mxu0 0.0
  %982 = vmatprep.subr.mxu0 0.0
  %983 = vmatpush2.msra.mxu0 0.0
  %984 = vmatprep.subr.mxu0 0.0
  %985 = vmatpush2.msra.mxu0 0.0
  %986 = vmatprep.subr.mxu0 0.0
  %987 = vmatpush2.msra.mxu0 0.0
  %988 = vmatprep.subr.mxu0 0.0
  %989 = vmatpush2.msra.mxu0 0.0
  %990 = vmatprep.subr.mxu0 0.0
  %991 = vmatpush2.msra.mxu0 0.0
  %992 = vmatprep.subr.mxu0 0.0
  %993 = vmatpush2.msra.mxu0 0.0
  %994 = vmatprep.subr.mxu0 0.0
  %995 = vmatpush2.msra.mxu0 0.0
  %996 = vmatprep.subr.mxu0 0.0
  %997 = vmatpush2.msra.mxu0 0.0
  %998 = vmatprep.subr.mxu0 0.0
  %999 = vmatpush2.msra.mxu0 0.0
  %1000 = vmatprep.subr.mxu0 0.0
  %1001 = vmatpush2.msra.mxu0 0.0
  %1002 = vmatprep.subr.mxu0 0.0
  %1003 = vmatpush2.msra.mxu0 0.0
  %1004 = vmatprep.subr.mxu0 0.0
  %1005 = vmatpush2.msra.mxu0 0.0
  %1006 = vmatprep.subr.mxu0 0.0
  %1007 = vmatpush2.msra.mxu0 0.0
  %1008 = vmatprep.mubr.f32.mxu0 0.0
  %1009 = vmatmul.mubr.f32.gmra.mxu0 %v942
  %v1010 = vpop.f32.mrf.mxu0
  %v1011 = vadd.f32 0.0, %v1010
  %v1012 = vpop.f32.mrf.mxu0
  %1013 = vdwg.mxu0
  %1015 = vrot.lane.b32.xlu0 %v938, 32
  %v1016 = vpop.permute.xlu0 %1015
  %v1017 = vsel %vm171, %v1016, 0
  %1019 = vmatprep.subr.mxu0 0.0
  %1020 = vmatpush1.msra.mxu0 0.0
  %1021 = vmatprep.subr.mxu0 0.0
  %1022 = vmatpush1.msra.mxu0 0.0
  %1023 = vmatprep.subr.mxu0 0.0
  %1024 = vmatpush1.msra.mxu0 0.0
  %1025 = vmatprep.subr.mxu0 0.0
  %1026 = vmatpush1.msra.mxu0 0.0
  %1027 = vmatprep.subr.mxu0 0.0
  %1028 = vmatpush1.msra.mxu0 0.0
  %1029 = vmatprep.subr.mxu0 0.0
  %1030 = vmatpush1.msra.mxu0 0.0
  %1031 = vmatprep.subr.mxu0 0.0
  %1032 = vmatpush1.msra.mxu0 0.0
  %1033 = vmatprep.subr.mxu0 0.0
  %1034 = vmatpush1.msra.mxu0 0.0
  %1035 = vmatprep.subr.mxu0 0.0
  %1036 = vmatpush1.msra.mxu0 0.0
  %1037 = vmatprep.subr.mxu0 0.0
  %1038 = vmatpush1.msra.mxu0 0.0
  %1039 = vmatprep.subr.mxu0 0.0
  %1040 = vmatpush1.msra.mxu0 0.0
  %1041 = vmatprep.subr.mxu0 0.0
  %1042 = vmatpush1.msra.mxu0 0.0
  %1043 = vmatprep.subr.mxu0 0.0
  %1044 = vmatpush1.msra.mxu0 %v567
  %1045 = vmatprep.subr.mxu0 0.0
  %1046 = vmatpush1.msra.mxu0 %v566
  %1047 = vmatprep.subr.mxu0 0.0
  %1048 = vmatpush1.msra.mxu0 %v565
  %1049 = vmatprep.subr.mxu0 0.0
  %1050 = vmatpush1.msra.mxu0 %v564
  %1051 = vmatprep.subr.mxu0 0.0
  %1052 = vmatpush2.msra.mxu0 0.0
  %1053 = vmatprep.subr.mxu0 0.0
  %1054 = vmatpush2.msra.mxu0 0.0
  %1055 = vmatprep.subr.mxu0 0.0
  %1056 = vmatpush2.msra.mxu0 0.0
  %1057 = vmatprep.subr.mxu0 0.0
  %1058 = vmatpush2.msra.mxu0 0.0
  %1059 = vmatprep.subr.mxu0 0.0
  %1060 = vmatpush2.msra.mxu0 0.0
  %1061 = vmatprep.subr.mxu0 0.0
  %1062 = vmatpush2.msra.mxu0 0.0
  %1063 = vmatprep.subr.mxu0 0.0
  %1064 = vmatpush2.msra.mxu0 0.0
  %1065 = vmatprep.subr.mxu0 0.0
  %1066 = vmatpush2.msra.mxu0 0.0
  %1067 = vmatprep.subr.mxu0 0.0
  %1068 = vmatpush2.msra.mxu0 0.0
  %1069 = vmatprep.subr.mxu0 0.0
  %1070 = vmatpush2.msra.mxu0 0.0
  %1071 = vmatprep.subr.mxu0 0.0
  %1072 = vmatpush2.msra.mxu0 0.0
  %1073 = vmatprep.subr.mxu0 0.0
  %1074 = vmatpush2.msra.mxu0 0.0
  %1075 = vmatprep.subr.mxu0 0.0
  %1076 = vmatpush2.msra.mxu0 0.0
  %1077 = vmatprep.subr.mxu0 0.0
  %1078 = vmatpush2.msra.mxu0 0.0
  %1079 = vmatprep.subr.mxu0 0.0
  %1080 = vmatpush2.msra.mxu0 0.0
  %1081 = vmatprep.subr.mxu0 0.0
  %1082 = vmatpush2.msra.mxu0 0.0
  %1083 = vmatprep.mubr.f32.mxu0 0.0
  %1084 = vmatmul.mubr.f32.gmra.mxu0 %v1017
  %v1085 = vpop.f32.mrf.mxu0
  %v1086 = vadd.f32 %v1011, %v1085
  %v1087 = vpop.f32.mrf.mxu0
  %1088 = vdwg.mxu0
  %v1089 = vadd.f32 %v1086, %v818
  %v1090 = vxor.u32 %v1089, 2147483648
  %v1091 = vmul.f32 %v1090, 1.442695
  %v1092 = vpow.pop %v1091
  %v1093 = vadd.f32 %v1092, 1.0
  %v1094 = vrcp.pop %v1093
  %v1095 = vmul.f32 1.0, %v1094
  %v1096 = vtanh.pop %v1089
  %v1097 = vmul.f32 %v1095, %v837
  %1099 = vrot.lane.b32.xlu0 %v1096, 64
  %v1100 = vpop.permute.xlu0 %1099
  %v1102 = vmul.f32 %v1095, %v1100
  %1104 = vrot.lane.b32.xlu0 %v1102, 32
  %v1105 = vpop.permute.xlu0 %1104
  %v1107 = vadd.f32 %v1097, %v1105
  %v1108 = vtanh.pop %v1107
  %1110 = vrot.lane.b32.xlu0 %v1108, 64
  %v1111 = vpop.permute.xlu0 %1110
  %v1113 = vmul.f32 %v1095, %v1111
  %1114 = vmatprep.subr.mxu0 0.0
  %1115 = vmatpush1.msra.mxu0 0.0
  %1116 = vmatprep.subr.mxu0 0.0
  %1117 = vmatpush1.msra.mxu0 0.0
  %1118 = vmatprep.subr.mxu0 0.0
  %1119 = vmatpush1.msra.mxu0 0.0
  %1120 = vmatprep.subr.mxu0 0.0
  %1121 = vmatpush1.msra.mxu0 0.0
  %1122 = vmatprep.subr.mxu0 0.0
  %1123 = vmatpush1.msra.mxu0 0.0
  %1124 = vmatprep.subr.mxu0 0.0
  %1125 = vmatpush1.msra.mxu0 0.0
  %1126 = vmatprep.subr.mxu0 0.0
  %1127 = vmatpush1.msra.mxu0 0.0
  %1128 = vmatprep.subr.mxu0 0.0
  %1129 = vmatpush1.msra.mxu0 0.0
  %1130 = vmatprep.subr.mxu0 0.0
  %1131 = vmatpush1.msra.mxu0 0.0
  %1132 = vmatprep.subr.mxu0 0.0
  %1133 = vmatpush1.msra.mxu0 0.0
  %1134 = vmatprep.subr.mxu0 0.0
  %1135 = vmatpush1.msra.mxu0 0.0
  %1136 = vmatprep.subr.mxu0 0.0
  %1137 = vmatpush1.msra.mxu0 0.0
  %1138 = vmatprep.subr.mxu0 0.0
  %1139 = vmatpush1.msra.mxu0 %v563
  %1140 = vmatprep.subr.mxu0 0.0
  %1141 = vmatpush1.msra.mxu0 %v562
  %1142 = vmatprep.subr.mxu0 0.0
  %1143 = vmatpush1.msra.mxu0 %v561
  %1144 = vmatprep.subr.mxu0 0.0
  %1145 = vmatpush1.msra.mxu0 %v560
  %1146 = vmatprep.subr.mxu0 0.0
  %1147 = vmatpush2.msra.mxu0 0.0
  %1148 = vmatprep.subr.mxu0 0.0
  %1149 = vmatpush2.msra.mxu0 0.0
  %1150 = vmatprep.subr.mxu0 0.0
  %1151 = vmatpush2.msra.mxu0 0.0
  %1152 = vmatprep.subr.mxu0 0.0
  %1153 = vmatpush2.msra.mxu0 0.0
  %1154 = vmatprep.subr.mxu0 0.0
  %1155 = vmatpush2.msra.mxu0 0.0
  %1156 = vmatprep.subr.mxu0 0.0
  %1157 = vmatpush2.msra.mxu0 0.0
  %1158 = vmatprep.subr.mxu0 0.0
  %1159 = vmatpush2.msra.mxu0 0.0
  %1160 = vmatprep.subr.mxu0 0.0
  %1161 = vmatpush2.msra.mxu0 0.0
  %1162 = vmatprep.subr.mxu0 0.0
  %1163 = vmatpush2.msra.mxu0 0.0
  %1164 = vmatprep.subr.mxu0 0.0
  %1165 = vmatpush2.msra.mxu0 0.0
  %1166 = vmatprep.subr.mxu0 0.0
  %1167 = vmatpush2.msra.mxu0 0.0
  %1168 = vmatprep.subr.mxu0 0.0
  %1169 = vmatpush2.msra.mxu0 0.0
  %1170 = vmatprep.subr.mxu0 0.0
  %1171 = vmatpush2.msra.mxu0 0.0
  %1172 = vmatprep.subr.mxu0 0.0
  %1173 = vmatpush2.msra.mxu0 0.0
  %1174 = vmatprep.subr.mxu0 0.0
  %1175 = vmatpush2.msra.mxu0 0.0
  %1176 = vmatprep.subr.mxu0 0.0
  %1177 = vmatpush2.msra.mxu0 0.0
  %1178 = vmatprep.mubr.f32.mxu0 0.0
  %1179 = vmatmul.mubr.f32.gmra.mxu0 %v1017
  %v1180 = vpop.f32.mrf.mxu0
  %v1181 = vadd.f32 0.0, %v1180
  %v1182 = vpop.f32.mrf.mxu0
  %1183 = vdwg.mxu0
  %v1184 = vadd.f32 %v554, %v1181
  %v1185 = vxor.u32 %v1184, 2147483648
  %v1186 = vmul.f32 %v1185, 1.442695
  %v1187 = vpow.pop %v1186
  %v1188 = vadd.f32 %v1187, 1.0
  %v1189 = vrcp.pop %v1188
  %v1190 = vmul.f32 1.0, %v1189
  %v1191 = vtanh.pop %v1184
  %v1192 = vmul.f32 %v1190, %v932
  %1194 = vrot.lane.b32.xlu0 %v1191, 64
  %v1195 = vpop.permute.xlu0 %1194
  %v1197 = vmul.f32 %v1190, %v1195
  %1199 = vrot.lane.b32.xlu0 %v1197, 32
  %v1200 = vpop.permute.xlu0 %1199
  %v1202 = vadd.f32 %v1192, %v1200
  %v1203 = vtanh.pop %v1202
  %1205 = vrot.lane.b32.xlu0 %v1203, 64
  %v1206 = vpop.permute.xlu0 %1205
  %v1208 = vmul.f32 %v1190, %v1206
  %1210 = vrot.lane.b32.xlu0 %v1113, 32
  %v1211 = vpop.permute.xlu0 %1210
  %v1212 = vsel %vm171, %v1211, 0
  %1214 = vmatprep.subr.mxu0 0.0
  %1215 = vmatpush1.msra.mxu0 0.0
  %1216 = vmatprep.subr.mxu0 0.0
  %1217 = vmatpush1.msra.mxu0 0.0
  %1218 = vmatprep.subr.mxu0 0.0
  %1219 = vmatpush1.msra.mxu0 0.0
  %1220 = vmatprep.subr.mxu0 0.0
  %1221 = vmatpush1.msra.mxu0 0.0
  %1222 = vmatprep.subr.mxu0 0.0
  %1223 = vmatpush1.msra.mxu0 0.0
  %1224 = vmatprep.subr.mxu0 0.0
  %1225 = vmatpush1.msra.mxu0 0.0
  %1226 = vmatprep.subr.mxu0 0.0
  %1227 = vmatpush1.msra.mxu0 0.0
  %1228 = vmatprep.subr.mxu0 0.0
  %1229 = vmatpush1.msra.mxu0 0.0
  %1230 = vmatprep.subr.mxu0 0.0
  %1231 = vmatpush1.msra.mxu0 0.0
  %1232 = vmatprep.subr.mxu0 0.0
  %1233 = vmatpush1.msra.mxu0 0.0
  %1234 = vmatprep.subr.mxu0 0.0
  %1235 = vmatpush1.msra.mxu0 0.0
  %1236 = vmatprep.subr.mxu0 0.0
  %1237 = vmatpush1.msra.mxu0 0.0
  %1238 = vmatprep.subr.mxu0 0.0
  %1239 = vmatpush1.msra.mxu0 %v571
  %1240 = vmatprep.subr.mxu0 0.0
  %1241 = vmatpush1.msra.mxu0 %v570
  %1242 = vmatprep.subr.mxu0 0.0
  %1243 = vmatpush1.msra.mxu0 %v569
  %1244 = vmatprep.subr.mxu0 0.0
  %1245 = vmatpush1.msra.mxu0 %v568
  %1246 = vmatprep.subr.mxu0 0.0
  %1247 = vmatpush2.msra.mxu0 0.0
  %1248 = vmatprep.subr.mxu0 0.0
  %1249 = vmatpush2.msra.mxu0 0.0
  %1250 = vmatprep.subr.mxu0 0.0
  %1251 = vmatpush2.msra.mxu0 0.0
  %1252 = vmatprep.subr.mxu0 0.0
  %1253 = vmatpush2.msra.mxu0 0.0
  %1254 = vmatprep.subr.mxu0 0.0
  %1255 = vmatpush2.msra.mxu0 0.0
  %1256 = vmatprep.subr.mxu0 0.0
  %1257 = vmatpush2.msra.mxu0 0.0
  %1258 = vmatprep.subr.mxu0 0.0
  %1259 = vmatpush2.msra.mxu0 0.0
  %1260 = vmatprep.subr.mxu0 0.0
  %1261 = vmatpush2.msra.mxu0 0.0
  %1262 = vmatprep.subr.mxu0 0.0
  %1263 = vmatpush2.msra.mxu0 0.0
  %1264 = vmatprep.subr.mxu0 0.0
  %1265 = vmatpush2.msra.mxu0 0.0
  %1266 = vmatprep.subr.mxu0 0.0
  %1267 = vmatpush2.msra.mxu0 0.0
  %1268 = vmatprep.subr.mxu0 0.0
  %1269 = vmatpush2.msra.mxu0 0.0
  %1270 = vmatprep.subr.mxu0 0.0
  %1271 = vmatpush2.msra.mxu0 0.0
  %1272 = vmatprep.subr.mxu0 0.0
  %1273 = vmatpush2.msra.mxu0 0.0
  %1274 = vmatprep.subr.mxu0 0.0
  %1275 = vmatpush2.msra.mxu0 0.0
  %1276 = vmatprep.subr.mxu0 0.0
  %1277 = vmatpush2.msra.mxu0 0.0
  %1278 = vmatprep.mubr.f32.mxu0 0.0
  %1279 = vmatmul.mubr.f32.gmra.mxu0 %v1212
  %v1280 = vpop.f32.mrf.mxu0
  %v1281 = vadd.f32 0.0, %v1280
  %v1282 = vpop.f32.mrf.mxu0
  %1283 = vdwg.mxu0
  %1285 = vrot.lane.b32.xlu0 %v1208, 32
  %v1286 = vpop.permute.xlu0 %1285
  %v1287 = vsel %vm171, %v1286, 0
  %1289 = vmatprep.subr.mxu0 0.0
  %1290 = vmatpush1.msra.mxu0 0.0
  %1291 = vmatprep.subr.mxu0 0.0
  %1292 = vmatpush1.msra.mxu0 0.0
  %1293 = vmatprep.subr.mxu0 0.0
  %1294 = vmatpush1.msra.mxu0 0.0
  %1295 = vmatprep.subr.mxu0 0.0
  %1296 = vmatpush1.msra.mxu0 0.0
  %1297 = vmatprep.subr.mxu0 0.0
  %1298 = vmatpush1.msra.mxu0 0.0
  %1299 = vmatprep.subr.mxu0 0.0
  %1300 = vmatpush1.msra.mxu0 0.0
  %1301 = vmatprep.subr.mxu0 0.0
  %1302 = vmatpush1.msra.mxu0 0.0
  %1303 = vmatprep.subr.mxu0 0.0
  %1304 = vmatpush1.msra.mxu0 0.0
  %1305 = vmatprep.subr.mxu0 0.0
  %1306 = vmatpush1.msra.mxu0 0.0
  %1307 = vmatprep.subr.mxu0 0.0
  %1308 = vmatpush1.msra.mxu0 0.0
  %1309 = vmatprep.subr.mxu0 0.0
  %1310 = vmatpush1.msra.mxu0 0.0
  %1311 = vmatprep.subr.mxu0 0.0
  %1312 = vmatpush1.msra.mxu0 0.0
  %1313 = vmatprep.subr.mxu0 0.0
  %1314 = vmatpush1.msra.mxu0 %v567
  %1315 = vmatprep.subr.mxu0 0.0
  %1316 = vmatpush1.msra.mxu0 %v566
  %1317 = vmatprep.subr.mxu0 0.0
  %1318 = vmatpush1.msra.mxu0 %v565
  %1319 = vmatprep.subr.mxu0 0.0
  %1320 = vmatpush1.msra.mxu0 %v564
  %1321 = vmatprep.subr.mxu0 0.0
  %1322 = vmatpush2.msra.mxu0 0.0
  %1323 = vmatprep.subr.mxu0 0.0
  %1324 = vmatpush2.msra.mxu0 0.0
  %1325 = vmatprep.subr.mxu0 0.0
  %1326 = vmatpush2.msra.mxu0 0.0
  %1327 = vmatprep.subr.mxu0 0.0
  %1328 = vmatpush2.msra.mxu0 0.0
  %1329 = vmatprep.subr.mxu0 0.0
  %1330 = vmatpush2.msra.mxu0 0.0
  %1331 = vmatprep.subr.mxu0 0.0
  %1332 = vmatpush2.msra.mxu0 0.0
  %1333 = vmatprep.subr.mxu0 0.0
  %1334 = vmatpush2.msra.mxu0 0.0
  %1335 = vmatprep.subr.mxu0 0.0
  %1336 = vmatpush2.msra.mxu0 0.0
  %1337 = vmatprep.subr.mxu0 0.0
  %1338 = vmatpush2.msra.mxu0 0.0
  %1339 = vmatprep.subr.mxu0 0.0
  %1340 = vmatpush2.msra.mxu0 0.0
  %1341 = vmatprep.subr.mxu0 0.0
  %1342 = vmatpush2.msra.mxu0 0.0
  %1343 = vmatprep.subr.mxu0 0.0
  %1344 = vmatpush2.msra.mxu0 0.0
  %1345 = vmatprep.subr.mxu0 0.0
  %1346 = vmatpush2.msra.mxu0 0.0
  %1347 = vmatprep.subr.mxu0 0.0
  %1348 = vmatpush2.msra.mxu0 0.0
  %1349 = vmatprep.subr.mxu0 0.0
  %1350 = vmatpush2.msra.mxu0 0.0
  %1351 = vmatprep.subr.mxu0 0.0
  %1352 = vmatpush2.msra.mxu0 0.0
  %1353 = vmatprep.mubr.f32.mxu0 0.0
  %1354 = vmatmul.mubr.f32.gmra.mxu0 %v1287
  %v1355 = vpop.f32.mrf.mxu0
  %v1356 = vadd.f32 %v1281, %v1355
  %v1357 = vpop.f32.mrf.mxu0
  %1358 = vdwg.mxu0
  %v1359 = vadd.f32 %v1356, %v818
  %v1360 = vxor.u32 %v1359, 2147483648
  %v1361 = vmul.f32 %v1360, 1.442695
  %v1362 = vpow.pop %v1361
  %v1363 = vadd.f32 %v1362, 1.0
  %v1364 = vrcp.pop %v1363
  %v1365 = vmul.f32 1.0, %v1364
  %v1366 = vtanh.pop %v1359
  %v1367 = vmul.f32 %v1365, %v1107
  %1369 = vrot.lane.b32.xlu0 %v1366, 64
  %v1370 = vpop.permute.xlu0 %1369
  %v1372 = vmul.f32 %v1365, %v1370
  %1374 = vrot.lane.b32.xlu0 %v1372, 32
  %v1375 = vpop.permute.xlu0 %1374
  %v1377 = vadd.f32 %v1367, %v1375
  %v1378 = vtanh.pop %v1377
  %1380 = vrot.lane.b32.xlu0 %v1378, 64
  %v1381 = vpop.permute.xlu0 %1380
  %v1383 = vmul.f32 %v1365, %v1381
  %1384 = vmatprep.subr.mxu0 0.0
  %1385 = vmatpush1.msra.mxu0 0.0
  %1386 = vmatprep.subr.mxu0 0.0
  %1387 = vmatpush1.msra.mxu0 0.0
  %1388 = vmatprep.subr.mxu0 0.0
  %1389 = vmatpush1.msra.mxu0 0.0
  %1390 = vmatprep.subr.mxu0 0.0
  %1391 = vmatpush1.msra.mxu0 0.0
  %1392 = vmatprep.subr.mxu0 0.0
  %1393 = vmatpush1.msra.mxu0 0.0
  %1394 = vmatprep.subr.mxu0 0.0
  %1395 = vmatpush1.msra.mxu0 0.0
  %1396 = vmatprep.subr.mxu0 0.0
  %1397 = vmatpush1.msra.mxu0 0.0
  %1398 = vmatprep.subr.mxu0 0.0
  %1399 = vmatpush1.msra.mxu0 0.0
  %1400 = vmatprep.subr.mxu0 0.0
  %1401 = vmatpush1.msra.mxu0 0.0
  %1402 = vmatprep.subr.mxu0 0.0
  %1403 = vmatpush1.msra.mxu0 0.0
  %1404 = vmatprep.subr.mxu0 0.0
  %1405 = vmatpush1.msra.mxu0 0.0
  %1406 = vmatprep.subr.mxu0 0.0
  %1407 = vmatpush1.msra.mxu0 0.0
  %1408 = vmatprep.subr.mxu0 0.0
  %1409 = vmatpush1.msra.mxu0 %v563
  %1410 = vmatprep.subr.mxu0 0.0
  %1411 = vmatpush1.msra.mxu0 %v562
  %1412 = vmatprep.subr.mxu0 0.0
  %1413 = vmatpush1.msra.mxu0 %v561
  %1414 = vmatprep.subr.mxu0 0.0
  %1415 = vmatpush1.msra.mxu0 %v560
  %1416 = vmatprep.subr.mxu0 0.0
  %1417 = vmatpush2.msra.mxu0 0.0
  %1418 = vmatprep.subr.mxu0 0.0
  %1419 = vmatpush2.msra.mxu0 0.0
  %1420 = vmatprep.subr.mxu0 0.0
  %1421 = vmatpush2.msra.mxu0 0.0
  %1422 = vmatprep.subr.mxu0 0.0
  %1423 = vmatpush2.msra.mxu0 0.0
  %1424 = vmatprep.subr.mxu0 0.0
  %1425 = vmatpush2.msra.mxu0 0.0
  %1426 = vmatprep.subr.mxu0 0.0
  %1427 = vmatpush2.msra.mxu0 0.0
  %1428 = vmatprep.subr.mxu0 0.0
  %1429 = vmatpush2.msra.mxu0 0.0
  %1430 = vmatprep.subr.mxu0 0.0
  %1431 = vmatpush2.msra.mxu0 0.0
  %1432 = vmatprep.subr.mxu0 0.0
  %1433 = vmatpush2.msra.mxu0 0.0
  %1434 = vmatprep.subr.mxu0 0.0
  %1435 = vmatpush2.msra.mxu0 0.0
  %1436 = vmatprep.subr.mxu0 0.0
  %1437 = vmatpush2.msra.mxu0 0.0
  %1438 = vmatprep.subr.mxu0 0.0
  %1439 = vmatpush2.msra.mxu0 0.0
  %1440 = vmatprep.subr.mxu0 0.0
  %1441 = vmatpush2.msra.mxu0 0.0
  %1442 = vmatprep.subr.mxu0 0.0
  %1443 = vmatpush2.msra.mxu0 0.0
  %1444 = vmatprep.subr.mxu0 0.0
  %1445 = vmatpush2.msra.mxu0 0.0
  %1446 = vmatprep.subr.mxu0 0.0
  %1447 = vmatpush2.msra.mxu0 0.0
  %1448 = vmatprep.mubr.f32.mxu0 0.0
  %1449 = vmatmul.mubr.f32.gmra.mxu0 %v1287
  %v1450 = vpop.f32.mrf.mxu0
  %v1451 = vadd.f32 0.0, %v1450
  %v1452 = vpop.f32.mrf.mxu0
  %1453 = vdwg.mxu0
  %v1454 = vadd.f32 %v555, %v1451
  %v1455 = vxor.u32 %v1454, 2147483648
  %v1456 = vmul.f32 %v1455, 1.442695
  %v1457 = vpow.pop %v1456
  %v1458 = vadd.f32 %v1457, 1.0
  %v1459 = vrcp.pop %v1458
  %v1460 = vmul.f32 1.0, %v1459
  %v1461 = vtanh.pop %v1454
  %v1462 = vmul.f32 %v1460, %v1202
  %1464 = vrot.lane.b32.xlu0 %v1461, 64
  %v1465 = vpop.permute.xlu0 %1464
  %v1467 = vmul.f32 %v1460, %v1465
  %1469 = vrot.lane.b32.xlu0 %v1467, 32
  %v1470 = vpop.permute.xlu0 %1469
  %v1472 = vadd.f32 %v1462, %v1470
  %v1473 = vtanh.pop %v1472
  %1475 = vrot.lane.b32.xlu0 %v1473, 64
  %v1476 = vpop.permute.xlu0 %1475
  %v1478 = vmul.f32 %v1460, %v1476
  %1480 = vrot.lane.b32.xlu0 %v1383, 32
  %v1481 = vpop.permute.xlu0 %1480
  %v1482 = vsel %vm171, %v1481, 0
  %1484 = vmatprep.subr.mxu0 0.0
  %1485 = vmatpush1.msra.mxu0 0.0
  %1486 = vmatprep.subr.mxu0 0.0
  %1487 = vmatpush1.msra.mxu0 0.0
  %1488 = vmatprep.subr.mxu0 0.0
  %1489 = vmatpush1.msra.mxu0 0.0
  %1490 = vmatprep.subr.mxu0 0.0
  %1491 = vmatpush1.msra.mxu0 0.0
  %1492 = vmatprep.subr.mxu0 0.0
  %1493 = vmatpush1.msra.mxu0 0.0
  %1494 = vmatprep.subr.mxu0 0.0
  %1495 = vmatpush1.msra.mxu0 0.0
  %1496 = vmatprep.subr.mxu0 0.0
  %1497 = vmatpush1.msra.mxu0 0.0
  %1498 = vmatprep.subr.mxu0 0.0
  %1499 = vmatpush1.msra.mxu0 0.0
  %1500 = vmatprep.subr.mxu0 0.0
  %1501 = vmatpush1.msra.mxu0 0.0
  %1502 = vmatprep.subr.mxu0 0.0
  %1503 = vmatpush1.msra.mxu0 0.0
  %1504 = vmatprep.subr.mxu0 0.0
  %1505 = vmatpush1.msra.mxu0 0.0
  %1506 = vmatprep.subr.mxu0 0.0
  %1507 = vmatpush1.msra.mxu0 0.0
  %1508 = vmatprep.subr.mxu0 0.0
  %1509 = vmatpush1.msra.mxu0 %v571
  %1510 = vmatprep.subr.mxu0 0.0
  %1511 = vmatpush1.msra.mxu0 %v570
  %1512 = vmatprep.subr.mxu0 0.0
  %1513 = vmatpush1.msra.mxu0 %v569
  %1514 = vmatprep.subr.mxu0 0.0
  %1515 = vmatpush1.msra.mxu0 %v568
  %1516 = vmatprep.subr.mxu0 0.0
  %1517 = vmatpush2.msra.mxu0 0.0
  %1518 = vmatprep.subr.mxu0 0.0
  %1519 = vmatpush2.msra.mxu0 0.0
  %1520 = vmatprep.subr.mxu0 0.0
  %1521 = vmatpush2.msra.mxu0 0.0
  %1522 = vmatprep.subr.mxu0 0.0
  %1523 = vmatpush2.msra.mxu0 0.0
  %1524 = vmatprep.subr.mxu0 0.0
  %1525 = vmatpush2.msra.mxu0 0.0
  %1526 = vmatprep.subr.mxu0 0.0
  %1527 = vmatpush2.msra.mxu0 0.0
  %1528 = vmatprep.subr.mxu0 0.0
  %1529 = vmatpush2.msra.mxu0 0.0
  %1530 = vmatprep.subr.mxu0 0.0
  %1531 = vmatpush2.msra.mxu0 0.0
  %1532 = vmatprep.subr.mxu0 0.0
  %1533 = vmatpush2.msra.mxu0 0.0
  %1534 = vmatprep.subr.mxu0 0.0
  %1535 = vmatpush2.msra.mxu0 0.0
  %1536 = vmatprep.subr.mxu0 0.0
  %1537 = vmatpush2.msra.mxu0 0.0
  %1538 = vmatprep.subr.mxu0 0.0
  %1539 = vmatpush2.msra.mxu0 0.0
  %1540 = vmatprep.subr.mxu0 0.0
  %1541 = vmatpush2.msra.mxu0 0.0
  %1542 = vmatprep.subr.mxu0 0.0
  %1543 = vmatpush2.msra.mxu0 0.0
  %1544 = vmatprep.subr.mxu0 0.0
  %1545 = vmatpush2.msra.mxu0 0.0
  %1546 = vmatprep.subr.mxu0 0.0
  %1547 = vmatpush2.msra.mxu0 0.0
  %1548 = vmatprep.mubr.f32.mxu0 0.0
  %1549 = vmatmul.mubr.f32.gmra.mxu0 %v1482
  %v1550 = vpop.f32.mrf.mxu0
  %v1551 = vadd.f32 0.0, %v1550
  %v1552 = vpop.f32.mrf.mxu0
  %1553 = vdwg.mxu0
  %1555 = vrot.lane.b32.xlu0 %v1478, 32
  %v1556 = vpop.permute.xlu0 %1555
  %v1557 = vsel %vm171, %v1556, 0
  %1559 = vmatprep.subr.mxu0 0.0
  %1560 = vmatpush1.msra.mxu0 0.0
  %1561 = vmatprep.subr.mxu0 0.0
  %1562 = vmatpush1.msra.mxu0 0.0
  %1563 = vmatprep.subr.mxu0 0.0
  %1564 = vmatpush1.msra.mxu0 0.0
  %1565 = vmatprep.subr.mxu0 0.0
  %1566 = vmatpush1.msra.mxu0 0.0
  %1567 = vmatprep.subr.mxu0 0.0
  %1568 = vmatpush1.msra.mxu0 0.0
  %1569 = vmatprep.subr.mxu0 0.0
  %1570 = vmatpush1.msra.mxu0 0.0
  %1571 = vmatprep.subr.mxu0 0.0
  %1572 = vmatpush1.msra.mxu0 0.0
  %1573 = vmatprep.subr.mxu0 0.0
  %1574 = vmatpush1.msra.mxu0 0.0
  %1575 = vmatprep.subr.mxu0 0.0
  %1576 = vmatpush1.msra.mxu0 0.0
  %1577 = vmatprep.subr.mxu0 0.0
  %1578 = vmatpush1.msra.mxu0 0.0
  %1579 = vmatprep.subr.mxu0 0.0
  %1580 = vmatpush1.msra.mxu0 0.0
  %1581 = vmatprep.subr.mxu0 0.0
  %1582 = vmatpush1.msra.mxu0 0.0
  %1583 = vmatprep.subr.mxu0 0.0
  %1584 = vmatpush1.msra.mxu0 %v567
  %1585 = vmatprep.subr.mxu0 0.0
  %1586 = vmatpush1.msra.mxu0 %v566
  %1587 = vmatprep.subr.mxu0 0.0
  %1588 = vmatpush1.msra.mxu0 %v565
  %1589 = vmatprep.subr.mxu0 0.0
  %1590 = vmatpush1.msra.mxu0 %v564
  %1591 = vmatprep.subr.mxu0 0.0
  %1592 = vmatpush2.msra.mxu0 0.0
  %1593 = vmatprep.subr.mxu0 0.0
  %1594 = vmatpush2.msra.mxu0 0.0
  %1595 = vmatprep.subr.mxu0 0.0
  %1596 = vmatpush2.msra.mxu0 0.0
  %1597 = vmatprep.subr.mxu0 0.0
  %1598 = vmatpush2.msra.mxu0 0.0
  %1599 = vmatprep.subr.mxu0 0.0
  %1600 = vmatpush2.msra.mxu0 0.0
  %1601 = vmatprep.subr.mxu0 0.0
  %1602 = vmatpush2.msra.mxu0 0.0
  %1603 = vmatprep.subr.mxu0 0.0
  %1604 = vmatpush2.msra.mxu0 0.0
  %1605 = vmatprep.subr.mxu0 0.0
  %1606 = vmatpush2.msra.mxu0 0.0
  %1607 = vmatprep.subr.mxu0 0.0
  %1608 = vmatpush2.msra.mxu0 0.0
  %1609 = vmatprep.subr.mxu0 0.0
  %1610 = vmatpush2.msra.mxu0 0.0
  %1611 = vmatprep.subr.mxu0 0.0
  %1612 = vmatpush2.msra.mxu0 0.0
  %1613 = vmatprep.subr.mxu0 0.0
  %1614 = vmatpush2.msra.mxu0 0.0
  %1615 = vmatprep.subr.mxu0 0.0
  %1616 = vmatpush2.msra.mxu0 0.0
  %1617 = vmatprep.subr.mxu0 0.0
  %1618 = vmatpush2.msra.mxu0 0.0
  %1619 = vmatprep.subr.mxu0 0.0
  %1620 = vmatpush2.msra.mxu0 0.0
  %1621 = vmatprep.subr.mxu0 0.0
  %1622 = vmatpush2.msra.mxu0 0.0
  %1623 = vmatprep.mubr.f32.mxu0 0.0
  %1624 = vmatmul.mubr.f32.gmra.mxu0 %v1557
  %v1625 = vpop.f32.mrf.mxu0
  %v1626 = vadd.f32 %v1551, %v1625
  %v1627 = vpop.f32.mrf.mxu0
  %1628 = vdwg.mxu0
  %v1629 = vadd.f32 %v1626, %v818
  %v1630 = vxor.u32 %v1629, 2147483648
  %v1631 = vmul.f32 %v1630, 1.442695
  %v1632 = vpow.pop %v1631
  %v1633 = vadd.f32 %v1632, 1.0
  %v1634 = vrcp.pop %v1633
  %v1635 = vmul.f32 1.0, %v1634
  %v1636 = vtanh.pop %v1629
  %v1637 = vmul.f32 %v1635, %v1377
  %1639 = vrot.lane.b32.xlu0 %v1636, 64
  %v1640 = vpop.permute.xlu0 %1639
  %v1642 = vmul.f32 %v1635, %v1640
  %1644 = vrot.lane.b32.xlu0 %v1642, 32
  %v1645 = vpop.permute.xlu0 %1644
  %v1647 = vadd.f32 %v1637, %v1645
  %v1648 = vtanh.pop %v1647
  %1650 = vrot.lane.b32.xlu0 %v1648, 64
  %v1651 = vpop.permute.xlu0 %1650
  %v1653 = vmul.f32 %v1635, %v1651
  %1654 = vmatprep.subr.mxu0 0.0
  %1655 = vmatpush1.msra.mxu0 0.0
  %1656 = vmatprep.subr.mxu0 0.0
  %1657 = vmatpush1.msra.mxu0 0.0
  %1658 = vmatprep.subr.mxu0 0.0
  %1659 = vmatpush1.msra.mxu0 0.0
  %1660 = vmatprep.subr.mxu0 0.0
  %1661 = vmatpush1.msra.mxu0 0.0
  %1662 = vmatprep.subr.mxu0 0.0
  %1663 = vmatpush1.msra.mxu0 0.0
  %1664 = vmatprep.subr.mxu0 0.0
  %1665 = vmatpush1.msra.mxu0 0.0
  %1666 = vmatprep.subr.mxu0 0.0
  %1667 = vmatpush1.msra.mxu0 0.0
  %1668 = vmatprep.subr.mxu0 0.0
  %1669 = vmatpush1.msra.mxu0 0.0
  %1670 = vmatprep.subr.mxu0 0.0
  %1671 = vmatpush1.msra.mxu0 0.0
  %1672 = vmatprep.subr.mxu0 0.0
  %1673 = vmatpush1.msra.mxu0 0.0
  %1674 = vmatprep.subr.mxu0 0.0
  %1675 = vmatpush1.msra.mxu0 0.0
  %1676 = vmatprep.subr.mxu0 0.0
  %1677 = vmatpush1.msra.mxu0 0.0
  %1678 = vmatprep.subr.mxu0 0.0
  %1679 = vmatpush1.msra.mxu0 %v563
  %1680 = vmatprep.subr.mxu0 0.0
  %1681 = vmatpush1.msra.mxu0 %v562
  %1682 = vmatprep.subr.mxu0 0.0
  %1683 = vmatpush1.msra.mxu0 %v561
  %1684 = vmatprep.subr.mxu0 0.0
  %1685 = vmatpush1.msra.mxu0 %v560
  %1686 = vmatprep.subr.mxu0 0.0
  %1687 = vmatpush2.msra.mxu0 0.0
  %1688 = vmatprep.subr.mxu0 0.0
  %1689 = vmatpush2.msra.mxu0 0.0
  %1690 = vmatprep.subr.mxu0 0.0
  %1691 = vmatpush2.msra.mxu0 0.0
  %1692 = vmatprep.subr.mxu0 0.0
  %1693 = vmatpush2.msra.mxu0 0.0
  %1694 = vmatprep.subr.mxu0 0.0
  %1695 = vmatpush2.msra.mxu0 0.0
  %1696 = vmatprep.subr.mxu0 0.0
  %1697 = vmatpush2.msra.mxu0 0.0
  %1698 = vmatprep.subr.mxu0 0.0
  %1699 = vmatpush2.msra.mxu0 0.0
  %1700 = vmatprep.subr.mxu0 0.0
  %1701 = vmatpush2.msra.mxu0 0.0
  %1702 = vmatprep.subr.mxu0 0.0
  %1703 = vmatpush2.msra.mxu0 0.0
  %1704 = vmatprep.subr.mxu0 0.0
  %1705 = vmatpush2.msra.mxu0 0.0
  %1706 = vmatprep.subr.mxu0 0.0
  %1707 = vmatpush2.msra.mxu0 0.0
  %1708 = vmatprep.subr.mxu0 0.0
  %1709 = vmatpush2.msra.mxu0 0.0
  %1710 = vmatprep.subr.mxu0 0.0
  %1711 = vmatpush2.msra.mxu0 0.0
  %1712 = vmatprep.subr.mxu0 0.0
  %1713 = vmatpush2.msra.mxu0 0.0
  %1714 = vmatprep.subr.mxu0 0.0
  %1715 = vmatpush2.msra.mxu0 0.0
  %1716 = vmatprep.subr.mxu0 0.0
  %1717 = vmatpush2.msra.mxu0 0.0
  %1718 = vmatprep.mubr.f32.mxu0 0.0
  %1719 = vmatmul.mubr.f32.gmra.mxu0 %v1557
  %v1720 = vpop.f32.mrf.mxu0
  %v1721 = vadd.f32 0.0, %v1720
  %v1722 = vpop.f32.mrf.mxu0
  %1723 = vdwg.mxu0
  %v1724 = vadd.f32 %v556, %v1721
  %v1725 = vxor.u32 %v1724, 2147483648
  %v1726 = vmul.f32 %v1725, 1.442695
  %v1727 = vpow.pop %v1726
  %v1728 = vadd.f32 %v1727, 1.0
  %v1729 = vrcp.pop %v1728
  %v1730 = vmul.f32 1.0, %v1729
  %v1731 = vtanh.pop %v1724
  %v1732 = vmul.f32 %v1730, %v1472
  %1734 = vrot.lane.b32.xlu0 %v1731, 64
  %v1735 = vpop.permute.xlu0 %1734
  %v1737 = vmul.f32 %v1730, %v1735
  %1739 = vrot.lane.b32.xlu0 %v1737, 32
  %v1740 = vpop.permute.xlu0 %1739
  %v1742 = vadd.f32 %v1732, %v1740
  %v1743 = vtanh.pop %v1742
  %1745 = vrot.lane.b32.xlu0 %v1743, 64
  %v1746 = vpop.permute.xlu0 %1745
  %v1748 = vmul.f32 %v1730, %v1746
  %1750 = vrot.lane.b32.xlu0 %v1653, 32
  %v1751 = vpop.permute.xlu0 %1750
  %v1752 = vsel %vm171, %v1751, 0
  %1754 = vmatprep.subr.mxu0 0.0
  %1755 = vmatpush1.msra.mxu0 0.0
  %1756 = vmatprep.subr.mxu0 0.0
  %1757 = vmatpush1.msra.mxu0 0.0
  %1758 = vmatprep.subr.mxu0 0.0
  %1759 = vmatpush1.msra.mxu0 0.0
  %1760 = vmatprep.subr.mxu0 0.0
  %1761 = vmatpush1.msra.mxu0 0.0
  %1762 = vmatprep.subr.mxu0 0.0
  %1763 = vmatpush1.msra.mxu0 0.0
  %1764 = vmatprep.subr.mxu0 0.0
  %1765 = vmatpush1.msra.mxu0 0.0
  %1766 = vmatprep.subr.mxu0 0.0
  %1767 = vmatpush1.msra.mxu0 0.0
  %1768 = vmatprep.subr.mxu0 0.0
  %1769 = vmatpush1.msra.mxu0 0.0
  %1770 = vmatprep.subr.mxu0 0.0
  %1771 = vmatpush1.msra.mxu0 0.0
  %1772 = vmatprep.subr.mxu0 0.0
  %1773 = vmatpush1.msra.mxu0 0.0
  %1774 = vmatprep.subr.mxu0 0.0
  %1775 = vmatpush1.msra.mxu0 0.0
  %1776 = vmatprep.subr.mxu0 0.0
  %1777 = vmatpush1.msra.mxu0 0.0
  %1778 = vmatprep.subr.mxu0 0.0
  %1779 = vmatpush1.msra.mxu0 %v571
  %1780 = vmatprep.subr.mxu0 0.0
  %1781 = vmatpush1.msra.mxu0 %v570
  %1782 = vmatprep.subr.mxu0 0.0
  %1783 = vmatpush1.msra.mxu0 %v569
  %1784 = vmatprep.subr.mxu0 0.0
  %1785 = vmatpush1.msra.mxu0 %v568
  %1786 = vmatprep.subr.mxu0 0.0
  %1787 = vmatpush2.msra.mxu0 0.0
  %1788 = vmatprep.subr.mxu0 0.0
  %1789 = vmatpush2.msra.mxu0 0.0
  %1790 = vmatprep.subr.mxu0 0.0
  %1791 = vmatpush2.msra.mxu0 0.0
  %1792 = vmatprep.subr.mxu0 0.0
  %1793 = vmatpush2.msra.mxu0 0.0
  %1794 = vmatprep.subr.mxu0 0.0
  %1795 = vmatpush2.msra.mxu0 0.0
  %1796 = vmatprep.subr.mxu0 0.0
  %1797 = vmatpush2.msra.mxu0 0.0
  %1798 = vmatprep.subr.mxu0 0.0
  %1799 = vmatpush2.msra.mxu0 0.0
  %1800 = vmatprep.subr.mxu0 0.0
  %1801 = vmatpush2.msra.mxu0 0.0
  %1802 = vmatprep.subr.mxu0 0.0
  %1803 = vmatpush2.msra.mxu0 0.0
  %1804 = vmatprep.subr.mxu0 0.0
  %1805 = vmatpush2.msra.mxu0 0.0
  %1806 = vmatprep.subr.mxu0 0.0
  %1807 = vmatpush2.msra.mxu0 0.0
  %1808 = vmatprep.subr.mxu0 0.0
  %1809 = vmatpush2.msra.mxu0 0.0
  %1810 = vmatprep.subr.mxu0 0.0
  %1811 = vmatpush2.msra.mxu0 0.0
  %1812 = vmatprep.subr.mxu0 0.0
  %1813 = vmatpush2.msra.mxu0 0.0
  %1814 = vmatprep.subr.mxu0 0.0
  %1815 = vmatpush2.msra.mxu0 0.0
  %1816 = vmatprep.subr.mxu0 0.0
  %1817 = vmatpush2.msra.mxu0 0.0
  %1818 = vmatprep.mubr.f32.mxu0 0.0
  %1819 = vmatmul.mubr.f32.gmra.mxu0 %v1752
  %v1820 = vpop.f32.mrf.mxu0
  %v1821 = vadd.f32 0.0, %v1820
  %v1822 = vpop.f32.mrf.mxu0
  %1823 = vdwg.mxu0
  %1825 = vrot.lane.b32.xlu0 %v1748, 32
  %v1826 = vpop.permute.xlu0 %1825
  %v1827 = vsel %vm171, %v1826, 0
  %1829 = vmatprep.subr.mxu0 0.0
  %1830 = vmatpush1.msra.mxu0 0.0
  %1831 = vmatprep.subr.mxu0 0.0
  %1832 = vmatpush1.msra.mxu0 0.0
  %1833 = vmatprep.subr.mxu0 0.0
  %1834 = vmatpush1.msra.mxu0 0.0
  %1835 = vmatprep.subr.mxu0 0.0
  %1836 = vmatpush1.msra.mxu0 0.0
  %1837 = vmatprep.subr.mxu0 0.0
  %1838 = vmatpush1.msra.mxu0 0.0
  %1839 = vmatprep.subr.mxu0 0.0
  %1840 = vmatpush1.msra.mxu0 0.0
  %1841 = vmatprep.subr.mxu0 0.0
  %1842 = vmatpush1.msra.mxu0 0.0
  %1843 = vmatprep.subr.mxu0 0.0
  %1844 = vmatpush1.msra.mxu0 0.0
  %1845 = vmatprep.subr.mxu0 0.0
  %1846 = vmatpush1.msra.mxu0 0.0
  %1847 = vmatprep.subr.mxu0 0.0
  %1848 = vmatpush1.msra.mxu0 0.0
  %1849 = vmatprep.subr.mxu0 0.0
  %1850 = vmatpush1.msra.mxu0 0.0
  %1851 = vmatprep.subr.mxu0 0.0
  %1852 = vmatpush1.msra.mxu0 0.0
  %1853 = vmatprep.subr.mxu0 0.0
  %1854 = vmatpush1.msra.mxu0 %v567
  %1855 = vmatprep.subr.mxu0 0.0
  %1856 = vmatpush1.msra.mxu0 %v566
  %1857 = vmatprep.subr.mxu0 0.0
  %1858 = vmatpush1.msra.mxu0 %v565
  %1859 = vmatprep.subr.mxu0 0.0
  %1860 = vmatpush1.msra.mxu0 %v564
  %1861 = vmatprep.subr.mxu0 0.0
  %1862 = vmatpush2.msra.mxu0 0.0
  %1863 = vmatprep.subr.mxu0 0.0
  %1864 = vmatpush2.msra.mxu0 0.0
  %1865 = vmatprep.subr.mxu0 0.0
  %1866 = vmatpush2.msra.mxu0 0.0
  %1867 = vmatprep.subr.mxu0 0.0
  %1868 = vmatpush2.msra.mxu0 0.0
  %1869 = vmatprep.subr.mxu0 0.0
  %1870 = vmatpush2.msra.mxu0 0.0
  %1871 = vmatprep.subr.mxu0 0.0
  %1872 = vmatpush2.msra.mxu0 0.0
  %1873 = vmatprep.subr.mxu0 0.0
  %1874 = vmatpush2.msra.mxu0 0.0
  %1875 = vmatprep.subr.mxu0 0.0
  %1876 = vmatpush2.msra.mxu0 0.0
  %1877 = vmatprep.subr.mxu0 0.0
  %1878 = vmatpush2.msra.mxu0 0.0
  %1879 = vmatprep.subr.mxu0 0.0
  %1880 = vmatpush2.msra.mxu0 0.0
  %1881 = vmatprep.subr.mxu0 0.0
  %1882 = vmatpush2.msra.mxu0 0.0
  %1883 = vmatprep.subr.mxu0 0.0
  %1884 = vmatpush2.msra.mxu0 0.0
  %1885 = vmatprep.subr.mxu0 0.0
  %1886 = vmatpush2.msra.mxu0 0.0
  %1887 = vmatprep.subr.mxu0 0.0
  %1888 = vmatpush2.msra.mxu0 0.0
  %1889 = vmatprep.subr.mxu0 0.0
  %1890 = vmatpush2.msra.mxu0 0.0
  %1891 = vmatprep.subr.mxu0 0.0
  %1892 = vmatpush2.msra.mxu0 0.0
  %1893 = vmatprep.mubr.f32.mxu0 0.0
  %1894 = vmatmul.mubr.f32.gmra.mxu0 %v1827
  %v1895 = vpop.f32.mrf.mxu0
  %v1896 = vadd.f32 %v1821, %v1895
  %v1897 = vpop.f32.mrf.mxu0
  %1898 = vdwg.mxu0
  %v1899 = vadd.f32 %v1896, %v818
  %v1900 = vxor.u32 %v1899, 2147483648
  %v1901 = vmul.f32 %v1900, 1.442695
  %v1902 = vpow.pop %v1901
  %v1903 = vadd.f32 %v1902, 1.0
  %v1904 = vrcp.pop %v1903
  %v1905 = vmul.f32 1.0, %v1904
  %v1906 = vtanh.pop %v1899
  %v1907 = vmul.f32 %v1905, %v1647
  %1909 = vrot.lane.b32.xlu0 %v1906, 64
  %v1910 = vpop.permute.xlu0 %1909
  %v1912 = vmul.f32 %v1905, %v1910
  %1914 = vrot.lane.b32.xlu0 %v1912, 32
  %v1915 = vpop.permute.xlu0 %1914
  %v1917 = vadd.f32 %v1907, %v1915
  %v1918 = vtanh.pop %v1917
  %1920 = vrot.lane.b32.xlu0 %v1918, 64
  %v1921 = vpop.permute.xlu0 %1920
  %v1923 = vmul.f32 %v1905, %v1921
  %1924 = vmatprep.subr.mxu0 0.0
  %1925 = vmatpush1.msra.mxu0 0.0
  %1926 = vmatprep.subr.mxu0 0.0
  %1927 = vmatpush1.msra.mxu0 0.0
  %1928 = vmatprep.subr.mxu0 0.0
  %1929 = vmatpush1.msra.mxu0 0.0
  %1930 = vmatprep.subr.mxu0 0.0
  %1931 = vmatpush1.msra.mxu0 0.0
  %1932 = vmatprep.subr.mxu0 0.0
  %1933 = vmatpush1.msra.mxu0 0.0
  %1934 = vmatprep.subr.mxu0 0.0
  %1935 = vmatpush1.msra.mxu0 0.0
  %1936 = vmatprep.subr.mxu0 0.0
  %1937 = vmatpush1.msra.mxu0 0.0
  %1938 = vmatprep.subr.mxu0 0.0
  %1939 = vmatpush1.msra.mxu0 0.0
  %1940 = vmatprep.subr.mxu0 0.0
  %1941 = vmatpush1.msra.mxu0 0.0
  %1942 = vmatprep.subr.mxu0 0.0
  %1943 = vmatpush1.msra.mxu0 0.0
  %1944 = vmatprep.subr.mxu0 0.0
  %1945 = vmatpush1.msra.mxu0 0.0
  %1946 = vmatprep.subr.mxu0 0.0
  %1947 = vmatpush1.msra.mxu0 0.0
  %1948 = vmatprep.subr.mxu0 0.0
  %1949 = vmatpush1.msra.mxu0 %v563
  %1950 = vmatprep.subr.mxu0 0.0
  %1951 = vmatpush1.msra.mxu0 %v562
  %1952 = vmatprep.subr.mxu0 0.0
  %1953 = vmatpush1.msra.mxu0 %v561
  %1954 = vmatprep.subr.mxu0 0.0
  %1955 = vmatpush1.msra.mxu0 %v560
  %1956 = vmatprep.subr.mxu0 0.0
  %1957 = vmatpush2.msra.mxu0 0.0
  %1958 = vmatprep.subr.mxu0 0.0
  %1959 = vmatpush2.msra.mxu0 0.0
  %1960 = vmatprep.subr.mxu0 0.0
  %1961 = vmatpush2.msra.mxu0 0.0
  %1962 = vmatprep.subr.mxu0 0.0
  %1963 = vmatpush2.msra.mxu0 0.0
  %1964 = vmatprep.subr.mxu0 0.0
  %1965 = vmatpush2.msra.mxu0 0.0
  %1966 = vmatprep.subr.mxu0 0.0
  %1967 = vmatpush2.msra.mxu0 0.0
  %1968 = vmatprep.subr.mxu0 0.0
  %1969 = vmatpush2.msra.mxu0 0.0
  %1970 = vmatprep.subr.mxu0 0.0
  %1971 = vmatpush2.msra.mxu0 0.0
  %1972 = vmatprep.subr.mxu0 0.0
  %1973 = vmatpush2.msra.mxu0 0.0
  %1974 = vmatprep.subr.mxu0 0.0
  %1975 = vmatpush2.msra.mxu0 0.0
  %1976 = vmatprep.subr.mxu0 0.0
  %1977 = vmatpush2.msra.mxu0 0.0
  %1978 = vmatprep.subr.mxu0 0.0
  %1979 = vmatpush2.msra.mxu0 0.0
  %1980 = vmatprep.subr.mxu0 0.0
  %1981 = vmatpush2.msra.mxu0 0.0
  %1982 = vmatprep.subr.mxu0 0.0
  %1983 = vmatpush2.msra.mxu0 0.0
  %1984 = vmatprep.subr.mxu0 0.0
  %1985 = vmatpush2.msra.mxu0 0.0
  %1986 = vmatprep.subr.mxu0 0.0
  %1987 = vmatpush2.msra.mxu0 0.0
  %1988 = vmatprep.mubr.f32.mxu0 0.0
  %1989 = vmatmul.mubr.f32.gmra.mxu0 %v1827
  %v1990 = vpop.f32.mrf.mxu0
  %v1991 = vadd.f32 0.0, %v1990
  %v1992 = vpop.f32.mrf.mxu0
  %1993 = vdwg.mxu0
  %v1994 = vadd.f32 %v557, %v1991
  %v1995 = vxor.u32 %v1994, 2147483648
  %v1996 = vmul.f32 %v1995, 1.442695
  %v1997 = vpow.pop %v1996
  %v1998 = vadd.f32 %v1997, 1.0
  %v1999 = vrcp.pop %v1998
  %v2000 = vmul.f32 1.0, %v1999
  %v2001 = vtanh.pop %v1994
  %v2002 = vmul.f32 %v2000, %v1742
  %2004 = vrot.lane.b32.xlu0 %v2001, 64
  %v2005 = vpop.permute.xlu0 %2004
  %v2007 = vmul.f32 %v2000, %v2005
  %2009 = vrot.lane.b32.xlu0 %v2007, 32
  %v2010 = vpop.permute.xlu0 %2009
  %v2012 = vadd.f32 %v2002, %v2010
  %v2013 = vtanh.pop %v2012
  %2015 = vrot.lane.b32.xlu0 %v2013, 64
  %v2016 = vpop.permute.xlu0 %2015
  %v2018 = vmul.f32 %v2000, %v2016
  %2020 = vrot.lane.b32.xlu0 %v1923, 32
  %v2021 = vpop.permute.xlu0 %2020
  %v2022 = vsel %vm171, %v2021, 0
  %2024 = vmatprep.subr.mxu0 0.0
  %2025 = vmatpush1.msra.mxu0 0.0
  %2026 = vmatprep.subr.mxu0 0.0
  %2027 = vmatpush1.msra.mxu0 0.0
  %2028 = vmatprep.subr.mxu0 0.0
  %2029 = vmatpush1.msra.mxu0 0.0
  %2030 = vmatprep.subr.mxu0 0.0
  %2031 = vmatpush1.msra.mxu0 0.0
  %2032 = vmatprep.subr.mxu0 0.0
  %2033 = vmatpush1.msra.mxu0 0.0
  %2034 = vmatprep.subr.mxu0 0.0
  %2035 = vmatpush1.msra.mxu0 0.0
  %2036 = vmatprep.subr.mxu0 0.0
  %2037 = vmatpush1.msra.mxu0 0.0
  %2038 = vmatprep.subr.mxu0 0.0
  %2039 = vmatpush1.msra.mxu0 0.0
  %2040 = vmatprep.subr.mxu0 0.0
  %2041 = vmatpush1.msra.mxu0 0.0
  %2042 = vmatprep.subr.mxu0 0.0
  %2043 = vmatpush1.msra.mxu0 0.0
  %2044 = vmatprep.subr.mxu0 0.0
  %2045 = vmatpush1.msra.mxu0 0.0
  %2046 = vmatprep.subr.mxu0 0.0
  %2047 = vmatpush1.msra.mxu0 0.0
  %2048 = vmatprep.subr.mxu0 0.0
  %2049 = vmatpush1.msra.mxu0 %v571
  %2050 = vmatprep.subr.mxu0 0.0
  %2051 = vmatpush1.msra.mxu0 %v570
  %2052 = vmatprep.subr.mxu0 0.0
  %2053 = vmatpush1.msra.mxu0 %v569
  %2054 = vmatprep.subr.mxu0 0.0
  %2055 = vmatpush1.msra.mxu0 %v568
  %2056 = vmatprep.subr.mxu0 0.0
  %2057 = vmatpush2.msra.mxu0 0.0
  %2058 = vmatprep.subr.mxu0 0.0
  %2059 = vmatpush2.msra.mxu0 0.0
  %2060 = vmatprep.subr.mxu0 0.0
  %2061 = vmatpush2.msra.mxu0 0.0
  %2062 = vmatprep.subr.mxu0 0.0
  %2063 = vmatpush2.msra.mxu0 0.0
  %2064 = vmatprep.subr.mxu0 0.0
  %2065 = vmatpush2.msra.mxu0 0.0
  %2066 = vmatprep.subr.mxu0 0.0
  %2067 = vmatpush2.msra.mxu0 0.0
  %2068 = vmatprep.subr.mxu0 0.0
  %2069 = vmatpush2.msra.mxu0 0.0
  %2070 = vmatprep.subr.mxu0 0.0
  %2071 = vmatpush2.msra.mxu0 0.0
  %2072 = vmatprep.subr.mxu0 0.0
  %2073 = vmatpush2.msra.mxu0 0.0
  %2074 = vmatprep.subr.mxu0 0.0
  %2075 = vmatpush2.msra.mxu0 0.0
  %2076 = vmatprep.subr.mxu0 0.0
  %2077 = vmatpush2.msra.mxu0 0.0
  %2078 = vmatprep.subr.mxu0 0.0
  %2079 = vmatpush2.msra.mxu0 0.0
  %2080 = vmatprep.subr.mxu0 0.0
  %2081 = vmatpush2.msra.mxu0 0.0
  %2082 = vmatprep.subr.mxu0 0.0
  %2083 = vmatpush2.msra.mxu0 0.0
  %2084 = vmatprep.subr.mxu0 0.0
  %2085 = vmatpush2.msra.mxu0 0.0
  %2086 = vmatprep.subr.mxu0 0.0
  %2087 = vmatpush2.msra.mxu0 0.0
  %2088 = vmatprep.mubr.f32.mxu0 0.0
  %2089 = vmatmul.mubr.f32.gmra.mxu0 %v2022
  %v2090 = vpop.f32.mrf.mxu0
  %v2091 = vadd.f32 0.0, %v2090
  %v2092 = vpop.f32.mrf.mxu0
  %2093 = vdwg.mxu0
  %2095 = vrot.lane.b32.xlu0 %v2018, 32
  %v2096 = vpop.permute.xlu0 %2095
  %v2097 = vsel %vm171, %v2096, 0
  %2099 = vmatprep.subr.mxu0 0.0
  %2100 = vmatpush1.msra.mxu0 0.0
  %2101 = vmatprep.subr.mxu0 0.0
  %2102 = vmatpush1.msra.mxu0 0.0
  %2103 = vmatprep.subr.mxu0 0.0
  %2104 = vmatpush1.msra.mxu0 0.0
  %2105 = vmatprep.subr.mxu0 0.0
  %2106 = vmatpush1.msra.mxu0 0.0
  %2107 = vmatprep.subr.mxu0 0.0
  %2108 = vmatpush1.msra.mxu0 0.0
  %2109 = vmatprep.subr.mxu0 0.0
  %2110 = vmatpush1.msra.mxu0 0.0
  %2111 = vmatprep.subr.mxu0 0.0
  %2112 = vmatpush1.msra.mxu0 0.0
  %2113 = vmatprep.subr.mxu0 0.0
  %2114 = vmatpush1.msra.mxu0 0.0
  %2115 = vmatprep.subr.mxu0 0.0
  %2116 = vmatpush1.msra.mxu0 0.0
  %2117 = vmatprep.subr.mxu0 0.0
  %2118 = vmatpush1.msra.mxu0 0.0
  %2119 = vmatprep.subr.mxu0 0.0
  %2120 = vmatpush1.msra.mxu0 0.0
  %2121 = vmatprep.subr.mxu0 0.0
  %2122 = vmatpush1.msra.mxu0 0.0
  %2123 = vmatprep.subr.mxu0 0.0
  %2124 = vmatpush1.msra.mxu0 %v567
  %2125 = vmatprep.subr.mxu0 0.0
  %2126 = vmatpush1.msra.mxu0 %v566
  %2127 = vmatprep.subr.mxu0 0.0
  %2128 = vmatpush1.msra.mxu0 %v565
  %2129 = vmatprep.subr.mxu0 0.0
  %2130 = vmatpush1.msra.mxu0 %v564
  %2131 = vmatprep.subr.mxu0 0.0
  %2132 = vmatpush2.msra.mxu0 0.0
  %2133 = vmatprep.subr.mxu0 0.0
  %2134 = vmatpush2.msra.mxu0 0.0
  %2135 = vmatprep.subr.mxu0 0.0
  %2136 = vmatpush2.msra.mxu0 0.0
  %2137 = vmatprep.subr.mxu0 0.0
  %2138 = vmatpush2.msra.mxu0 0.0
  %2139 = vmatprep.subr.mxu0 0.0
  %2140 = vmatpush2.msra.mxu0 0.0
  %2141 = vmatprep.subr.mxu0 0.0
  %2142 = vmatpush2.msra.mxu0 0.0
  %2143 = vmatprep.subr.mxu0 0.0
  %2144 = vmatpush2.msra.mxu0 0.0
  %2145 = vmatprep.subr.mxu0 0.0
  %2146 = vmatpush2.msra.mxu0 0.0
  %2147 = vmatprep.subr.mxu0 0.0
  %2148 = vmatpush2.msra.mxu0 0.0
  %2149 = vmatprep.subr.mxu0 0.0
  %2150 = vmatpush2.msra.mxu0 0.0
  %2151 = vmatprep.subr.mxu0 0.0
  %2152 = vmatpush2.msra.mxu0 0.0
  %2153 = vmatprep.subr.mxu0 0.0
  %2154 = vmatpush2.msra.mxu0 0.0
  %2155 = vmatprep.subr.mxu0 0.0
  %2156 = vmatpush2.msra.mxu0 0.0
  %2157 = vmatprep.subr.mxu0 0.0
  %2158 = vmatpush2.msra.mxu0 0.0
  %2159 = vmatprep.subr.mxu0 0.0
  %2160 = vmatpush2.msra.mxu0 0.0
  %2161 = vmatprep.subr.mxu0 0.0
  %2162 = vmatpush2.msra.mxu0 0.0
  %2163 = vmatprep.mubr.f32.mxu0 0.0
  %2164 = vmatmul.mubr.f32.gmra.mxu0 %v2097
  %v2165 = vpop.f32.mrf.mxu0
  %v2166 = vadd.f32 %v2091, %v2165
  %v2167 = vpop.f32.mrf.mxu0
  %2168 = vdwg.mxu0
  %v2169 = vadd.f32 %v2166, %v818
  %v2170 = vxor.u32 %v2169, 2147483648
  %v2171 = vmul.f32 %v2170, 1.442695
  %v2172 = vpow.pop %v2171
  %v2173 = vadd.f32 %v2172, 1.0
  %v2174 = vrcp.pop %v2173
  %v2175 = vmul.f32 1.0, %v2174
  %v2176 = vtanh.pop %v2169
  %v2177 = vmul.f32 %v2175, %v1917
  %2179 = vrot.lane.b32.xlu0 %v2176, 64
  %v2180 = vpop.permute.xlu0 %2179
  %v2182 = vmul.f32 %v2175, %v2180
  %2184 = vrot.lane.b32.xlu0 %v2182, 32
  %v2185 = vpop.permute.xlu0 %2184
  %v2187 = vadd.f32 %v2177, %v2185
  %v2188 = vtanh.pop %v2187
  %2190 = vrot.lane.b32.xlu0 %v2188, 64
  %v2191 = vpop.permute.xlu0 %2190
  %v2193 = vmul.f32 %v2175, %v2191
  %2194 = vmatprep.subr.mxu0 0.0
  %2195 = vmatpush1.msra.mxu0 0.0
  %2196 = vmatprep.subr.mxu0 0.0
  %2197 = vmatpush1.msra.mxu0 0.0
  %2198 = vmatprep.subr.mxu0 0.0
  %2199 = vmatpush1.msra.mxu0 0.0
  %2200 = vmatprep.subr.mxu0 0.0
  %2201 = vmatpush1.msra.mxu0 0.0
  %2202 = vmatprep.subr.mxu0 0.0
  %2203 = vmatpush1.msra.mxu0 0.0
  %2204 = vmatprep.subr.mxu0 0.0
  %2205 = vmatpush1.msra.mxu0 0.0
  %2206 = vmatprep.subr.mxu0 0.0
  %2207 = vmatpush1.msra.mxu0 0.0
  %2208 = vmatprep.subr.mxu0 0.0
  %2209 = vmatpush1.msra.mxu0 0.0
  %2210 = vmatprep.subr.mxu0 0.0
  %2211 = vmatpush1.msra.mxu0 0.0
  %2212 = vmatprep.subr.mxu0 0.0
  %2213 = vmatpush1.msra.mxu0 0.0
  %2214 = vmatprep.subr.mxu0 0.0
  %2215 = vmatpush1.msra.mxu0 0.0
  %2216 = vmatprep.subr.mxu0 0.0
  %2217 = vmatpush1.msra.mxu0 0.0
  %2218 = vmatprep.subr.mxu0 0.0
  %2219 = vmatpush1.msra.mxu0 %v563
  %2220 = vmatprep.subr.mxu0 0.0
  %2221 = vmatpush1.msra.mxu0 %v562
  %2222 = vmatprep.subr.mxu0 0.0
  %2223 = vmatpush1.msra.mxu0 %v561
  %2224 = vmatprep.subr.mxu0 0.0
  %2225 = vmatpush1.msra.mxu0 %v560
  %2226 = vmatprep.subr.mxu0 0.0
  %2227 = vmatpush2.msra.mxu0 0.0
  %2228 = vmatprep.subr.mxu0 0.0
  %2229 = vmatpush2.msra.mxu0 0.0
  %2230 = vmatprep.subr.mxu0 0.0
  %2231 = vmatpush2.msra.mxu0 0.0
  %2232 = vmatprep.subr.mxu0 0.0
  %2233 = vmatpush2.msra.mxu0 0.0
  %2234 = vmatprep.subr.mxu0 0.0
  %2235 = vmatpush2.msra.mxu0 0.0
  %2236 = vmatprep.subr.mxu0 0.0
  %2237 = vmatpush2.msra.mxu0 0.0
  %2238 = vmatprep.subr.mxu0 0.0
  %2239 = vmatpush2.msra.mxu0 0.0
  %2240 = vmatprep.subr.mxu0 0.0
  %2241 = vmatpush2.msra.mxu0 0.0
  %2242 = vmatprep.subr.mxu0 0.0
  %2243 = vmatpush2.msra.mxu0 0.0
  %2244 = vmatprep.subr.mxu0 0.0
  %2245 = vmatpush2.msra.mxu0 0.0
  %2246 = vmatprep.subr.mxu0 0.0
  %2247 = vmatpush2.msra.mxu0 0.0
  %2248 = vmatprep.subr.mxu0 0.0
  %2249 = vmatpush2.msra.mxu0 0.0
  %2250 = vmatprep.subr.mxu0 0.0
  %2251 = vmatpush2.msra.mxu0 0.0
  %2252 = vmatprep.subr.mxu0 0.0
  %2253 = vmatpush2.msra.mxu0 0.0
  %2254 = vmatprep.subr.mxu0 0.0
  %2255 = vmatpush2.msra.mxu0 0.0
  %2256 = vmatprep.subr.mxu0 0.0
  %2257 = vmatpush2.msra.mxu0 0.0
  %2258 = vmatprep.mubr.f32.mxu0 0.0
  %2259 = vmatmul.mubr.f32.gmra.mxu0 %v2097
  %v2260 = vpop.f32.mrf.mxu0
  %v2261 = vadd.f32 0.0, %v2260
  %v2262 = vpop.f32.mrf.mxu0
  %2263 = vdwg.mxu0
  %v2264 = vadd.f32 %v558, %v2261
  %v2265 = vxor.u32 %v2264, 2147483648
  %v2266 = vmul.f32 %v2265, 1.442695
  %v2267 = vpow.pop %v2266
  %v2268 = vadd.f32 %v2267, 1.0
  %v2269 = vrcp.pop %v2268
  %v2270 = vmul.f32 1.0, %v2269
  %v2271 = vtanh.pop %v2264
  %v2272 = vmul.f32 %v2270, %v2012
  %2274 = vrot.lane.b32.xlu0 %v2271, 64
  %v2275 = vpop.permute.xlu0 %2274
  %v2277 = vmul.f32 %v2270, %v2275
  %2279 = vrot.lane.b32.xlu0 %v2277, 32
  %v2280 = vpop.permute.xlu0 %2279
  %v2282 = vadd.f32 %v2272, %v2280
  %v2283 = vtanh.pop %v2282
  %2285 = vrot.lane.b32.xlu0 %v2283, 64
  %v2286 = vpop.permute.xlu0 %2285
  %v2288 = vmul.f32 %v2270, %v2286
  %2290 = vrot.lane.b32.xlu0 %v2193, 32
  %v2291 = vpop.permute.xlu0 %2290
  %v2292 = vsel %vm171, %v2291, 0
  %2294 = vmatprep.subr.mxu0 0.0
  %2295 = vmatpush1.msra.mxu0 0.0
  %2296 = vmatprep.subr.mxu0 0.0
  %2297 = vmatpush1.msra.mxu0 0.0
  %2298 = vmatprep.subr.mxu0 0.0
  %2299 = vmatpush1.msra.mxu0 0.0
  %2300 = vmatprep.subr.mxu0 0.0
  %2301 = vmatpush1.msra.mxu0 0.0
  %2302 = vmatprep.subr.mxu0 0.0
  %2303 = vmatpush1.msra.mxu0 0.0
  %2304 = vmatprep.subr.mxu0 0.0
  %2305 = vmatpush1.msra.mxu0 0.0
  %2306 = vmatprep.subr.mxu0 0.0
  %2307 = vmatpush1.msra.mxu0 0.0
  %2308 = vmatprep.subr.mxu0 0.0
  %2309 = vmatpush1.msra.mxu0 0.0
  %2310 = vmatprep.subr.mxu0 0.0
  %2311 = vmatpush1.msra.mxu0 0.0
  %2312 = vmatprep.subr.mxu0 0.0
  %2313 = vmatpush1.msra.mxu0 0.0
  %2314 = vmatprep.subr.mxu0 0.0
  %2315 = vmatpush1.msra.mxu0 0.0
  %2316 = vmatprep.subr.mxu0 0.0
  %2317 = vmatpush1.msra.mxu0 0.0
  %2318 = vmatprep.subr.mxu0 0.0
  %2319 = vmatpush1.msra.mxu0 %v571
  %2320 = vmatprep.subr.mxu0 0.0
  %2321 = vmatpush1.msra.mxu0 %v570
  %2322 = vmatprep.subr.mxu0 0.0
  %2323 = vmatpush1.msra.mxu0 %v569
  %2324 = vmatprep.subr.mxu0 0.0
  %2325 = vmatpush1.msra.mxu0 %v568
  %2326 = vmatprep.subr.mxu0 0.0
  %2327 = vmatpush2.msra.mxu0 0.0
  %2328 = vmatprep.subr.mxu0 0.0
  %2329 = vmatpush2.msra.mxu0 0.0
  %2330 = vmatprep.subr.mxu0 0.0
  %2331 = vmatpush2.msra.mxu0 0.0
  %2332 = vmatprep.subr.mxu0 0.0
  %2333 = vmatpush2.msra.mxu0 0.0
  %2334 = vmatprep.subr.mxu0 0.0
  %2335 = vmatpush2.msra.mxu0 0.0
  %2336 = vmatprep.subr.mxu0 0.0
  %2337 = vmatpush2.msra.mxu0 0.0
  %2338 = vmatprep.subr.mxu0 0.0
  %2339 = vmatpush2.msra.mxu0 0.0
  %2340 = vmatprep.subr.mxu0 0.0
  %2341 = vmatpush2.msra.mxu0 0.0
  %2342 = vmatprep.subr.mxu0 0.0
  %2343 = vmatpush2.msra.mxu0 0.0
  %2344 = vmatprep.subr.mxu0 0.0
  %2345 = vmatpush2.msra.mxu0 0.0
  %2346 = vmatprep.subr.mxu0 0.0
  %2347 = vmatpush2.msra.mxu0 0.0
  %2348 = vmatprep.subr.mxu0 0.0
  %2349 = vmatpush2.msra.mxu0 0.0
  %2350 = vmatprep.subr.mxu0 0.0
  %2351 = vmatpush2.msra.mxu0 0.0
  %2352 = vmatprep.subr.mxu0 0.0
  %2353 = vmatpush2.msra.mxu0 0.0
  %2354 = vmatprep.subr.mxu0 0.0
  %2355 = vmatpush2.msra.mxu0 0.0
  %2356 = vmatprep.subr.mxu0 0.0
  %2357 = vmatpush2.msra.mxu0 0.0
  %2358 = vmatprep.mubr.f32.mxu0 0.0
  %2359 = vmatmul.mubr.f32.gmra.mxu0 %v2292
  %v2360 = vpop.f32.mrf.mxu0
  %v2361 = vadd.f32 0.0, %v2360
  %v2362 = vpop.f32.mrf.mxu0
  %2363 = vdwg.mxu0
  %2365 = vrot.lane.b32.xlu0 %v2288, 32
  %v2366 = vpop.permute.xlu0 %2365
  %v2367 = vsel %vm171, %v2366, 0
  %2369 = vmatprep.subr.mxu0 0.0
  %2370 = vmatpush1.msra.mxu0 0.0
  %2371 = vmatprep.subr.mxu0 0.0
  %2372 = vmatpush1.msra.mxu0 0.0
  %2373 = vmatprep.subr.mxu0 0.0
  %2374 = vmatpush1.msra.mxu0 0.0
  %2375 = vmatprep.subr.mxu0 0.0
  %2376 = vmatpush1.msra.mxu0 0.0
  %2377 = vmatprep.subr.mxu0 0.0
  %2378 = vmatpush1.msra.mxu0 0.0
  %2379 = vmatprep.subr.mxu0 0.0
  %2380 = vmatpush1.msra.mxu0 0.0
  %2381 = vmatprep.subr.mxu0 0.0
  %2382 = vmatpush1.msra.mxu0 0.0
  %2383 = vmatprep.subr.mxu0 0.0
  %2384 = vmatpush1.msra.mxu0 0.0
  %2385 = vmatprep.subr.mxu0 0.0
  %2386 = vmatpush1.msra.mxu0 0.0
  %2387 = vmatprep.subr.mxu0 0.0
  %2388 = vmatpush1.msra.mxu0 0.0
  %2389 = vmatprep.subr.mxu0 0.0
  %2390 = vmatpush1.msra.mxu0 0.0
  %2391 = vmatprep.subr.mxu0 0.0
  %2392 = vmatpush1.msra.mxu0 0.0
  %2393 = vmatprep.subr.mxu0 0.0
  %2394 = vmatpush1.msra.mxu0 %v567
  %2395 = vmatprep.subr.mxu0 0.0
  %2396 = vmatpush1.msra.mxu0 %v566
  %2397 = vmatprep.subr.mxu0 0.0
  %2398 = vmatpush1.msra.mxu0 %v565
  %2399 = vmatprep.subr.mxu0 0.0
  %2400 = vmatpush1.msra.mxu0 %v564
  %2401 = vmatprep.subr.mxu0 0.0
  %2402 = vmatpush2.msra.mxu0 0.0
  %2403 = vmatprep.subr.mxu0 0.0
  %2404 = vmatpush2.msra.mxu0 0.0
  %2405 = vmatprep.subr.mxu0 0.0
  %2406 = vmatpush2.msra.mxu0 0.0
  %2407 = vmatprep.subr.mxu0 0.0
  %2408 = vmatpush2.msra.mxu0 0.0
  %2409 = vmatprep.subr.mxu0 0.0
  %2410 = vmatpush2.msra.mxu0 0.0
  %2411 = vmatprep.subr.mxu0 0.0
  %2412 = vmatpush2.msra.mxu0 0.0
  %2413 = vmatprep.subr.mxu0 0.0
  %2414 = vmatpush2.msra.mxu0 0.0
  %2415 = vmatprep.subr.mxu0 0.0
  %2416 = vmatpush2.msra.mxu0 0.0
  %2417 = vmatprep.subr.mxu0 0.0
  %2418 = vmatpush2.msra.mxu0 0.0
  %2419 = vmatprep.subr.mxu0 0.0
  %2420 = vmatpush2.msra.mxu0 0.0
  %2421 = vmatprep.subr.mxu0 0.0
  %2422 = vmatpush2.msra.mxu0 0.0
  %2423 = vmatprep.subr.mxu0 0.0
  %2424 = vmatpush2.msra.mxu0 0.0
  %2425 = vmatprep.subr.mxu0 0.0
  %2426 = vmatpush2.msra.mxu0 0.0
  %2427 = vmatprep.subr.mxu0 0.0
  %2428 = vmatpush2.msra.mxu0 0.0
  %2429 = vmatprep.subr.mxu0 0.0
  %2430 = vmatpush2.msra.mxu0 0.0
  %2431 = vmatprep.subr.mxu0 0.0
  %2432 = vmatpush2.msra.mxu0 0.0
  %2433 = vmatprep.mubr.f32.mxu0 0.0
  %2434 = vmatmul.mubr.f32.gmra.mxu0 %v2367
  %v2435 = vpop.f32.mrf.mxu0
  %v2436 = vadd.f32 %v2361, %v2435
  %v2437 = vpop.f32.mrf.mxu0
  %2438 = vdwg.mxu0
  %v2439 = vadd.f32 %v2436, %v818
  %v2440 = vxor.u32 %v2439, 2147483648
  %v2441 = vmul.f32 %v2440, 1.442695
  %v2442 = vpow.pop %v2441
  %v2443 = vadd.f32 %v2442, 1.0
  %v2444 = vrcp.pop %v2443
  %v2445 = vmul.f32 1.0, %v2444
  %v2446 = vtanh.pop %v2439
  %v2447 = vmul.f32 %v2445, %v2187
  %2449 = vrot.lane.b32.xlu0 %v2446, 64
  %v2450 = vpop.permute.xlu0 %2449
  %v2452 = vmul.f32 %v2445, %v2450
  %2454 = vrot.lane.b32.xlu0 %v2452, 32
  %v2455 = vpop.permute.xlu0 %2454
  %v2457 = vadd.f32 %v2447, %v2455
  %v2458 = vtanh.pop %v2457
  %2460 = vrot.lane.b32.xlu0 %v2458, 64
  %v2461 = vpop.permute.xlu0 %2460
  %v2463 = vmul.f32 %v2445, %v2461
  %2464 = vmatprep.subr.mxu0 0.0
  %2465 = vmatpush1.msra.mxu0 0.0
  %2466 = vmatprep.subr.mxu0 0.0
  %2467 = vmatpush1.msra.mxu0 0.0
  %2468 = vmatprep.subr.mxu0 0.0
  %2469 = vmatpush1.msra.mxu0 0.0
  %2470 = vmatprep.subr.mxu0 0.0
  %2471 = vmatpush1.msra.mxu0 0.0
  %2472 = vmatprep.subr.mxu0 0.0
  %2473 = vmatpush1.msra.mxu0 0.0
  %2474 = vmatprep.subr.mxu0 0.0
  %2475 = vmatpush1.msra.mxu0 0.0
  %2476 = vmatprep.subr.mxu0 0.0
  %2477 = vmatpush1.msra.mxu0 0.0
  %2478 = vmatprep.subr.mxu0 0.0
  %2479 = vmatpush1.msra.mxu0 0.0
  %2480 = vmatprep.subr.mxu0 0.0
  %2481 = vmatpush1.msra.mxu0 0.0
  %2482 = vmatprep.subr.mxu0 0.0
  %2483 = vmatpush1.msra.mxu0 0.0
  %2484 = vmatprep.subr.mxu0 0.0
  %2485 = vmatpush1.msra.mxu0 0.0
  %2486 = vmatprep.subr.mxu0 0.0
  %2487 = vmatpush1.msra.mxu0 0.0
  %2488 = vmatprep.subr.mxu0 0.0
  %2489 = vmatpush1.msra.mxu0 %v563
  %2490 = vmatprep.subr.mxu0 0.0
  %2491 = vmatpush1.msra.mxu0 %v562
  %2492 = vmatprep.subr.mxu0 0.0
  %2493 = vmatpush1.msra.mxu0 %v561
  %2494 = vmatprep.subr.mxu0 0.0
  %2495 = vmatpush1.msra.mxu0 %v560
  %2496 = vmatprep.subr.mxu0 0.0
  %2497 = vmatpush2.msra.mxu0 0.0
  %2498 = vmatprep.subr.mxu0 0.0
  %2499 = vmatpush2.msra.mxu0 0.0
  %2500 = vmatprep.subr.mxu0 0.0
  %2501 = vmatpush2.msra.mxu0 0.0
  %2502 = vmatprep.subr.mxu0 0.0
  %2503 = vmatpush2.msra.mxu0 0.0
  %2504 = vmatprep.subr.mxu0 0.0
  %2505 = vmatpush2.msra.mxu0 0.0
  %2506 = vmatprep.subr.mxu0 0.0
  %2507 = vmatpush2.msra.mxu0 0.0
  %2508 = vmatprep.subr.mxu0 0.0
  %2509 = vmatpush2.msra.mxu0 0.0
  %2510 = vmatprep.subr.mxu0 0.0
  %2511 = vmatpush2.msra.mxu0 0.0
  %2512 = vmatprep.subr.mxu0 0.0
  %2513 = vmatpush2.msra.mxu0 0.0
  %2514 = vmatprep.subr.mxu0 0.0
  %2515 = vmatpush2.msra.mxu0 0.0
  %2516 = vmatprep.subr.mxu0 0.0
  %2517 = vmatpush2.msra.mxu0 0.0
  %2518 = vmatprep.subr.mxu0 0.0
  %2519 = vmatpush2.msra.mxu0 0.0
  %2520 = vmatprep.subr.mxu0 0.0
  %2521 = vmatpush2.msra.mxu0 0.0
  %2522 = vmatprep.subr.mxu0 0.0
  %2523 = vmatpush2.msra.mxu0 0.0
  %2524 = vmatprep.subr.mxu0 0.0
  %2525 = vmatpush2.msra.mxu0 0.0
  %2526 = vmatprep.subr.mxu0 0.0
  %2527 = vmatpush2.msra.mxu0 0.0
  %2528 = vmatprep.mubr.f32.mxu0 0.0
  %2529 = vmatmul.mubr.f32.gmra.mxu0 %v2367
  %v2530 = vpop.f32.mrf.mxu0
  %v2531 = vadd.f32 0.0, %v2530
  %v2532 = vpop.f32.mrf.mxu0
  %2533 = vdwg.mxu0
  %v2534 = vadd.f32 %v559, %v2531
  %v2535 = vxor.u32 %v2534, 2147483648
  %v2536 = vmul.f32 %v2535, 1.442695
  %v2537 = vpow.pop %v2536
  %v2538 = vadd.f32 %v2537, 1.0
  %v2539 = vrcp.pop %v2538
  %v2540 = vmul.f32 1.0, %v2539
  %v2541 = vtanh.pop %v2534
  %v2542 = vmul.f32 %v2540, %v2282
  %2544 = vrot.lane.b32.xlu0 %v2541, 64
  %v2545 = vpop.permute.xlu0 %2544
  %v2547 = vmul.f32 %v2540, %v2545
  %2549 = vrot.lane.b32.xlu0 %v2547, 32
  %v2550 = vpop.permute.xlu0 %2549
  %v2552 = vadd.f32 %v2542, %v2550
  %v2553 = vtanh.pop %v2552
  %2555 = vrot.lane.b32.xlu0 %v2553, 64
  %v2556 = vpop.permute.xlu0 %2555
  %v2558 = vmul.f32 %v2540, %v2556
  %2560 = vrot.lane.b32.xlu0 %v2463, 32
  %v2561 = vpop.permute.xlu0 %2560
  %v2562 = vsel %vm171, %v2561, 0
  %2564 = vmatprep.subr.mxu0 0.0
  %2565 = vmatpush1.msra.mxu0 0.0
  %2566 = vmatprep.subr.mxu0 0.0
  %2567 = vmatpush1.msra.mxu0 0.0
  %2568 = vmatprep.subr.mxu0 0.0
  %2569 = vmatpush1.msra.mxu0 0.0
  %2570 = vmatprep.subr.mxu0 0.0
  %2571 = vmatpush1.msra.mxu0 0.0
  %2572 = vmatprep.subr.mxu0 0.0
  %2573 = vmatpush1.msra.mxu0 0.0
  %2574 = vmatprep.subr.mxu0 0.0
  %2575 = vmatpush1.msra.mxu0 0.0
  %2576 = vmatprep.subr.mxu0 0.0
  %2577 = vmatpush1.msra.mxu0 0.0
  %2578 = vmatprep.subr.mxu0 0.0
  %2579 = vmatpush1.msra.mxu0 0.0
  %2580 = vmatprep.subr.mxu0 0.0
  %2581 = vmatpush1.msra.mxu0 0.0
  %2582 = vmatprep.subr.mxu0 0.0
  %2583 = vmatpush1.msra.mxu0 0.0
  %2584 = vmatprep.subr.mxu0 0.0
  %2585 = vmatpush1.msra.mxu0 0.0
  %2586 = vmatprep.subr.mxu0 0.0
  %2587 = vmatpush1.msra.mxu0 0.0
  %2588 = vmatprep.subr.mxu0 0.0
  %2589 = vmatpush1.msra.mxu0 %v571
  %2590 = vmatprep.subr.mxu0 0.0
  %2591 = vmatpush1.msra.mxu0 %v570
  %2592 = vmatprep.subr.mxu0 0.0
  %2593 = vmatpush1.msra.mxu0 %v569
  %2594 = vmatprep.subr.mxu0 0.0
  %2595 = vmatpush1.msra.mxu0 %v568
  %2596 = vmatprep.subr.mxu0 0.0
  %2597 = vmatpush2.msra.mxu0 0.0
  %2598 = vmatprep.subr.mxu0 0.0
  %2599 = vmatpush2.msra.mxu0 0.0
  %2600 = vmatprep.subr.mxu0 0.0
  %2601 = vmatpush2.msra.mxu0 0.0
  %2602 = vmatprep.subr.mxu0 0.0
  %2603 = vmatpush2.msra.mxu0 0.0
  %2604 = vmatprep.subr.mxu0 0.0
  %2605 = vmatpush2.msra.mxu0 0.0
  %2606 = vmatprep.subr.mxu0 0.0
  %2607 = vmatpush2.msra.mxu0 0.0
  %2608 = vmatprep.subr.mxu0 0.0
  %2609 = vmatpush2.msra.mxu0 0.0
  %2610 = vmatprep.subr.mxu0 0.0
  %2611 = vmatpush2.msra.mxu0 0.0
  %2612 = vmatprep.subr.mxu0 0.0
  %2613 = vmatpush2.msra.mxu0 0.0
  %2614 = vmatprep.subr.mxu0 0.0
  %2615 = vmatpush2.msra.mxu0 0.0
  %2616 = vmatprep.subr.mxu0 0.0
  %2617 = vmatpush2.msra.mxu0 0.0
  %2618 = vmatprep.subr.mxu0 0.0
  %2619 = vmatpush2.msra.mxu0 0.0
  %2620 = vmatprep.subr.mxu0 0.0
  %2621 = vmatpush2.msra.mxu0 0.0
  %2622 = vmatprep.subr.mxu0 0.0
  %2623 = vmatpush2.msra.mxu0 0.0
  %2624 = vmatprep.subr.mxu0 0.0
  %2625 = vmatpush2.msra.mxu0 0.0
  %2626 = vmatprep.subr.mxu0 0.0
  %2627 = vmatpush2.msra.mxu0 0.0
  %2628 = vmatprep.mubr.f32.mxu0 0.0
  %2629 = vmatmul.mubr.f32.gmra.mxu0 %v2562
  %v2630 = vpop.f32.mrf.mxu0
  %v2631 = vadd.f32 0.0, %v2630
  %v2632 = vpop.f32.mrf.mxu0
  %2633 = vdwg.mxu0
  %2635 = vrot.lane.b32.xlu0 %v2558, 32
  %v2636 = vpop.permute.xlu0 %2635
  %v2637 = vsel %vm171, %v2636, 0
  %2639 = vmatprep.subr.mxu0 0.0
  %2640 = vmatpush1.msra.mxu0 0.0
  %2641 = vmatprep.subr.mxu0 0.0
  %2642 = vmatpush1.msra.mxu0 0.0
  %2643 = vmatprep.subr.mxu0 0.0
  %2644 = vmatpush1.msra.mxu0 0.0
  %2645 = vmatprep.subr.mxu0 0.0
  %2646 = vmatpush1.msra.mxu0 0.0
  %2647 = vmatprep.subr.mxu0 0.0
  %2648 = vmatpush1.msra.mxu0 0.0
  %2649 = vmatprep.subr.mxu0 0.0
  %2650 = vmatpush1.msra.mxu0 0.0
  %2651 = vmatprep.subr.mxu0 0.0
  %2652 = vmatpush1.msra.mxu0 0.0
  %2653 = vmatprep.subr.mxu0 0.0
  %2654 = vmatpush1.msra.mxu0 0.0
  %2655 = vmatprep.subr.mxu0 0.0
  %2656 = vmatpush1.msra.mxu0 0.0
  %2657 = vmatprep.subr.mxu0 0.0
  %2658 = vmatpush1.msra.mxu0 0.0
  %2659 = vmatprep.subr.mxu0 0.0
  %2660 = vmatpush1.msra.mxu0 0.0
  %2661 = vmatprep.subr.mxu0 0.0
  %2662 = vmatpush1.msra.mxu0 0.0
  %2663 = vmatprep.subr.mxu0 0.0
  %2664 = vmatpush1.msra.mxu0 %v567
  %2665 = vmatprep.subr.mxu0 0.0
  %2666 = vmatpush1.msra.mxu0 %v566
  %2667 = vmatprep.subr.mxu0 0.0
  %2668 = vmatpush1.msra.mxu0 %v565
  %2669 = vmatprep.subr.mxu0 0.0
  %2670 = vmatpush1.msra.mxu0 %v564
  %2671 = vmatprep.subr.mxu0 0.0
  %2672 = vmatpush2.msra.mxu0 0.0
  %2673 = vmatprep.subr.mxu0 0.0
  %2674 = vmatpush2.msra.mxu0 0.0
  %2675 = vmatprep.subr.mxu0 0.0
  %2676 = vmatpush2.msra.mxu0 0.0
  %2677 = vmatprep.subr.mxu0 0.0
  %2678 = vmatpush2.msra.mxu0 0.0
  %2679 = vmatprep.subr.mxu0 0.0
  %2680 = vmatpush2.msra.mxu0 0.0
  %2681 = vmatprep.subr.mxu0 0.0
  %2682 = vmatpush2.msra.mxu0 0.0
  %2683 = vmatprep.subr.mxu0 0.0
  %2684 = vmatpush2.msra.mxu0 0.0
  %2685 = vmatprep.subr.mxu0 0.0
  %2686 = vmatpush2.msra.mxu0 0.0
  %2687 = vmatprep.subr.mxu0 0.0
  %2688 = vmatpush2.msra.mxu0 0.0
  %2689 = vmatprep.subr.mxu0 0.0
  %2690 = vmatpush2.msra.mxu0 0.0
  %2691 = vmatprep.subr.mxu0 0.0
  %2692 = vmatpush2.msra.mxu0 0.0
  %2693 = vmatprep.subr.mxu0 0.0
  %2694 = vmatpush2.msra.mxu0 0.0
  %2695 = vmatprep.subr.mxu0 0.0
  %2696 = vmatpush2.msra.mxu0 0.0
  %2697 = vmatprep.subr.mxu0 0.0
  %2698 = vmatpush2.msra.mxu0 0.0
  %2699 = vmatprep.subr.mxu0 0.0
  %2700 = vmatpush2.msra.mxu0 0.0
  %2701 = vmatprep.subr.mxu0 0.0
  %2702 = vmatpush2.msra.mxu0 0.0
  %2703 = vmatprep.mubr.f32.mxu0 0.0
  %2704 = vmatmul.mubr.f32.gmra.mxu0 %v2637
  %v2705 = vpop.f32.mrf.mxu0
  %v2706 = vadd.f32 %v2631, %v2705
  %v2707 = vpop.f32.mrf.mxu0
  %2708 = vdwg.mxu0
  %v2709 = vadd.f32 %v2706, %v818
  %v2710 = vxor.u32 %v2709, 2147483648
  %v2711 = vmul.f32 %v2710, 1.442695
  %v2712 = vpow.pop %v2711
  %v2713 = vadd.f32 %v2712, 1.0
  %v2714 = vrcp.pop %v2713
  %v2715 = vmul.f32 1.0, %v2714
  %v2716 = vtanh.pop %v2709
  %v2717 = vmul.f32 %v2715, %v2457
  %2719 = vrot.lane.b32.xlu0 %v2716, 64
  %v2720 = vpop.permute.xlu0 %2719
  %v2722 = vmul.f32 %v2715, %v2720
  %2724 = vrot.lane.b32.xlu0 %v2722, 32
  %v2725 = vpop.permute.xlu0 %2724
  %v2727 = vadd.f32 %v2717, %v2725
  %v2728 = vtanh.pop %v2727
  %2730 = vrot.lane.b32.xlu0 %v2728, 64
  %v2731 = vpop.permute.xlu0 %2730
  %v2733 = vmul.f32 %v2715, %v2731
  %2735 = vrot.lane.b32.xlu0 %v2733, 32
  %v2736 = vpop.permute.xlu0 %2735
  %v2745 = vsel %vm171, %v941, 0.0
  %2746 = vadd.xlane.f32.xlu0 %v2745
  %v2747 = vpop.xlane.xlu0 %2746
  %v2748 = vsel %vm171, %v1211, 0.0
  %2749 = vadd.xlane.f32.xlu0 %v2748
  %v2750 = vpop.xlane.xlu0 %2749
  %v2751 = vsel %vm171, %v1481, 0.0
  %2752 = vadd.xlane.f32.xlu0 %v2751
  %v2753 = vpop.xlane.xlu0 %2752
  %v2754 = vsel %vm171, %v1751, 0.0
  %2755 = vadd.xlane.f32.xlu0 %v2754
  %v2756 = vpop.xlane.xlu0 %2755
  %v2757 = vsel %vm171, %v2021, 0.0
  %2758 = vadd.xlane.f32.xlu0 %v2757
  %v2759 = vpop.xlane.xlu0 %2758
  %v2760 = vsel %vm171, %v2291, 0.0
  %2761 = vadd.xlane.f32.xlu0 %v2760
  %v2762 = vpop.xlane.xlu0 %2761
  %v2763 = vsel %vm171, %v2561, 0.0
  %2764 = vadd.xlane.f32.xlu0 %v2763
  %v2765 = vpop.xlane.xlu0 %2764
  %v2766 = vsel %vm171, %v2736, 0.0
  %2767 = vadd.xlane.f32.xlu0 %v2766
  %v2768 = vpop.xlane.xlu0 %2767
  %v2769 = vmul.f32 %v2747, %v196
  %v2770 = vmul.f32 %v2750, %v196
  %v2771 = vmul.f32 %v2753, %v196
  %v2772 = vmul.f32 %v2756, %v196
  %v2773 = vmul.f32 %v2759, %v196
  %v2774 = vmul.f32 %v2762, %v196
  %v2775 = vmul.f32 %v2765, %v196
  %v2776 = vmul.f32 %v2768, %v196
  %v2777 = vsub.f32 %v843, %v2769
  %v2778 = vsub.f32 %v1113, %v2770
  %v2779 = vsub.f32 %v1383, %v2771
  %v2780 = vsub.f32 %v1653, %v2772
  %v2781 = vsub.f32 %v1923, %v2773
  %v2782 = vsub.f32 %v2193, %v2774
  %v2783 = vsub.f32 %v2463, %v2775
  %v2784 = vsub.f32 %v2733, %v2776
  %v2785 = vmul.f32 %v2777, %v2777
  %v2786 = vmul.f32 %v2778, %v2778
  %v2787 = vmul.f32 %v2779, %v2779
  %v2788 = vmul.f32 %v2780, %v2780
  %v2789 = vmul.f32 %v2781, %v2781
  %v2790 = vmul.f32 %v2782, %v2782
  %v2791 = vmul.f32 %v2783, %v2783
  %v2792 = vmul.f32 %v2784, %v2784
  %2801 = vrot.lane.b32.xlu0 %v2785, 32
  %v2802 = vpop.permute.xlu0 %2801
  %2803 = vrot.lane.b32.xlu0 %v2786, 32
  %v2804 = vpop.permute.xlu0 %2803
  %2805 = vrot.lane.b32.xlu0 %v2787, 32
  %v2806 = vpop.permute.xlu0 %2805
  %2807 = vrot.lane.b32.xlu0 %v2788, 32
  %v2808 = vpop.permute.xlu0 %2807
  %2809 = vrot.lane.b32.xlu0 %v2789, 32
  %v2810 = vpop.permute.xlu0 %2809
  %2811 = vrot.lane.b32.xlu0 %v2790, 32
  %v2812 = vpop.permute.xlu0 %2811
  %2813 = vrot.lane.b32.xlu0 %v2791, 32
  %v2814 = vpop.permute.xlu0 %2813
  %2815 = vrot.lane.b32.xlu0 %v2792, 32
  %v2816 = vpop.permute.xlu0 %2815
  %v2825 = vsel %vm171, %v2802, 0.0
  %2826 = vadd.xlane.f32.xlu0 %v2825
  %v2827 = vpop.xlane.xlu0 %2826
  %v2828 = vsel %vm171, %v2804, 0.0
  %2829 = vadd.xlane.f32.xlu0 %v2828
  %v2830 = vpop.xlane.xlu0 %2829
  %v2831 = vsel %vm171, %v2806, 0.0
  %2832 = vadd.xlane.f32.xlu0 %v2831
  %v2833 = vpop.xlane.xlu0 %2832
  %v2834 = vsel %vm171, %v2808, 0.0
  %2835 = vadd.xlane.f32.xlu0 %v2834
  %v2836 = vpop.xlane.xlu0 %2835
  %v2837 = vsel %vm171, %v2810, 0.0
  %2838 = vadd.xlane.f32.xlu0 %v2837
  %v2839 = vpop.xlane.xlu0 %2838
  %v2840 = vsel %vm171, %v2812, 0.0
  %2841 = vadd.xlane.f32.xlu0 %v2840
  %v2842 = vpop.xlane.xlu0 %2841
  %v2843 = vsel %vm171, %v2814, 0.0
  %2844 = vadd.xlane.f32.xlu0 %v2843
  %v2845 = vpop.xlane.xlu0 %2844
  %v2846 = vsel %vm171, %v2816, 0.0
  %2847 = vadd.xlane.f32.xlu0 %v2846
  %v2848 = vpop.xlane.xlu0 %2847
  %v2849 = vmul.f32 %v2827, %v196
  %v2850 = vmul.f32 %v2830, %v196
  %v2851 = vmul.f32 %v2833, %v196
  %v2852 = vmul.f32 %v2836, %v196
  %v2853 = vmul.f32 %v2839, %v196
  %v2854 = vmul.f32 %v2842, %v196
  %v2855 = vmul.f32 %v2845, %v196
  %v2856 = vmul.f32 %v2848, %v196
  %v2857 = vadd.f32 %v2849, 1e-05
  %v2858 = vadd.f32 %v2850, 1e-05
  %v2859 = vadd.f32 %v2851, 1e-05
  %v2860 = vadd.f32 %v2852, 1e-05
  %v2861 = vadd.f32 %v2853, 1e-05
  %v2862 = vadd.f32 %v2854, 1e-05
  %v2863 = vadd.f32 %v2855, 1e-05
  %v2864 = vadd.f32 %v2856, 1e-05
  %v2865 = vrsqrt.pop %v2857
  %v2866 = vrsqrt.pop %v2858
  %v2867 = vrsqrt.pop %v2859
  %v2868 = vrsqrt.pop %v2860
  %v2869 = vrsqrt.pop %v2861
  %v2870 = vrsqrt.pop %v2862
  %v2871 = vrsqrt.pop %v2863
  %v2872 = vrsqrt.pop %v2864
  %v2873 = vmul.f32 %v2777, %v2865
  %v2874 = vmul.f32 %v2778, %v2866
  %v2875 = vmul.f32 %v2779, %v2867
  %v2876 = vmul.f32 %v2780, %v2868
  %v2877 = vmul.f32 %v2781, %v2869
  %v2878 = vmul.f32 %v2782, %v2870
  %v2879 = vmul.f32 %v2783, %v2871
  %v2880 = vmul.f32 %v2784, %v2872
  %v2881 = vlaneseq
  %v2882 = vshrl.u32 %v2881, 7
  %v2883 = vsub.s32 0, %v2882
  %v2884 = vrot.slane %v32, %v2883
  %2886 = vrot.lane.b32.xlu0 %v2884, 96
  %v2887 = vpop.permute.xlu0 %2886
  %v2889 = vmul.f32 %v2873, %v2887
  %v2890 = vmul.f32 %v2874, %v2887
  %v2891 = vmul.f32 %v2875, %v2887
  %v2892 = vmul.f32 %v2876, %v2887
  %v2893 = vmul.f32 %v2877, %v2887
  %v2894 = vmul.f32 %v2878, %v2887
  %v2895 = vmul.f32 %v2879, %v2887
  %v2896 = vmul.f32 %v2880, %v2887
  %v2897 = vlaneseq
  %v2898 = vshrl.u32 %v2897, 7
  %v2899 = vsub.s32 0, %v2898
  %v2900 = vrot.slane %v33, %v2899
  %2902 = vrot.lane.b32.xlu0 %v2900, 96
  %v2903 = vpop.permute.xlu0 %2902
  %v2905 = vadd.f32 %v2889, %v2903
  %v2906 = vadd.f32 %v2890, %v2903
  %v2907 = vadd.f32 %v2891, %v2903
  %v2908 = vadd.f32 %v2892, %v2903
  %v2909 = vadd.f32 %v2893, %v2903
  %v2910 = vadd.f32 %v2894, %v2903
  %v2911 = vadd.f32 %v2895, %v2903
  %v2912 = vadd.f32 %v2896, %v2903
  %v2913 = vld [vmem:[%s2 + $0x8] sm:$0xff]
  %v2914 = vld [vmem:[%s2 + $0x10] sm:$0xff]
  %v2915 = vld [vmem:[%s2 + $0x18] sm:$0xff]
  %v2916 = vld [vmem:[%s2 + $0x20] sm:$0xff]
  %v2917 = vlaneseq
  %v2918 = vshrl.u32 %v2917, 7
  %v2919 = vsub.s32 0, %v2918
  %v2920 = vrot.slane %v34, %v2919
  %2929 = vrot.lane.b32.xlu0 %v2905, 32
  %v2930 = vpop.permute.xlu0 %2929
  %2931 = vrot.lane.b32.xlu0 %v2906, 32
  %v2932 = vpop.permute.xlu0 %2931
  %2933 = vrot.lane.b32.xlu0 %v2907, 32
  %v2934 = vpop.permute.xlu0 %2933
  %2935 = vrot.lane.b32.xlu0 %v2908, 32
  %v2936 = vpop.permute.xlu0 %2935
  %2937 = vrot.lane.b32.xlu0 %v2909, 32
  %v2938 = vpop.permute.xlu0 %2937
  %2939 = vrot.lane.b32.xlu0 %v2910, 32
  %v2940 = vpop.permute.xlu0 %2939
  %2941 = vrot.lane.b32.xlu0 %v2911, 32
  %v2942 = vpop.permute.xlu0 %2941
  %2943 = vrot.lane.b32.xlu0 %v2912, 32
  %v2944 = vpop.permute.xlu0 %2943
  %v2945 = vsel %vm171, %v2930, 0
  %v2947 = vsel %vm171, %v2932, 0
  %v2949 = vsel %vm171, %v2934, 0
  %v2951 = vsel %vm171, %v2936, 0
  %v2953 = vsel %vm171, %v2938, 0
  %v2955 = vsel %vm171, %v2940, 0
  %v2957 = vsel %vm171, %v2942, 0
  %v2959 = vsel %vm171, %v2944, 0
  %2961 = vmatprep.subr.mxu0 0.0
  %2962 = vmatpush1.msra.mxu0 0.0
  %2963 = vmatprep.subr.mxu0 0.0
  %2964 = vmatpush1.msra.mxu0 0.0
  %2965 = vmatprep.subr.mxu0 0.0
  %2966 = vmatpush1.msra.mxu0 0.0
  %2967 = vmatprep.subr.mxu0 0.0
  %2968 = vmatpush1.msra.mxu0 0.0
  %2969 = vmatprep.subr.mxu0 0.0
  %2970 = vmatpush1.msra.mxu0 0.0
  %2971 = vmatprep.subr.mxu0 0.0
  %2972 = vmatpush1.msra.mxu0 0.0
  %2973 = vmatprep.subr.mxu0 0.0
  %2974 = vmatpush1.msra.mxu0 0.0
  %2975 = vmatprep.subr.mxu0 0.0
  %2976 = vmatpush1.msra.mxu0 0.0
  %2977 = vmatprep.subr.mxu0 0.0
  %2978 = vmatpush1.msra.mxu0 0.0
  %2979 = vmatprep.subr.mxu0 0.0
  %2980 = vmatpush1.msra.mxu0 0.0
  %2981 = vmatprep.subr.mxu0 0.0
  %2982 = vmatpush1.msra.mxu0 0.0
  %2983 = vmatprep.subr.mxu0 0.0
  %2984 = vmatpush1.msra.mxu0 0.0
  %2985 = vmatprep.subr.mxu0 0.0
  %2986 = vmatpush1.msra.mxu0 %v2916
  %2987 = vmatprep.subr.mxu0 0.0
  %2988 = vmatpush1.msra.mxu0 %v2915
  %2989 = vmatprep.subr.mxu0 0.0
  %2990 = vmatpush1.msra.mxu0 %v2914
  %2991 = vmatprep.subr.mxu0 0.0
  %2992 = vmatpush1.msra.mxu0 %v2913
  %2993 = vmatprep.subr.mxu0 0.0
  %2994 = vmatpush2.msra.mxu0 0.0
  %2995 = vmatprep.subr.mxu0 0.0
  %2996 = vmatpush2.msra.mxu0 0.0
  %2997 = vmatprep.subr.mxu0 0.0
  %2998 = vmatpush2.msra.mxu0 0.0
  %2999 = vmatprep.subr.mxu0 0.0
  %3000 = vmatpush2.msra.mxu0 0.0
  %3001 = vmatprep.subr.mxu0 0.0
  %3002 = vmatpush2.msra.mxu0 0.0
  %3003 = vmatprep.subr.mxu0 0.0
  %3004 = vmatpush2.msra.mxu0 0.0
  %3005 = vmatprep.subr.mxu0 0.0
  %3006 = vmatpush2.msra.mxu0 0.0
  %3007 = vmatprep.subr.mxu0 0.0
  %3008 = vmatpush2.msra.mxu0 0.0
  %3009 = vmatprep.subr.mxu0 0.0
  %3010 = vmatpush2.msra.mxu0 0.0
  %3011 = vmatprep.subr.mxu0 0.0
  %3012 = vmatpush2.msra.mxu0 0.0
  %3013 = vmatprep.subr.mxu0 0.0
  %3014 = vmatpush2.msra.mxu0 0.0
  %3015 = vmatprep.subr.mxu0 0.0
  %3016 = vmatpush2.msra.mxu0 0.0
  %3017 = vmatprep.subr.mxu0 0.0
  %3018 = vmatpush2.msra.mxu0 0.0
  %3019 = vmatprep.subr.mxu0 0.0
  %3020 = vmatpush2.msra.mxu0 0.0
  %3021 = vmatprep.subr.mxu0 0.0
  %3022 = vmatpush2.msra.mxu0 0.0
  %3023 = vmatprep.subr.mxu0 0.0
  %3024 = vmatpush2.msra.mxu0 0.0
  %3025 = vmatprep.mubr.f32.mxu0 0.0
  %3026 = vmatmul.mubr.f32.gmra.mxu0 %v2945
  %v3027 = vpop.f32.mrf.mxu0
  %v3028 = vadd.f32 %v2920, %v3027
  %v3029 = vpop.f32.mrf.mxu0
  %3030 = vmatprep.mubr.f32.mxu0 0.0
  %3031 = vmatmul.mubr.f32.gmra.mxu0 %v2947
  %v3032 = vpop.f32.mrf.mxu0
  %v3033 = vadd.f32 %v2920, %v3032
  %v3034 = vpop.f32.mrf.mxu0
  %3035 = vmatprep.mubr.f32.mxu0 0.0
  %3036 = vmatmul.mubr.f32.gmra.mxu0 %v2949
  %v3037 = vpop.f32.mrf.mxu0
  %v3038 = vadd.f32 %v2920, %v3037
  %v3039 = vpop.f32.mrf.mxu0
  %3040 = vmatprep.mubr.f32.mxu0 0.0
  %3041 = vmatmul.mubr.f32.gmra.mxu0 %v2951
  %v3042 = vpop.f32.mrf.mxu0
  %v3043 = vadd.f32 %v2920, %v3042
  %v3044 = vpop.f32.mrf.mxu0
  %3045 = vmatprep.mubr.f32.mxu0 0.0
  %3046 = vmatmul.mubr.f32.gmra.mxu0 %v2953
  %v3047 = vpop.f32.mrf.mxu0
  %v3048 = vadd.f32 %v2920, %v3047
  %v3049 = vpop.f32.mrf.mxu0
  %3050 = vmatprep.mubr.f32.mxu0 0.0
  %3051 = vmatmul.mubr.f32.gmra.mxu0 %v2955
  %v3052 = vpop.f32.mrf.mxu0
  %v3053 = vadd.f32 %v2920, %v3052
  %v3054 = vpop.f32.mrf.mxu0
  %3055 = vmatprep.mubr.f32.mxu0 0.0
  %3056 = vmatmul.mubr.f32.gmra.mxu0 %v2957
  %v3057 = vpop.f32.mrf.mxu0
  %v3058 = vadd.f32 %v2920, %v3057
  %v3059 = vpop.f32.mrf.mxu0
  %3060 = vmatprep.mubr.f32.mxu0 0.0
  %3061 = vmatmul.mubr.f32.gmra.mxu0 %v2959
  %v3062 = vpop.f32.mrf.mxu0
  %v3063 = vadd.f32 %v2920, %v3062
  %v3064 = vpop.f32.mrf.mxu0
  %3065 = vdwg.mxu0
  %v3066 = vmax.f32 %v3028, 0.0
  %v3067 = vmax.f32 %v3033, 0.0
  %v3068 = vmax.f32 %v3038, 0.0
  %v3069 = vmax.f32 %v3043, 0.0
  %v3070 = vmax.f32 %v3048, 0.0
  %v3071 = vmax.f32 %v3053, 0.0
  %v3072 = vmax.f32 %v3058, 0.0
  %v3073 = vmax.f32 %v3063, 0.0
  %v3074 = vld [vmem:[%s1 + $0x88] sm:$0xff]
  %v3075 = vld [vmem:[%s1 + $0x90] sm:$0xff]
  %v3076 = vld [vmem:[%s1 + $0x98] sm:$0xff]
  %v3077 = vld [vmem:[%s1 + $0xa0] sm:$0xff]
  %v3078 = vlaneseq
  %v3079 = vshrl.u32 %v3078, 7
  %v3080 = vsub.s32 0, %v3079
  %v3081 = vrot.slane %v35, %v3080
  %v3083 = vsel %vm171, %v3066, 0
  %v3086 = vsel %vm171, %v3067, 0
  %v3089 = vsel %vm171, %v3068, 0
  %v3092 = vsel %vm171, %v3069, 0
  %v3095 = vsel %vm171, %v3070, 0
  %v3098 = vsel %vm171, %v3071, 0
  %v3101 = vsel %vm171, %v3072, 0
  %v3104 = vsel %vm171, %v3073, 0
  %3106 = vmatprep.subr.mxu0 0.0
  %3107 = vmatpush1.msra.mxu0 0.0
  %3108 = vmatprep.subr.mxu0 0.0
  %3109 = vmatpush1.msra.mxu0 0.0
  %3110 = vmatprep.subr.mxu0 0.0
  %3111 = vmatpush1.msra.mxu0 0.0
  %3112 = vmatprep.subr.mxu0 0.0
  %3113 = vmatpush1.msra.mxu0 0.0
  %3114 = vmatprep.subr.mxu0 0.0
  %3115 = vmatpush1.msra.mxu0 0.0
  %3116 = vmatprep.subr.mxu0 0.0
  %3117 = vmatpush1.msra.mxu0 0.0
  %3118 = vmatprep.subr.mxu0 0.0
  %3119 = vmatpush1.msra.mxu0 0.0
  %3120 = vmatprep.subr.mxu0 0.0
  %3121 = vmatpush1.msra.mxu0 0.0
  %3122 = vmatprep.subr.mxu0 0.0
  %3123 = vmatpush1.msra.mxu0 0.0
  %3124 = vmatprep.subr.mxu0 0.0
  %3125 = vmatpush1.msra.mxu0 0.0
  %3126 = vmatprep.subr.mxu0 0.0
  %3127 = vmatpush1.msra.mxu0 0.0
  %3128 = vmatprep.subr.mxu0 0.0
  %3129 = vmatpush1.msra.mxu0 0.0
  %3130 = vmatprep.subr.mxu0 0.0
  %3131 = vmatpush1.msra.mxu0 %v3077
  %3132 = vmatprep.subr.mxu0 0.0
  %3133 = vmatpush1.msra.mxu0 %v3076
  %3134 = vmatprep.subr.mxu0 0.0
  %3135 = vmatpush1.msra.mxu0 %v3075
  %3136 = vmatprep.subr.mxu0 0.0
  %3137 = vmatpush1.msra.mxu0 %v3074
  %3138 = vmatprep.subr.mxu0 0.0
  %3139 = vmatpush2.msra.mxu0 0.0
  %3140 = vmatprep.subr.mxu0 0.0
  %3141 = vmatpush2.msra.mxu0 0.0
  %3142 = vmatprep.subr.mxu0 0.0
  %3143 = vmatpush2.msra.mxu0 0.0
  %3144 = vmatprep.subr.mxu0 0.0
  %3145 = vmatpush2.msra.mxu0 0.0
  %3146 = vmatprep.subr.mxu0 0.0
  %3147 = vmatpush2.msra.mxu0 0.0
  %3148 = vmatprep.subr.mxu0 0.0
  %3149 = vmatpush2.msra.mxu0 0.0
  %3150 = vmatprep.subr.mxu0 0.0
  %3151 = vmatpush2.msra.mxu0 0.0
  %3152 = vmatprep.subr.mxu0 0.0
  %3153 = vmatpush2.msra.mxu0 0.0
  %3154 = vmatprep.subr.mxu0 0.0
  %3155 = vmatpush2.msra.mxu0 0.0
  %3156 = vmatprep.subr.mxu0 0.0
  %3157 = vmatpush2.msra.mxu0 0.0
  %3158 = vmatprep.subr.mxu0 0.0
  %3159 = vmatpush2.msra.mxu0 0.0
  %3160 = vmatprep.subr.mxu0 0.0
  %3161 = vmatpush2.msra.mxu0 0.0
  %3162 = vmatprep.subr.mxu0 0.0
  %3163 = vmatpush2.msra.mxu0 0.0
  %3164 = vmatprep.subr.mxu0 0.0
  %3165 = vmatpush2.msra.mxu0 0.0
  %3166 = vmatprep.subr.mxu0 0.0
  %3167 = vmatpush2.msra.mxu0 0.0
  %3168 = vmatprep.subr.mxu0 0.0
  %3169 = vmatpush2.msra.mxu0 0.0
  %3170 = vmatprep.mubr.f32.mxu0 0.0
  %3171 = vmatmul.mubr.f32.gmra.mxu0 %v3083
  %v3172 = vpop.f32.mrf.mxu0
  %v3173 = vadd.f32 %v3081, %v3172
  %v3174 = vpop.f32.mrf.mxu0
  %3175 = vmatprep.mubr.f32.mxu0 0.0
  %3176 = vmatmul.mubr.f32.gmra.mxu0 %v3086
  %v3177 = vpop.f32.mrf.mxu0
  %v3178 = vadd.f32 %v3081, %v3177
  %v3179 = vpop.f32.mrf.mxu0
  %3180 = vmatprep.mubr.f32.mxu0 0.0
  %3181 = vmatmul.mubr.f32.gmra.mxu0 %v3089
  %v3182 = vpop.f32.mrf.mxu0
  %v3183 = vadd.f32 %v3081, %v3182
  %v3184 = vpop.f32.mrf.mxu0
  %3185 = vmatprep.mubr.f32.mxu0 0.0
  %3186 = vmatmul.mubr.f32.gmra.mxu0 %v3092
  %v3187 = vpop.f32.mrf.mxu0
  %v3188 = vadd.f32 %v3081, %v3187
  %v3189 = vpop.f32.mrf.mxu0
  %3190 = vmatprep.mubr.f32.mxu0 0.0
  %3191 = vmatmul.mubr.f32.gmra.mxu0 %v3095
  %v3192 = vpop.f32.mrf.mxu0
  %v3193 = vadd.f32 %v3081, %v3192
  %v3194 = vpop.f32.mrf.mxu0
  %3195 = vmatprep.mubr.f32.mxu0 0.0
  %3196 = vmatmul.mubr.f32.gmra.mxu0 %v3098
  %v3197 = vpop.f32.mrf.mxu0
  %v3198 = vadd.f32 %v3081, %v3197
  %v3199 = vpop.f32.mrf.mxu0
  %3200 = vmatprep.mubr.f32.mxu0 0.0
  %3201 = vmatmul.mubr.f32.gmra.mxu0 %v3101
  %v3202 = vpop.f32.mrf.mxu0
  %v3203 = vadd.f32 %v3081, %v3202
  %v3204 = vpop.f32.mrf.mxu0
  %3205 = vmatprep.mubr.f32.mxu0 0.0
  %3206 = vmatmul.mubr.f32.gmra.mxu0 %v3104
  %v3207 = vpop.f32.mrf.mxu0
  %v3208 = vadd.f32 %v3081, %v3207
  %v3209 = vpop.f32.mrf.mxu0
  %3210 = vdwg.mxu0
  %3211 = vst [vmem:[%s4] sm:$0xff] %v3173
  %3212 = vst [vmem:[%s4 + $0x8] sm:$0xff] %v3178
  %3213 = vst [vmem:[%s4 + $0x10] sm:$0xff] %v3183
  %3214 = vst [vmem:[%s4 + $0x18] sm:$0xff] %v3188
  %3215 = vst [vmem:[%s4 + $0x20] sm:$0xff] %v3193
  %3216 = vst [vmem:[%s4 + $0x28] sm:$0xff] %v3198
  %3217 = vst [vmem:[%s4 + $0x30] sm:$0xff] %v3203
  %3218 = vst [vmem:[%s4 + $0x38] sm:$0xff] %v3208
  %3220 = vrot.lane.b32.xlu0 %v2733, 64
  %v3221 = vpop.permute.xlu0 %3220
  %3224 = vrot.lane.b32.xlu0 %v2552, 32
  %v3225 = vpop.permute.xlu0 %3224
  %3228 = vrot.lane.b32.xlu0 %v2727, 64
  %v3229 = vpop.permute.xlu0 %3228
  %v3231 = vsel %vm171, %v2636, %v3221
  %vm3232 = vcmask 523264
  %v3233 = vsel %vm3232, %v3231, %v3225
  %vm3234 = vcmask 785408
  %v3235 = vsel %vm3234, %v3233, %v3229
  %3236 = vst [vmem:[%s5] sm:$0xff] %v3235
  // Predicated region
  $region18: #{sketchgen_forward.1} parent=0 // pred_check
    _
  $region19: #{sketchgen_forward.1} parent=0 // pred_check_branch
    %3238 = sbr.rel (0) target = $region21
  $region20: #{sketchgen_forward.1} parent=0 // pred_region
    _
  $region21: #{sketchgen_forward.1} parent=0 // pred_fallthru
    _
  // Predicated region
  $region22: #{sketchgen_forward.1} parent=0 // pred_check
    _
  $region23: #{sketchgen_forward.1} parent=0 // pred_check_branch
    %3240 = sbr.rel (0) target = $region25
  $region24: #{sketchgen_forward.1} parent=0 // pred_region
    _
  $region25: #{sketchgen_forward.1} parent=0 // pred_fallthru
    _
  // Predicated region
  $region26: #{sketchgen_forward.1} parent=0 // pred_check
    _
  $region27: #{sketchgen_forward.1} parent=0 // pred_check_branch
    %3242 = sbr.rel (0) target = $region29
  $region28: #{sketchgen_forward.1} parent=0 // pred_region
    _
  $region29: #{sketchgen_forward.1} parent=0 // pred_fallthru
    _
  // Predicated region
  $region30: #{sketchgen_forward.1} parent=0 // pred_check
    _
  $region31: #{sketchgen_forward.1} parent=0 // pred_check_branch
    %3244 = sbr.rel (0) target = $region33
  $region32: #{sketchgen_forward.1} parent=0 // pred_region
    _
  $region33: #{sketchgen_forward.1} parent=0 // pred_fallthru
    _

</llo_original>
